<compile_context>
chip_gen: v5e
topology: v5e:2x2
jax: 0.10.0
libtpu: 0.0.40
codegen_flags: <defaults>
</compile_context>

<pallas_src>
import numpy as np
import jax
import jax.numpy as jnp
from jax.experimental import pallas as pl
from jax.experimental.pallas import tpu as pltpu

# ---- small synthetic configuration (mirrors Cochleagram.__init__ shapes, scaled down) ----
SIGNAL_SIZE = 2048          # signal_size (orig 5*44100)
SR          = 2048          # s_rate      (orig 44100)
PAD_FACTOR  = 1.0           # padded length == SIGNAL_SIZE (no extra zero-pad)
N_FILTERS   = 32            # total ERB half-cosine filters (orig 256 * sample_factor=4)
LOW_LIM     = 50.0
HIGH_LIM    = 1000.0        # scaled-down analogue of high_lim=8000 Hz (< Nyquist)
ENV_SR      = 128           # env_sr (orig 245)
WINDOW_SIZE = 129           # sinc-Kaiser window size (orig 1001), odd
KAISER_BETA = 10.06
STRIDE      = SR // ENV_SR                                        # 16
PAD         = WINDOW_SIZE // 2                                    # 64
NF          = SIGNAL_SIZE // 2 + 1                                # rfft bins = 1025
NF_K        = SIGNAL_SIZE // 2                                    # lane-aligned bins used in-kernel = 1024
T_OUT       = (SIGNAL_SIZE + 2 * PAD - WINDOW_SIZE) // STRIDE + 1 # 128

# ClippedGradPowerCompression: forward = (scale*x + offset)**power
# (clip_value=100 only clips gradients in backward; forward is unaffected)
COMP_POWER  = 0.3
COMP_OFFSET = 1e-8
COMP_SCALE  = 1.0

# bf16 on the HBM-facing streams (re/im inputs and matmul operands); f32 accumulation
# and f32 envelope arithmetic in-kernel. Full-rate MXU on v6e/v7x, half the HBM bytes
# on the bandwidth-starved path, harmless under **0.3.
ENV_IN_DTYPE = jnp.bfloat16
MATMUL_DTYPE = jnp.bfloat16


# ------------------------ deterministic parameter construction ------------------------
def _freq2erb(f):
    return 9.265 * np.log(1.0 + np.asarray(f, dtype=np.float64) / (24.7 * 9.265))


def _erb2freq(e):
    return 24.7 * 9.265 * (np.exp(np.asarray(e, dtype=np.float64) / 9.265) - 1.0)


def make_erb_cos_filters(n_filters, signal_size, sr, low_lim, high_lim):
    """ERB-spaced half-cosine filterbank on the rfft frequency axis, shape (F, NF)."""
    nf = signal_size // 2 + 1
    freqs = np.fft.rfftfreq(signal_size, d=1.0 / sr)
    cut_e = np.linspace(_freq2erb(low_lim), _freq2erb(high_lim), n_filters + 2)
    cutoffs = _erb2freq(cut_e)
    filt = np.zeros((n_filters, nf), dtype=np.float32)
    for i in range(n_filters):
        lo, hi = cutoffs[i], cutoffs[i + 2]
        mask = (freqs > lo) & (freqs < hi)
        avg = (_freq2erb(lo) + _freq2erb(hi)) / 2.0
        rng = _freq2erb(hi) - _freq2erb(lo)
        filt[i, mask] = np.cos((_freq2erb(freqs[mask]) - avg) / rng * np.pi)
    return filt


def make_sinc_kaiser(window_size, sr, env_sr, beta):
    """Lowpass FIR (cutoff env_sr/2 Hz) = sinc * Kaiser window, length window_size."""
    t = np.arange(window_size) - (window_size - 1) / 2.0
    fc = float(env_sr) / float(sr)
    h = fc * np.sinc(fc * t) * np.kaiser(window_size, beta)
    return h.astype(np.float32)


def make_downsample_matrix(signal_size, window, stride, pad, t_out):
    """Dense (T, T_OUT) matrix equivalent to torch F.conv1d(w, stride, padding=pad)."""
    w = window.shape[0]
    t_in = np.arange(signal_size)[:, None]
    t_o = np.arange(t_out)[None, :]
    k = t_in - t_o * stride + pad
    valid = (k >= 0) & (k < w)
    return np.where(valid, window[np.clip(k, 0, w - 1)], 0.0).astype(np.float32)


# ------------------------------- Pallas kernels -------------------------------
def apply_filters(xr, xi, fs):
    """Frequency-domain ERB filterbank (with analytic x2 scaling folded in).

    xr/xi: (B, NF_K) rfft re/im (lane-aligned 1024 bins); fs: (F, NF_K) scaled filters.
    Returns (B, F, NF_K) re/im subband spectra. Single grid step: the whole problem
    (<1 MB) lives in VMEM; dense sublane/lane packing, no masked partial stores.
    """
    B, nfk = xr.shape
    F = fs.shape[0]

    def kernel(xr_ref, xi_ref, fs_ref, or_ref, oi_ref):
        fs_v = fs_ref[...]                                  # (F, NF_K), resident
        for b in range(B):                                  # tiny static unroll (B=2)
            or_ref[b] = xr_ref[pl.ds(b, 1), :] * fs_v       # (1,NF_K)*(F,NF_K) -> (F,NF_K)
            oi_ref[b] = xi_ref[pl.ds(b, 1), :] * fs_v

    out_sds = jax.ShapeDtypeStruct((B, F, nfk), jnp.float32)
    return pl.pallas_call(
        kernel,
        grid=(1,),
        in_specs=[pl.BlockSpec((B, nfk), lambda i: (0, 0)),
                  pl.BlockSpec((B, nfk), lambda i: (0, 0)),
                  pl.BlockSpec((F, nfk), lambda i: (0, 0))],
        out_specs=[pl.BlockSpec((B, F, nfk), lambda i: (0, 0, 0)),
                   pl.BlockSpec((B, F, nfk), lambda i: (0, 0, 0))],
        out_shape=[out_sds, out_sds],
        compiler_params=pltpu.CompilerParams(dimension_semantics=("arbitrary",)),
    )(xr, xi, fs)


def _env_downsample_compress_kernel(re_ref, im_ref, d_ref, out_ref):
    # re/im: (M, T) bf16 analytic-signal components; d: (T, T_OUT) bf16 sinc-Kaiser matrix.
    re = re_ref[...].astype(jnp.float32)                      # upcast: envelope math in f32
    im = im_ref[...].astype(jnp.float32)
    env = jnp.sqrt(re * re + im * im)                         # Hilbert envelope (VPU/EUP)
    acc = jnp.dot(env.astype(MATMUL_DTYPE), d_ref[...],       # MXU, f32 accumulation
                  preferred_element_type=jnp.float32)
    # NOTE: the torch reference (ClippedGradPowerCompression) does not clamp the forward
    # input; the sinc lowpass's negative lobes can produce tiny negative values which
    # would become NaN under x**0.3, so we clamp at 0 as a NaN guard (values near zero).
    x = jnp.maximum(acc, 0.0)
    out_ref[...] = (COMP_SCALE * x + COMP_OFFSET) ** COMP_POWER


def envelope_downsample_compress(re, im, dmat):
    """Fused: envelope magnitude -> dense downsample matmul -> power compression.

    Single grid step (tm = M = B*F): per-step overhead and half-empty MXU tiles cost
    more than pipelining buys at this size; total VMEM footprint is ~3 MB.
    TODO(synk): re-introduce K-tiling (acc scratch + pl.when init/finalize, tk % 256 == 0,
    dmat tile pl.Buffered(1)) when scaling toward the original 220500-sample config.
    """
    M, T = re.shape                       # M = B * F
    t_out = dmat.shape[1]
    return pl.pallas_call(
        _env_downsample_compress_kernel,
        grid=(1,),
        in_specs=[pl.BlockSpec((M, T), lambda m: (0, 0)),
                  pl.BlockSpec((M, T), lambda m: (0, 0)),
                  pl.BlockSpec((T, t_out), lambda m: (0, 0))],  # dmat resident in VMEM
        out_specs=pl.BlockSpec((M, t_out), lambda m: (0, 0)),
        out_shape=jax.ShapeDtypeStruct((M, t_out), jnp.float32),
        compiler_params=pltpu.CompilerParams(dimension_semantics=("arbitrary",)),
    )(re, im, dmat)


# ------------------------------- forward pass -------------------------------
def cochleagram_forward(waveform, fs_scaled, dmat_mm):
    # TODO(synk): rfft / ifft have no Pallas primitive; done in plain JAX (glue around kernels).
    X = jnp.fft.rfft(waveform.astype(jnp.float32), axis=-1)        # (B, NF) complex64
    xr = jnp.real(X)[:, :NF_K].astype(jnp.float32)                 # drop Nyquist bin: filter is 0 there
    xi = jnp.imag(X)[:, :NF_K].astype(jnp.float32)

    # Subband spectra of the analytic signal (filters already carry the x2 scaling).
    sub_re, sub_im = apply_filters(xr, xi, fs_scaled)              # (B, F, NF_K) each

    B, F, nfk = sub_re.shape
    spec_pos = jax.lax.complex(sub_re, sub_im)                     # positive freqs (bins 0..NF_K-1)
    # Zero-extend to the full SIGNAL_SIZE spectrum: covers the (zero) Nyquist bin and
    # all negative-frequency bins in one pad (no separate zeros buffer / concatenate).
    spec_full = jnp.pad(spec_pos, ((0, 0), (0, 0), (0, SIGNAL_SIZE - nfk)))
    analytic = jnp.fft.ifft(spec_full, axis=-1)                    # (B, F, T) complex64

    # Fold B and F into the matmul M dimension (free reshape); stream re/im as bf16
    # so the HBM-bound fused kernel reads half the bytes.
    re = jnp.real(analytic).astype(ENV_IN_DTYPE).reshape(B * F, SIGNAL_SIZE)
    im = jnp.imag(analytic).astype(ENV_IN_DTYPE).reshape(B * F, SIGNAL_SIZE)

    # pad_factor = 1.0 -> no padding to trim before downsampling.
    coch = envelope_downsample_compress(re, im, dmat_mm)           # (B*F, T_OUT)
    return coch.reshape(B, F, T_OUT)


# ------------------------------- pure-JAX reference -------------------------------
def cochleagram_reference(waveform, fs_scaled, dmat_mm):
    """Same math in plain JAX, mirroring the kernel's bf16 streaming/matmul precision.

    NOTE: this bounds kernel-vs-XLA agreement at matched precision; a full-f32 forward
    should be used as the accuracy reference before scaling up the contraction length.
    """
    X = jnp.fft.rfft(waveform.astype(jnp.float32), axis=-1)[:, :NF_K]
    sub = X[:, None, :] * fs_scaled[None, :, :]                    # (B, F, NF_K) complex
    analytic = jnp.fft.ifft(
        jnp.pad(sub, ((0, 0), (0, 0), (0, SIGNAL_SIZE - NF_K))), axis=-1)
    re = jnp.real(analytic).astype(ENV_IN_DTYPE).astype(jnp.float32)
    im = jnp.imag(analytic).astype(ENV_IN_DTYPE).astype(jnp.float32)
    env = jnp.sqrt(re * re + im * im)
    acc = jnp.einsum("bft,to->bfo", env.astype(MATMUL_DTYPE), dmat_mm,
                     preferred_element_type=jnp.float32)
    x = jnp.maximum(acc, 0.0)
    return (COMP_SCALE * x + COMP_OFFSET) ** COMP_POWER


if __name__ == "__main__":
    # Deterministic "parameters"
    filters = make_erb_cos_filters(N_FILTERS, SIGNAL_SIZE, SR, LOW_LIM, HIGH_LIM)
    # Filters are identically zero at (and near) the Nyquist bin since HIGH_LIM < SR/2,
    # so the in-kernel frequency axis can be lane-aligned to NF_K = 1024 bins.
    assert np.all(filters[:, NF_K:] == 0.0)
    analytic_scale = np.full((NF_K,), 2.0, dtype=np.float32)
    analytic_scale[0] = 1.0                                        # DC bin
    fs_scaled = jnp.asarray(filters[:, :NF_K] * analytic_scale[None, :])   # (F, NF_K) f32

    window = make_sinc_kaiser(WINDOW_SIZE, SR, ENV_SR, KAISER_BETA)
    dmat = make_downsample_matrix(SIGNAL_SIZE, window, STRIDE, PAD, T_OUT)
    dmat_mm = jnp.asarray(dmat).astype(MATMUL_DTYPE)               # (T, T_OUT) bf16

    # Deterministic example input
    key = jax.random.PRNGKey(0)
    waveform = jax.random.normal(key, (2, SIGNAL_SIZE), dtype=jnp.float32)

    fwd = jax.jit(cochleagram_forward)
    coch = fwd(waveform, fs_scaled, dmat_mm)
    coch = jax.block_until_ready(coch)

    assert coch.shape == (2, N_FILTERS, T_OUT), coch.shape
    assert coch.dtype == jnp.float32
    assert bool(jnp.isfinite(coch).all())

    ref = jax.block_until_ready(jax.jit(cochleagram_reference)(waveform, fs_scaled, dmat_mm))
    assert np.allclose(np.asarray(coch), np.asarray(ref), rtol=5e-2, atol=1e-2), \
        float(np.max(np.abs(np.asarray(coch) - np.asarray(ref))))

    print("KERNEL_OK")
</pallas_src>

<mosaic_0001>
module attributes {stable_mosaic.version = 11 : i64} {
  func.func @kernel(%arg0: i32, %arg1: memref<2x1024xf32, #tpu.memory_space<vmem>>, %arg2: memref<2x1024xf32, #tpu.memory_space<vmem>>, %arg3: memref<32x1024xf32, #tpu.memory_space<vmem>>, %arg4: memref<2x32x1024xf32, #tpu.memory_space<vmem>>, %arg5: memref<2x32x1024xf32, #tpu.memory_space<vmem>>) attributes {dimension_semantics = [#tpu.dimension_semantics<arbitrary>], iteration_bounds = array<i64: 1>, scalar_prefetch = 0 : i64, scratch_operands = 0 : i64, tpu.core_type = #tpu.core_type<tc>, window_params = [{pipeline_mode = #tpu.pipeline_mode<synchronous>, transform_indices = @transform_0, window_bounds = array<i64: 2, 1024>}, {pipeline_mode = #tpu.pipeline_mode<synchronous>, transform_indices = @transform_1, window_bounds = array<i64: 2, 1024>}, {pipeline_mode = #tpu.pipeline_mode<synchronous>, transform_indices = @transform_2, window_bounds = array<i64: 32, 1024>}, {pipeline_mode = #tpu.pipeline_mode<synchronous>, transform_indices = @transform_3, window_bounds = array<i64: 2, 32, 1024>}, {pipeline_mode = #tpu.pipeline_mode<synchronous>, transform_indices = @transform_4, window_bounds = array<i64: 2, 32, 1024>}]} {
    %c0 = arith.constant 0 : index
    %c0_0 = arith.constant 0 : index
    %0 = vector.load %arg3[%c0, %c0_0] : memref<32x1024xf32, #tpu.memory_space<vmem>>, vector<32x1024xf32>
    %c0_1 = arith.constant 0 : index
    %c0_2 = arith.constant 0 : index
    %1 = vector.load %arg1[%c0_1, %c0_2] : memref<2x1024xf32, #tpu.memory_space<vmem>>, vector<1x1024xf32>
    %2 = vector.broadcast %1 : vector<1x1024xf32> to vector<32x1024xf32>
    %3 = arith.mulf %2, %0 : vector<32x1024xf32>
    %c0_3 = arith.constant 0 : index
    %c0_4 = arith.constant 0 : index
    %c0_5 = arith.constant 0 : index
    %4 = vector.load %arg4[%c0_3, %c0_4, %c0_5] : memref<2x32x1024xf32, #tpu.memory_space<vmem>>, vector<1x32x1024xf32>
    %5 = vector.shape_cast %4 : vector<1x32x1024xf32> to vector<32x1024xf32>
    %6 = vector.shape_cast %3 : vector<32x1024xf32> to vector<1x32x1024xf32>
    tpu.vector_store %arg4[%c0_3, %c0_4, %c0_5], %6 {strides = array<i32>} : memref<2x32x1024xf32, #tpu.memory_space<vmem>>, vector<1x32x1024xf32>,
    %c0_6 = arith.constant 0 : index
    %c0_7 = arith.constant 0 : index
    %7 = vector.load %arg2[%c0_6, %c0_7] : memref<2x1024xf32, #tpu.memory_space<vmem>>, vector<1x1024xf32>
    %8 = vector.broadcast %7 : vector<1x1024xf32> to vector<32x1024xf32>
    %9 = arith.mulf %8, %0 : vector<32x1024xf32>
    %c0_8 = arith.constant 0 : index
    %c0_9 = arith.constant 0 : index
    %c0_10 = arith.constant 0 : index
    %10 = vector.load %arg5[%c0_8, %c0_9, %c0_10] : memref<2x32x1024xf32, #tpu.memory_space<vmem>>, vector<1x32x1024xf32>
    %11 = vector.shape_cast %10 : vector<1x32x1024xf32> to vector<32x1024xf32>
    %12 = vector.shape_cast %9 : vector<32x1024xf32> to vector<1x32x1024xf32>
    tpu.vector_store %arg5[%c0_8, %c0_9, %c0_10], %12 {strides = array<i32>} : memref<2x32x1024xf32, #tpu.memory_space<vmem>>, vector<1x32x1024xf32>,
    %c1 = arith.constant 1 : index
    %c0_11 = arith.constant 0 : index
    %13 = vector.load %arg1[%c1, %c0_11] : memref<2x1024xf32, #tpu.memory_space<vmem>>, vector<1x1024xf32>
    %14 = vector.broadcast %13 : vector<1x1024xf32> to vector<32x1024xf32>
    %15 = arith.mulf %14, %0 : vector<32x1024xf32>
    %c1_12 = arith.constant 1 : index
    %c0_13 = arith.constant 0 : index
    %c0_14 = arith.constant 0 : index
    %16 = vector.load %arg4[%c1_12, %c0_13, %c0_14] : memref<2x32x1024xf32, #tpu.memory_space<vmem>>, vector<1x32x1024xf32>
    %17 = vector.shape_cast %16 : vector<1x32x1024xf32> to vector<32x1024xf32>
    %18 = vector.shape_cast %15 : vector<32x1024xf32> to vector<1x32x1024xf32>
    tpu.vector_store %arg4[%c1_12, %c0_13, %c0_14], %18 {strides = array<i32>} : memref<2x32x1024xf32, #tpu.memory_space<vmem>>, vector<1x32x1024xf32>,
    %c1_15 = arith.constant 1 : index
    %c0_16 = arith.constant 0 : index
    %19 = vector.load %arg2[%c1_15, %c0_16] : memref<2x1024xf32, #tpu.memory_space<vmem>>, vector<1x1024xf32>
    %20 = vector.broadcast %19 : vector<1x1024xf32> to vector<32x1024xf32>
    %21 = arith.mulf %20, %0 : vector<32x1024xf32>
    %c1_17 = arith.constant 1 : index
    %c0_18 = arith.constant 0 : index
    %c0_19 = arith.constant 0 : index
    %22 = vector.load %arg5[%c1_17, %c0_18, %c0_19] : memref<2x32x1024xf32, #tpu.memory_space<vmem>>, vector<1x32x1024xf32>
    %23 = vector.shape_cast %22 : vector<1x32x1024xf32> to vector<32x1024xf32>
    %24 = vector.shape_cast %21 : vector<32x1024xf32> to vector<1x32x1024xf32>
    tpu.vector_store %arg5[%c1_17, %c0_18, %c0_19], %24 {strides = array<i32>} : memref<2x32x1024xf32, #tpu.memory_space<vmem>>, vector<1x32x1024xf32>,
    return
  }
  func.func @transform_0(%arg0: i32) -> (i32, i32) {
    %c0_i32 = arith.constant 0 : i32
    %c0_i32_0 = arith.constant 0 : i32
    %c0_i32_1 = arith.constant 0 : i32
    return %c0_i32, %c0_i32_0 : i32, i32
  }
  func.func @transform_1(%arg0: i32) -> (i32, i32) {
    %c0_i32 = arith.constant 0 : i32
    %c0_i32_0 = arith.constant 0 : i32
    %c0_i32_1 = arith.constant 0 : i32
    return %c0_i32, %c0_i32_0 : i32, i32
  }
  func.func @transform_2(%arg0: i32) -> (i32, i32) {
    %c0_i32 = arith.constant 0 : i32
    %c0_i32_0 = arith.constant 0 : i32
    %c0_i32_1 = arith.constant 0 : i32
    return %c0_i32, %c0_i32_0 : i32, i32
  }
  func.func @transform_3(%arg0: i32) -> (i32, i32, i32) {
    %c0_i32 = arith.constant 0 : i32
    %c0_i32_0 = arith.constant 0 : i32
    %c0_i32_1 = arith.constant 0 : i32
    %c0_i32_2 = arith.constant 0 : i32
    return %c0_i32, %c0_i32_0, %c0_i32_1 : i32, i32, i32
  }
  func.func @transform_4(%arg0: i32) -> (i32, i32, i32) {
    %c0_i32 = arith.constant 0 : i32
    %c0_i32_0 = arith.constant 0 : i32
    %c0_i32_1 = arith.constant 0 : i32
    %c0_i32_2 = arith.constant 0 : i32
    return %c0_i32, %c0_i32_0, %c0_i32_1 : i32, i32, i32
  }
}

module attributes {stable_mosaic.version = 11 : i64} {
  func.func @_env_downsample_compress_kernel(%arg0: i32, %arg1: memref<64x2048xbf16, #tpu.memory_space<vmem>>, %arg2: memref<64x2048xbf16, #tpu.memory_space<vmem>>, %arg3: memref<2048x128xbf16, #tpu.memory_space<vmem>>, %arg4: memref<64x128xf32, #tpu.memory_space<vmem>>) attributes {dimension_semantics = [#tpu.dimension_semantics<arbitrary>], iteration_bounds = array<i64: 1>, scalar_prefetch = 0 : i64, scratch_operands = 0 : i64, tpu.core_type = #tpu.core_type<tc>, window_params = [{pipeline_mode = #tpu.pipeline_mode<synchronous>, transform_indices = @transform_0, window_bounds = array<i64: 64, 2048>}, {pipeline_mode = #tpu.pipeline_mode<synchronous>, transform_indices = @transform_1, window_bounds = array<i64: 64, 2048>}, {pipeline_mode = #tpu.pipeline_mode<synchronous>, transform_indices = @transform_2, window_bounds = array<i64: 2048, 128>}, {pipeline_mode = #tpu.pipeline_mode<synchronous>, transform_indices = @transform_3, window_bounds = array<i64: 64, 128>}]} {
    %c0 = arith.constant 0 : index
    %c0_0 = arith.constant 0 : index
    %0 = vector.load %arg1[%c0, %c0_0] : memref<64x2048xbf16, #tpu.memory_space<vmem>>, vector<64x2048xbf16>
    %1 = arith.extf %0 : vector<64x2048xbf16> to vector<64x2048xf32>
    %c0_1 = arith.constant 0 : index
    %c0_2 = arith.constant 0 : index
    %2 = vector.load %arg2[%c0_1, %c0_2] : memref<64x2048xbf16, #tpu.memory_space<vmem>>, vector<64x2048xbf16>
    %3 = arith.extf %2 : vector<64x2048xbf16> to vector<64x2048xf32>
    %4 = arith.mulf %1, %1 : vector<64x2048xf32>
    %5 = arith.mulf %3, %3 : vector<64x2048xf32>
    %6 = arith.addf %4, %5 : vector<64x2048xf32>
    %7 = math.sqrt %6 : vector<64x2048xf32>
    %8 = arith.truncf %7 : vector<64x2048xf32> to vector<64x2048xbf16>
    %c0_3 = arith.constant 0 : index
    %c0_4 = arith.constant 0 : index
    %9 = vector.load %arg3[%c0_3, %c0_4] : memref<2048x128xbf16, #tpu.memory_space<vmem>>, vector<2048x128xbf16>
    %cst = arith.constant dense<0.000000e+00> : vector<64x128xf32>
    %10 = tpu.matmul %8, %9, %cst {dimension_numbers = #tpu.dot_dimension_numbers<[1], [0], [0], [1], [0, 0, 1, 1], [], []>} : vector<64x2048xbf16>, vector<2048x128xbf16>, vector<64x128xf32> -> vector<64x128xf32>
    %cst_5 = arith.constant 0.000000e+00 : f32
    %11 = vector.broadcast %cst_5 : f32 to vector<64x128xf32>
    %12 = arith.maximumf %10, %11 : vector<64x128xf32>
    %cst_6 = arith.constant 1.000000e+00 : f32
    %13 = vector.broadcast %cst_6 : f32 to vector<64x128xf32>
    %14 = arith.mulf %13, %12 : vector<64x128xf32>
    %cst_7 = arith.constant 9.99999993E-9 : f32
    %15 = vector.broadcast %cst_7 : f32 to vector<64x128xf32>
    %16 = arith.addf %14, %15 : vector<64x128xf32>
    %cst_8 = arith.constant 3.000000e-01 : f32
    %17 = vector.broadcast %cst_8 : f32 to vector<64x128xf32>
    %18 = math.powf %16, %17 : vector<64x128xf32>
    %c0_9 = arith.constant 0 : index
    %c0_10 = arith.constant 0 : index
    %19 = vector.load %arg4[%c0_9, %c0_10] : memref<64x128xf32, #tpu.memory_space<vmem>>, vector<64x128xf32>
    tpu.vector_store %arg4[%c0_9, %c0_10], %18 {strides = array<i32>} : memref<64x128xf32, #tpu.memory_space<vmem>>, vector<64x128xf32>,
    return
  }
  func.func @transform_0(%arg0: i32) -> (i32, i32) {
    %c0_i32 = arith.constant 0 : i32
    %c0_i32_0 = arith.constant 0 : i32
    %c0_i32_1 = arith.constant 0 : i32
    return %c0_i32, %c0_i32_0 : i32, i32
  }
  func.func @transform_1(%arg0: i32) -> (i32, i32) {
    %c0_i32 = arith.constant 0 : i32
    %c0_i32_0 = arith.constant 0 : i32
    %c0_i32_1 = arith.constant 0 : i32
    return %c0_i32, %c0_i32_0 : i32, i32
  }
  func.func @transform_2(%arg0: i32) -> (i32, i32) {
    %c0_i32 = arith.constant 0 : i32
    %c0_i32_0 = arith.constant 0 : i32
    %c0_i32_1 = arith.constant 0 : i32
    return %c0_i32, %c0_i32_0 : i32, i32
  }
  func.func @transform_3(%arg0: i32) -> (i32, i32) {
    %c0_i32 = arith.constant 0 : i32
    %c0_i32_0 = arith.constant 0 : i32
    %c0_i32_1 = arith.constant 0 : i32
    return %c0_i32, %c0_i32_0 : i32, i32
  }
}

</mosaic_0001>

<llo_original>
// kernel: cochleagram_forward.2
$region0: #{cochleagram_forward.2}
  #allocation0 [shape = 'u32[]', space=smem, size = 0x4, offset = 0x4, fixed_abs, tag = 'smem constant byte address 0x4 - core index']
  #allocation1 [shape = 'u32[72,128]{1,0:T(1,128)}', space=vmem, size = 0x9000, scoped, tag = 'internal scratch']
  %s0 = inlined_call_operand.vmem [shape: f32[2,1024], index: 0, kind: input, shape index: {}]
  %s1 = inlined_call_operand.vmem [shape: f32[2,1024], index: 1, kind: input, shape index: {}]
  %s2 = inlined_call_operand.hbm [shape: f32[32,1024], index: 2, kind: input, shape index: {}]
  %s3 = inlined_call_operand.vmem [shape: f32[2,32,1024], index: 3, kind: output, shape index: {0}]
  %s4 = inlined_call_operand.vmem [shape: f32[2,32,1024], index: 4, kind: output, shape index: {1}]
  %5 = xla_tuple %s3, %s4
  %s6 = sld [smem:[#allocation0]]
  $region34: #{cochleagram_forward.2} parent=0
    _
  %s8 = ssub.s32 1, %s6
  %s9 = scalar_select 0, %s8, %s6
  $region1: #{cochleagram_forward.2} parent=0
    #allocation2 [shape = 'u8[131072]{0}', space=vmem, size = 0x20000, scoped, tag = 'input window, operand 2, single buffered']
    #allocation3 [shape = 's32[1]{0}', space=sflag, size = 0x4, scoped, tag = 'scoped memory for cochleagram_forward.2']
    %10 = vsyncpa [#allocation3], 0
    // Predicated region
    $region2: #{cochleagram_forward.2} parent=1 // pred_check
      _
    $region3: #{cochleagram_forward.2} parent=1 // pred_check_branch
      %12 = sbr.rel (0) target = $region5
    $region4: #{cochleagram_forward.2} parent=1 // pred_region
      _
    $region5: #{cochleagram_forward.2} parent=1 // pred_fallthru
      _
    // Predicated region
    $region6: #{cochleagram_forward.2} parent=1 // pred_check
      _
    $region7: #{cochleagram_forward.2} parent=1 // pred_check_branch
      %14 = sbr.rel (0) target = $region9
    $region8: #{cochleagram_forward.2} parent=1 // pred_region
      _
    $region9: #{cochleagram_forward.2} parent=1 // pred_fallthru
      _
    // Predicated region
    $region10: #{cochleagram_forward.2} parent=1 // pred_check
      _
    $region11: #{cochleagram_forward.2} parent=1 // pred_check_branch
      %16 = sbr.rel (0) target = $region13
    $region12: #{cochleagram_forward.2} parent=1 // pred_region
      %18 = vsyncadd [#allocation3], 0
      %s19 = sshll.u32 %s2, 4
      %s20 = int_to_ptr.hbm [resolvable:$true] %s19
      %s21 = sshll.u32 [#allocation2], 4
      %s22 = int_to_ptr.vmem [resolvable:$true] %s21
      %27 = dma.hbm_to_vmem [thread:$0]  %s20, 4096, %s22, [#allocation3], 1024, 1024, 64
    $region13: #{cochleagram_forward.2} parent=1 // pred_fallthru
      _
    // Predicated region
    $region14: #{cochleagram_forward.2} parent=1 // pred_check
      _
    $region15: #{cochleagram_forward.2} parent=1 // pred_check_branch
      %29 = sbr.rel (0) target = $region17
    $region16: #{cochleagram_forward.2} parent=1 // pred_region
      %31 = dma.done [#allocation3], 4096
    $region17: #{cochleagram_forward.2} parent=1 // pred_fallthru
      _
    %v32 = vld [vmem:[#allocation2] sm:$0xff]
    %v33 = vld [vmem:[#allocation2 + $0x8] sm:$0xff]
    %v34 = vld [vmem:[#allocation2 + $0x10] sm:$0xff]
    %v35 = vld [vmem:[#allocation2 + $0x18] sm:$0xff]
    %v36 = vld [vmem:[#allocation2 + $0x20] sm:$0xff]
    %v37 = vld [vmem:[#allocation2 + $0x28] sm:$0xff]
    %v38 = vld [vmem:[#allocation2 + $0x30] sm:$0xff]
    %v39 = vld [vmem:[#allocation2 + $0x38] sm:$0xff]
    %v40 = vld [vmem:[#allocation2 + $0x40] sm:$0xff]
    %v41 = vld [vmem:[#allocation2 + $0x48] sm:$0xff]
    %v42 = vld [vmem:[#allocation2 + $0x50] sm:$0xff]
    %v43 = vld [vmem:[#allocation2 + $0x58] sm:$0xff]
    %v44 = vld [vmem:[#allocation2 + $0x60] sm:$0xff]
    %v45 = vld [vmem:[#allocation2 + $0x68] sm:$0xff]
    %v46 = vld [vmem:[#allocation2 + $0x70] sm:$0xff]
    %v47 = vld [vmem:[#allocation2 + $0x78] sm:$0xff]
    %v48 = vld [vmem:[#allocation2 + $0x80] sm:$0xff]
    %v49 = vld [vmem:[#allocation2 + $0x88] sm:$0xff]
    %v50 = vld [vmem:[#allocation2 + $0x90] sm:$0xff]
    %v51 = vld [vmem:[#allocation2 + $0x98] sm:$0xff]
    %v52 = vld [vmem:[#allocation2 + $0xa0] sm:$0xff]
    %v53 = vld [vmem:[#allocation2 + $0xa8] sm:$0xff]
    %v54 = vld [vmem:[#allocation2 + $0xb0] sm:$0xff]
    %v55 = vld [vmem:[#allocation2 + $0xb8] sm:$0xff]
    %v56 = vld [vmem:[#allocation2 + $0xc0] sm:$0xff]
    %v57 = vld [vmem:[#allocation2 + $0xc8] sm:$0xff]
    %v58 = vld [vmem:[#allocation2 + $0xd0] sm:$0xff]
    %v59 = vld [vmem:[#allocation2 + $0xd8] sm:$0xff]
    %v60 = vld [vmem:[#allocation2 + $0xe0] sm:$0xff]
    %v61 = vld [vmem:[#allocation2 + $0xe8] sm:$0xff]
    %v62 = vld [vmem:[#allocation2 + $0xf0] sm:$0xff]
    %v63 = vld [vmem:[#allocation2 + $0xf8] sm:$0xff]
    %v64 = vld [vmem:[%s0] ss:$2 sm:$0xff]
    %v66 = vperm.slane %v64, 0
    %v67 = vperm.slane %v64, 1
    %v68 = vperm.slane %v64, 2
    %v69 = vperm.slane %v64, 3
    %v70 = vperm.slane %v64, 4
    %v71 = vperm.slane %v64, 5
    %v72 = vperm.slane %v64, 6
    %v73 = vperm.slane %v64, 7
    %v82 = vmul.f32 %v66, %v32
    %v83 = vmul.f32 %v67, %v33
    %v84 = vmul.f32 %v68, %v34
    %v85 = vmul.f32 %v69, %v35
    %v86 = vmul.f32 %v70, %v36
    %v87 = vmul.f32 %v71, %v37
    %v88 = vmul.f32 %v72, %v38
    %v89 = vmul.f32 %v73, %v39
    %v90 = vmul.f32 %v66, %v40
    %v91 = vmul.f32 %v67, %v41
    %v92 = vmul.f32 %v68, %v42
    %v93 = vmul.f32 %v69, %v43
    %v94 = vmul.f32 %v70, %v44
    %v95 = vmul.f32 %v71, %v45
    %v96 = vmul.f32 %v72, %v46
    %v97 = vmul.f32 %v73, %v47
    %v98 = vmul.f32 %v66, %v48
    %v99 = vmul.f32 %v67, %v49
    %v100 = vmul.f32 %v68, %v50
    %v101 = vmul.f32 %v69, %v51
    %v102 = vmul.f32 %v70, %v52
    %v103 = vmul.f32 %v71, %v53
    %v104 = vmul.f32 %v72, %v54
    %v105 = vmul.f32 %v73, %v55
    %v106 = vmul.f32 %v66, %v56
    %v107 = vmul.f32 %v67, %v57
    %v108 = vmul.f32 %v68, %v58
    %v109 = vmul.f32 %v69, %v59
    %v110 = vmul.f32 %v70, %v60
    %v111 = vmul.f32 %v71, %v61
    %v112 = vmul.f32 %v72, %v62
    %v113 = vmul.f32 %v73, %v63
    %114 = vst [vmem:[%s3] sm:$0xff] %v82
    %115 = vst [vmem:[%s3 + $0x8] sm:$0xff] %v83
    %116 = vst [vmem:[%s3 + $0x10] sm:$0xff] %v84
    %117 = vst [vmem:[%s3 + $0x18] sm:$0xff] %v85
    %118 = vst [vmem:[%s3 + $0x20] sm:$0xff] %v86
    %119 = vst [vmem:[%s3 + $0x28] sm:$0xff] %v87
    %120 = vst [vmem:[%s3 + $0x30] sm:$0xff] %v88
    %121 = vst [vmem:[%s3 + $0x38] sm:$0xff] %v89
    %122 = vst [vmem:[%s3 + $0x40] sm:$0xff] %v90
    %123 = vst [vmem:[%s3 + $0x48] sm:$0xff] %v91
    %124 = vst [vmem:[%s3 + $0x50] sm:$0xff] %v92
    %125 = vst [vmem:[%s3 + $0x58] sm:$0xff] %v93
    %126 = vst [vmem:[%s3 + $0x60] sm:$0xff] %v94
    %127 = vst [vmem:[%s3 + $0x68] sm:$0xff] %v95
    %128 = vst [vmem:[%s3 + $0x70] sm:$0xff] %v96
    %129 = vst [vmem:[%s3 + $0x78] sm:$0xff] %v97
    %130 = vst [vmem:[%s3 + $0x80] sm:$0xff] %v98
    %131 = vst [vmem:[%s3 + $0x88] sm:$0xff] %v99
    %132 = vst [vmem:[%s3 + $0x90] sm:$0xff] %v100
    %133 = vst [vmem:[%s3 + $0x98] sm:$0xff] %v101
    %134 = vst [vmem:[%s3 + $0xa0] sm:$0xff] %v102
    %135 = vst [vmem:[%s3 + $0xa8] sm:$0xff] %v103
    %136 = vst [vmem:[%s3 + $0xb0] sm:$0xff] %v104
    %137 = vst [vmem:[%s3 + $0xb8] sm:$0xff] %v105
    %138 = vst [vmem:[%s3 + $0xc0] sm:$0xff] %v106
    %139 = vst [vmem:[%s3 + $0xc8] sm:$0xff] %v107
    %140 = vst [vmem:[%s3 + $0xd0] sm:$0xff] %v108
    %141 = vst [vmem:[%s3 + $0xd8] sm:$0xff] %v109
    %142 = vst [vmem:[%s3 + $0xe0] sm:$0xff] %v110
    %143 = vst [vmem:[%s3 + $0xe8] sm:$0xff] %v111
    %144 = vst [vmem:[%s3 + $0xf0] sm:$0xff] %v112
    %145 = vst [vmem:[%s3 + $0xf8] sm:$0xff] %v113
    %v146 = vld [vmem:[%s1] ss:$2 sm:$0xff]
    %v148 = vperm.slane %v146, 0
    %v149 = vperm.slane %v146, 1
    %v150 = vperm.slane %v146, 2
    %v151 = vperm.slane %v146, 3
    %v152 = vperm.slane %v146, 4
    %v153 = vperm.slane %v146, 5
    %v154 = vperm.slane %v146, 6
    %v155 = vperm.slane %v146, 7
    %v164 = vmul.f32 %v148, %v32
    %v165 = vmul.f32 %v149, %v33
    %v166 = vmul.f32 %v150, %v34
    %v167 = vmul.f32 %v151, %v35
    %v168 = vmul.f32 %v152, %v36
    %v169 = vmul.f32 %v153, %v37
    %v170 = vmul.f32 %v154, %v38
    %v171 = vmul.f32 %v155, %v39
    %v172 = vmul.f32 %v148, %v40
    %v173 = vmul.f32 %v149, %v41
    %v174 = vmul.f32 %v150, %v42
    %v175 = vmul.f32 %v151, %v43
    %v176 = vmul.f32 %v152, %v44
    %v177 = vmul.f32 %v153, %v45
    %v178 = vmul.f32 %v154, %v46
    %v179 = vmul.f32 %v155, %v47
    %v180 = vmul.f32 %v148, %v48
    %v181 = vmul.f32 %v149, %v49
    %v182 = vmul.f32 %v150, %v50
    %v183 = vmul.f32 %v151, %v51
    %v184 = vmul.f32 %v152, %v52
    %v185 = vmul.f32 %v153, %v53
    %v186 = vmul.f32 %v154, %v54
    %v187 = vmul.f32 %v155, %v55
    %v188 = vmul.f32 %v148, %v56
    %v189 = vmul.f32 %v149, %v57
    %v190 = vmul.f32 %v150, %v58
    %v191 = vmul.f32 %v151, %v59
    %v192 = vmul.f32 %v152, %v60
    %v193 = vmul.f32 %v153, %v61
    %v194 = vmul.f32 %v154, %v62
    %v195 = vmul.f32 %v155, %v63
    %196 = vst [vmem:[%s4] sm:$0xff] %v164
    %197 = vst [vmem:[%s4 + $0x8] sm:$0xff] %v165
    %198 = vst [vmem:[%s4 + $0x10] sm:$0xff] %v166
    %199 = vst [vmem:[%s4 + $0x18] sm:$0xff] %v167
    %200 = vst [vmem:[%s4 + $0x20] sm:$0xff] %v168
    %201 = vst [vmem:[%s4 + $0x28] sm:$0xff] %v169
    %202 = vst [vmem:[%s4 + $0x30] sm:$0xff] %v170
    %203 = vst [vmem:[%s4 + $0x38] sm:$0xff] %v171
    %204 = vst [vmem:[%s4 + $0x40] sm:$0xff] %v172
    %205 = vst [vmem:[%s4 + $0x48] sm:$0xff] %v173
    %206 = vst [vmem:[%s4 + $0x50] sm:$0xff] %v174
    %207 = vst [vmem:[%s4 + $0x58] sm:$0xff] %v175
    %208 = vst [vmem:[%s4 + $0x60] sm:$0xff] %v176
    %209 = vst [vmem:[%s4 + $0x68] sm:$0xff] %v177
    %210 = vst [vmem:[%s4 + $0x70] sm:$0xff] %v178
    %211 = vst [vmem:[%s4 + $0x78] sm:$0xff] %v179
    %212 = vst [vmem:[%s4 + $0x80] sm:$0xff] %v180
    %213 = vst [vmem:[%s4 + $0x88] sm:$0xff] %v181
    %214 = vst [vmem:[%s4 + $0x90] sm:$0xff] %v182
    %215 = vst [vmem:[%s4 + $0x98] sm:$0xff] %v183
    %216 = vst [vmem:[%s4 + $0xa0] sm:$0xff] %v184
    %217 = vst [vmem:[%s4 + $0xa8] sm:$0xff] %v185
    %218 = vst [vmem:[%s4 + $0xb0] sm:$0xff] %v186
    %219 = vst [vmem:[%s4 + $0xb8] sm:$0xff] %v187
    %220 = vst [vmem:[%s4 + $0xc0] sm:$0xff] %v188
    %221 = vst [vmem:[%s4 + $0xc8] sm:$0xff] %v189
    %222 = vst [vmem:[%s4 + $0xd0] sm:$0xff] %v190
    %223 = vst [vmem:[%s4 + $0xd8] sm:$0xff] %v191
    %224 = vst [vmem:[%s4 + $0xe0] sm:$0xff] %v192
    %225 = vst [vmem:[%s4 + $0xe8] sm:$0xff] %v193
    %226 = vst [vmem:[%s4 + $0xf0] sm:$0xff] %v194
    %227 = vst [vmem:[%s4 + $0xf8] sm:$0xff] %v195
    %s228 = scalar_lea.vmem %s0, 1
    %v229 = vld [vmem:[%s228] ss:$2 sm:$0xff]
    %v231 = vperm.slane %v229, 0
    %v232 = vperm.slane %v229, 1
    %v233 = vperm.slane %v229, 2
    %v234 = vperm.slane %v229, 3
    %v235 = vperm.slane %v229, 4
    %v236 = vperm.slane %v229, 5
    %v237 = vperm.slane %v229, 6
    %v238 = vperm.slane %v229, 7
    %v247 = vmul.f32 %v231, %v32
    %v248 = vmul.f32 %v232, %v33
    %v249 = vmul.f32 %v233, %v34
    %v250 = vmul.f32 %v234, %v35
    %v251 = vmul.f32 %v235, %v36
    %v252 = vmul.f32 %v236, %v37
    %v253 = vmul.f32 %v237, %v38
    %v254 = vmul.f32 %v238, %v39
    %v255 = vmul.f32 %v231, %v40
    %v256 = vmul.f32 %v232, %v41
    %v257 = vmul.f32 %v233, %v42
    %v258 = vmul.f32 %v234, %v43
    %v259 = vmul.f32 %v235, %v44
    %v260 = vmul.f32 %v236, %v45
    %v261 = vmul.f32 %v237, %v46
    %v262 = vmul.f32 %v238, %v47
    %v263 = vmul.f32 %v231, %v48
    %v264 = vmul.f32 %v232, %v49
    %v265 = vmul.f32 %v233, %v50
    %v266 = vmul.f32 %v234, %v51
    %v267 = vmul.f32 %v235, %v52
    %v268 = vmul.f32 %v236, %v53
    %v269 = vmul.f32 %v237, %v54
    %v270 = vmul.f32 %v238, %v55
    %v271 = vmul.f32 %v231, %v56
    %v272 = vmul.f32 %v232, %v57
    %v273 = vmul.f32 %v233, %v58
    %v274 = vmul.f32 %v234, %v59
    %v275 = vmul.f32 %v235, %v60
    %v276 = vmul.f32 %v236, %v61
    %v277 = vmul.f32 %v237, %v62
    %v278 = vmul.f32 %v238, %v63
    %s279 = scalar_lea.vmem %s3, 256
    %280 = vst [vmem:[%s279] sm:$0xff] %v247
    %281 = vst [vmem:[%s279 + $0x8] sm:$0xff] %v248
    %282 = vst [vmem:[%s279 + $0x10] sm:$0xff] %v249
    %283 = vst [vmem:[%s279 + $0x18] sm:$0xff] %v250
    %284 = vst [vmem:[%s279 + $0x20] sm:$0xff] %v251
    %285 = vst [vmem:[%s279 + $0x28] sm:$0xff] %v252
    %286 = vst [vmem:[%s279 + $0x30] sm:$0xff] %v253
    %287 = vst [vmem:[%s279 + $0x38] sm:$0xff] %v254
    %288 = vst [vmem:[%s279 + $0x40] sm:$0xff] %v255
    %289 = vst [vmem:[%s279 + $0x48] sm:$0xff] %v256
    %290 = vst [vmem:[%s279 + $0x50] sm:$0xff] %v257
    %291 = vst [vmem:[%s279 + $0x58] sm:$0xff] %v258
    %292 = vst [vmem:[%s279 + $0x60] sm:$0xff] %v259
    %293 = vst [vmem:[%s279 + $0x68] sm:$0xff] %v260
    %294 = vst [vmem:[%s279 + $0x70] sm:$0xff] %v261
    %295 = vst [vmem:[%s279 + $0x78] sm:$0xff] %v262
    %296 = vst [vmem:[%s279 + $0x80] sm:$0xff] %v263
    %297 = vst [vmem:[%s279 + $0x88] sm:$0xff] %v264
    %298 = vst [vmem:[%s279 + $0x90] sm:$0xff] %v265
    %299 = vst [vmem:[%s279 + $0x98] sm:$0xff] %v266
    %300 = vst [vmem:[%s279 + $0xa0] sm:$0xff] %v267
    %301 = vst [vmem:[%s279 + $0xa8] sm:$0xff] %v268
    %302 = vst [vmem:[%s279 + $0xb0] sm:$0xff] %v269
    %303 = vst [vmem:[%s279 + $0xb8] sm:$0xff] %v270
    %304 = vst [vmem:[%s279 + $0xc0] sm:$0xff] %v271
    %305 = vst [vmem:[%s279 + $0xc8] sm:$0xff] %v272
    %306 = vst [vmem:[%s279 + $0xd0] sm:$0xff] %v273
    %307 = vst [vmem:[%s279 + $0xd8] sm:$0xff] %v274
    %308 = vst [vmem:[%s279 + $0xe0] sm:$0xff] %v275
    %309 = vst [vmem:[%s279 + $0xe8] sm:$0xff] %v276
    %310 = vst [vmem:[%s279 + $0xf0] sm:$0xff] %v277
    %311 = vst [vmem:[%s279 + $0xf8] sm:$0xff] %v278
    %s312 = scalar_lea.vmem %s1, 1
    %v313 = vld [vmem:[%s312] ss:$2 sm:$0xff]
    %v315 = vperm.slane %v313, 0
    %v316 = vperm.slane %v313, 1
    %v317 = vperm.slane %v313, 2
    %v318 = vperm.slane %v313, 3
    %v319 = vperm.slane %v313, 4
    %v320 = vperm.slane %v313, 5
    %v321 = vperm.slane %v313, 6
    %v322 = vperm.slane %v313, 7
    %v331 = vmul.f32 %v315, %v32
    %v332 = vmul.f32 %v316, %v33
    %v333 = vmul.f32 %v317, %v34
    %v334 = vmul.f32 %v318, %v35
    %v335 = vmul.f32 %v319, %v36
    %v336 = vmul.f32 %v320, %v37
    %v337 = vmul.f32 %v321, %v38
    %v338 = vmul.f32 %v322, %v39
    %v339 = vmul.f32 %v315, %v40
    %v340 = vmul.f32 %v316, %v41
    %v341 = vmul.f32 %v317, %v42
    %v342 = vmul.f32 %v318, %v43
    %v343 = vmul.f32 %v319, %v44
    %v344 = vmul.f32 %v320, %v45
    %v345 = vmul.f32 %v321, %v46
    %v346 = vmul.f32 %v322, %v47
    %v347 = vmul.f32 %v315, %v48
    %v348 = vmul.f32 %v316, %v49
    %v349 = vmul.f32 %v317, %v50
    %v350 = vmul.f32 %v318, %v51
    %v351 = vmul.f32 %v319, %v52
    %v352 = vmul.f32 %v320, %v53
    %v353 = vmul.f32 %v321, %v54
    %v354 = vmul.f32 %v322, %v55
    %v355 = vmul.f32 %v315, %v56
    %v356 = vmul.f32 %v316, %v57
    %v357 = vmul.f32 %v317, %v58
    %v358 = vmul.f32 %v318, %v59
    %v359 = vmul.f32 %v319, %v60
    %v360 = vmul.f32 %v320, %v61
    %v361 = vmul.f32 %v321, %v62
    %v362 = vmul.f32 %v322, %v63
    %s363 = scalar_lea.vmem %s4, 256
    %364 = vst [vmem:[%s363] sm:$0xff] %v331
    %365 = vst [vmem:[%s363 + $0x8] sm:$0xff] %v332
    %366 = vst [vmem:[%s363 + $0x10] sm:$0xff] %v333
    %367 = vst [vmem:[%s363 + $0x18] sm:$0xff] %v334
    %368 = vst [vmem:[%s363 + $0x20] sm:$0xff] %v335
    %369 = vst [vmem:[%s363 + $0x28] sm:$0xff] %v336
    %370 = vst [vmem:[%s363 + $0x30] sm:$0xff] %v337
    %371 = vst [vmem:[%s363 + $0x38] sm:$0xff] %v338
    %372 = vst [vmem:[%s363 + $0x40] sm:$0xff] %v339
    %373 = vst [vmem:[%s363 + $0x48] sm:$0xff] %v340
    %374 = vst [vmem:[%s363 + $0x50] sm:$0xff] %v341
    %375 = vst [vmem:[%s363 + $0x58] sm:$0xff] %v342
    %376 = vst [vmem:[%s363 + $0x60] sm:$0xff] %v343
    %377 = vst [vmem:[%s363 + $0x68] sm:$0xff] %v344
    %378 = vst [vmem:[%s363 + $0x70] sm:$0xff] %v345
    %379 = vst [vmem:[%s363 + $0x78] sm:$0xff] %v346
    %380 = vst [vmem:[%s363 + $0x80] sm:$0xff] %v347
    %381 = vst [vmem:[%s363 + $0x88] sm:$0xff] %v348
    %382 = vst [vmem:[%s363 + $0x90] sm:$0xff] %v349
    %383 = vst [vmem:[%s363 + $0x98] sm:$0xff] %v350
    %384 = vst [vmem:[%s363 + $0xa0] sm:$0xff] %v351
    %385 = vst [vmem:[%s363 + $0xa8] sm:$0xff] %v352
    %386 = vst [vmem:[%s363 + $0xb0] sm:$0xff] %v353
    %387 = vst [vmem:[%s363 + $0xb8] sm:$0xff] %v354
    %388 = vst [vmem:[%s363 + $0xc0] sm:$0xff] %v355
    %389 = vst [vmem:[%s363 + $0xc8] sm:$0xff] %v356
    %390 = vst [vmem:[%s363 + $0xd0] sm:$0xff] %v357
    %391 = vst [vmem:[%s363 + $0xd8] sm:$0xff] %v358
    %392 = vst [vmem:[%s363 + $0xe0] sm:$0xff] %v359
    %393 = vst [vmem:[%s363 + $0xe8] sm:$0xff] %v360
    %394 = vst [vmem:[%s363 + $0xf0] sm:$0xff] %v361
    %395 = vst [vmem:[%s363 + $0xf8] sm:$0xff] %v362
    // Predicated region
    $region18: #{cochleagram_forward.2} parent=1 // pred_check
      _
    $region19: #{cochleagram_forward.2} parent=1 // pred_check_branch
      %397 = sbr.rel (0) target = $region21
    $region20: #{cochleagram_forward.2} parent=1 // pred_region
      _
    $region21: #{cochleagram_forward.2} parent=1 // pred_fallthru
      _
    // Predicated region
    $region22: #{cochleagram_forward.2} parent=1 // pred_check
      _
    $region23: #{cochleagram_forward.2} parent=1 // pred_check_branch
      %399 = sbr.rel (0) target = $region25
    $region24: #{cochleagram_forward.2} parent=1 // pred_region
      _
    $region25: #{cochleagram_forward.2} parent=1 // pred_fallthru
      _
    // Predicated region
    $region26: #{cochleagram_forward.2} parent=1 // pred_check
      _
    $region27: #{cochleagram_forward.2} parent=1 // pred_check_branch
      %401 = sbr.rel (0) target = $region29
    $region28: #{cochleagram_forward.2} parent=1 // pred_region
      _
    $region29: #{cochleagram_forward.2} parent=1 // pred_fallthru
      _
    // Predicated region
    $region30: #{cochleagram_forward.2} parent=1 // pred_check
      _
    $region31: #{cochleagram_forward.2} parent=1 // pred_check_branch
      %403 = sbr.rel (0) target = $region33
    $region32: #{cochleagram_forward.2} parent=1 // pred_region
      _
    $region33: #{cochleagram_forward.2} parent=1 // pred_fallthru
      _
    %404 = vsyncpa [#allocation3], 1

// kernel: cochleagram_forward.3
$region0: #{cochleagram_forward.3}
  #allocation0 [shape = 'u32[]', space=smem, size = 0x4, offset = 0x4, fixed_abs, tag = 'smem constant byte address 0x4 - core index']
  #allocation1 [shape = 'u32[72,128]{1,0:T(1,128)}', space=vmem, size = 0x9000, scoped, tag = 'internal scratch']
  %s0 = inlined_call_operand.vmem [shape: bf16[64,2048], index: 0, kind: input, shape index: {}]
  %s1 = inlined_call_operand.vmem [shape: bf16[64,2048], index: 1, kind: input, shape index: {}]
  %s2 = inlined_call_operand.vmem [shape: bf16[2048,128], index: 2, kind: input, shape index: {}]
  %s3 = inlined_call_operand.hbm [shape: f32[64,128], index: 3, kind: output, shape index: {}]
  %s4 = sld [smem:[#allocation0]]
  $region22: #{cochleagram_forward.3} parent=0
    _
  %s6 = ssub.s32 1, %s4
  %s7 = scalar_select 0, %s6, %s4
  $region1: #{cochleagram_forward.3} parent=0
    #allocation2 [shape = 'u8[32768]{0}', space=vmem, size = 0x8000, scoped, tag = 'output window, operand 0, single buffered']
    #allocation3 [shape = 's32[1]{0}', space=sflag, size = 0x4, scoped, tag = 'scoped memory for cochleagram_forward.3']
    %8 = vsyncpa [#allocation3], 0
    // Predicated region
    $region2: #{cochleagram_forward.3} parent=1 // pred_check
      _
    $region3: #{cochleagram_forward.3} parent=1 // pred_check_branch
      %10 = sbr.rel (0) target = $region5
    $region4: #{cochleagram_forward.3} parent=1 // pred_region
      _
    $region5: #{cochleagram_forward.3} parent=1 // pred_fallthru
      _
    // Predicated region
    $region6: #{cochleagram_forward.3} parent=1 // pred_check
      _
    $region7: #{cochleagram_forward.3} parent=1 // pred_check_branch
      %12 = sbr.rel (0) target = $region9
    $region8: #{cochleagram_forward.3} parent=1 // pred_region
      _
    $region9: #{cochleagram_forward.3} parent=1 // pred_fallthru
      _
    // Predicated region
    $region10: #{cochleagram_forward.3} parent=1 // pred_check
      _
    $region11: #{cochleagram_forward.3} parent=1 // pred_check_branch
      %14 = sbr.rel (0) target = $region13
    $region12: #{cochleagram_forward.3} parent=1 // pred_region
      _
    $region13: #{cochleagram_forward.3} parent=1 // pred_fallthru
      _
    %v15 = vld [vmem:[%s0] sm:$0xff]
    %v16 = vld [vmem:[%s0 + $0x8] sm:$0xff]
    %v17 = vld [vmem:[%s0 + $0x10] sm:$0xff]
    %v18 = vld [vmem:[%s0 + $0x18] sm:$0xff]
    %v19 = vld [vmem:[%s0 + $0x20] sm:$0xff]
    %v20 = vld [vmem:[%s0 + $0x28] sm:$0xff]
    %v21 = vld [vmem:[%s0 + $0x30] sm:$0xff]
    %v22 = vld [vmem:[%s0 + $0x38] sm:$0xff]
    %v23 = vld [vmem:[%s0 + $0x40] sm:$0xff]
    %v24 = vld [vmem:[%s0 + $0x48] sm:$0xff]
    %v25 = vld [vmem:[%s0 + $0x50] sm:$0xff]
    %v26 = vld [vmem:[%s0 + $0x58] sm:$0xff]
    %v27 = vld [vmem:[%s0 + $0x60] sm:$0xff]
    %v28 = vld [vmem:[%s0 + $0x68] sm:$0xff]
    %v29 = vld [vmem:[%s0 + $0x70] sm:$0xff]
    %v30 = vld [vmem:[%s0 + $0x78] sm:$0xff]
    %v31 = vld [vmem:[%s0 + $0x80] sm:$0xff]
    %v32 = vld [vmem:[%s0 + $0x88] sm:$0xff]
    %v33 = vld [vmem:[%s0 + $0x90] sm:$0xff]
    %v34 = vld [vmem:[%s0 + $0x98] sm:$0xff]
    %v35 = vld [vmem:[%s0 + $0xa0] sm:$0xff]
    %v36 = vld [vmem:[%s0 + $0xa8] sm:$0xff]
    %v37 = vld [vmem:[%s0 + $0xb0] sm:$0xff]
    %v38 = vld [vmem:[%s0 + $0xb8] sm:$0xff]
    %v39 = vld [vmem:[%s0 + $0xc0] sm:$0xff]
    %v40 = vld [vmem:[%s0 + $0xc8] sm:$0xff]
    %v41 = vld [vmem:[%s0 + $0xd0] sm:$0xff]
    %v42 = vld [vmem:[%s0 + $0xd8] sm:$0xff]
    %v43 = vld [vmem:[%s0 + $0xe0] sm:$0xff]
    %v44 = vld [vmem:[%s0 + $0xe8] sm:$0xff]
    %v45 = vld [vmem:[%s0 + $0xf0] sm:$0xff]
    %v46 = vld [vmem:[%s0 + $0xf8] sm:$0xff]
    %v47 = vld [vmem:[%s0 + $0x100] sm:$0xff]
    %v48 = vld [vmem:[%s0 + $0x108] sm:$0xff]
    %v49 = vld [vmem:[%s0 + $0x110] sm:$0xff]
    %v50 = vld [vmem:[%s0 + $0x118] sm:$0xff]
    %v51 = vld [vmem:[%s0 + $0x120] sm:$0xff]
    %v52 = vld [vmem:[%s0 + $0x128] sm:$0xff]
    %v53 = vld [vmem:[%s0 + $0x130] sm:$0xff]
    %v54 = vld [vmem:[%s0 + $0x138] sm:$0xff]
    %v55 = vld [vmem:[%s0 + $0x140] sm:$0xff]
    %v56 = vld [vmem:[%s0 + $0x148] sm:$0xff]
    %v57 = vld [vmem:[%s0 + $0x150] sm:$0xff]
    %v58 = vld [vmem:[%s0 + $0x158] sm:$0xff]
    %v59 = vld [vmem:[%s0 + $0x160] sm:$0xff]
    %v60 = vld [vmem:[%s0 + $0x168] sm:$0xff]
    %v61 = vld [vmem:[%s0 + $0x170] sm:$0xff]
    %v62 = vld [vmem:[%s0 + $0x178] sm:$0xff]
    %v63 = vld [vmem:[%s0 + $0x180] sm:$0xff]
    %v64 = vld [vmem:[%s0 + $0x188] sm:$0xff]
    %v65 = vld [vmem:[%s0 + $0x190] sm:$0xff]
    %v66 = vld [vmem:[%s0 + $0x198] sm:$0xff]
    %v67 = vld [vmem:[%s0 + $0x1a0] sm:$0xff]
    %v68 = vld [vmem:[%s0 + $0x1a8] sm:$0xff]
    %v69 = vld [vmem:[%s0 + $0x1b0] sm:$0xff]
    %v70 = vld [vmem:[%s0 + $0x1b8] sm:$0xff]
    %v71 = vld [vmem:[%s0 + $0x1c0] sm:$0xff]
    %v72 = vld [vmem:[%s0 + $0x1c8] sm:$0xff]
    %v73 = vld [vmem:[%s0 + $0x1d0] sm:$0xff]
    %v74 = vld [vmem:[%s0 + $0x1d8] sm:$0xff]
    %v75 = vld [vmem:[%s0 + $0x1e0] sm:$0xff]
    %v76 = vld [vmem:[%s0 + $0x1e8] sm:$0xff]
    %v77 = vld [vmem:[%s0 + $0x1f0] sm:$0xff]
    %v78 = vld [vmem:[%s0 + $0x1f8] sm:$0xff]
    %v79 = vunpack.c.l.bf16 %v15
    %v80 = vunpack.c.h.bf16 %v15
    %v81 = vunpack.c.l.bf16 %v16
    %v82 = vunpack.c.h.bf16 %v16
    %v83 = vunpack.c.l.bf16 %v17
    %v84 = vunpack.c.h.bf16 %v17
    %v85 = vunpack.c.l.bf16 %v18
    %v86 = vunpack.c.h.bf16 %v18
    %v87 = vunpack.c.l.bf16 %v19
    %v88 = vunpack.c.h.bf16 %v19
    %v89 = vunpack.c.l.bf16 %v20
    %v90 = vunpack.c.h.bf16 %v20
    %v91 = vunpack.c.l.bf16 %v21
    %v92 = vunpack.c.h.bf16 %v21
    %v93 = vunpack.c.l.bf16 %v22
    %v94 = vunpack.c.h.bf16 %v22
    %v95 = vunpack.c.l.bf16 %v23
    %v96 = vunpack.c.h.bf16 %v23
    %v97 = vunpack.c.l.bf16 %v24
    %v98 = vunpack.c.h.bf16 %v24
    %v99 = vunpack.c.l.bf16 %v25
    %v100 = vunpack.c.h.bf16 %v25
    %v101 = vunpack.c.l.bf16 %v26
    %v102 = vunpack.c.h.bf16 %v26
    %v103 = vunpack.c.l.bf16 %v27
    %v104 = vunpack.c.h.bf16 %v27
    %v105 = vunpack.c.l.bf16 %v28
    %v106 = vunpack.c.h.bf16 %v28
    %v107 = vunpack.c.l.bf16 %v29
    %v108 = vunpack.c.h.bf16 %v29
    %v109 = vunpack.c.l.bf16 %v30
    %v110 = vunpack.c.h.bf16 %v30
    %v111 = vunpack.c.l.bf16 %v31
    %v112 = vunpack.c.h.bf16 %v31
    %v113 = vunpack.c.l.bf16 %v32
    %v114 = vunpack.c.h.bf16 %v32
    %v115 = vunpack.c.l.bf16 %v33
    %v116 = vunpack.c.h.bf16 %v33
    %v117 = vunpack.c.l.bf16 %v34
    %v118 = vunpack.c.h.bf16 %v34
    %v119 = vunpack.c.l.bf16 %v35
    %v120 = vunpack.c.h.bf16 %v35
    %v121 = vunpack.c.l.bf16 %v36
    %v122 = vunpack.c.h.bf16 %v36
    %v123 = vunpack.c.l.bf16 %v37
    %v124 = vunpack.c.h.bf16 %v37
    %v125 = vunpack.c.l.bf16 %v38
    %v126 = vunpack.c.h.bf16 %v38
    %v127 = vunpack.c.l.bf16 %v39
    %v128 = vunpack.c.h.bf16 %v39
    %v129 = vunpack.c.l.bf16 %v40
    %v130 = vunpack.c.h.bf16 %v40
    %v131 = vunpack.c.l.bf16 %v41
    %v132 = vunpack.c.h.bf16 %v41
    %v133 = vunpack.c.l.bf16 %v42
    %v134 = vunpack.c.h.bf16 %v42
    %v135 = vunpack.c.l.bf16 %v43
    %v136 = vunpack.c.h.bf16 %v43
    %v137 = vunpack.c.l.bf16 %v44
    %v138 = vunpack.c.h.bf16 %v44
    %v139 = vunpack.c.l.bf16 %v45
    %v140 = vunpack.c.h.bf16 %v45
    %v141 = vunpack.c.l.bf16 %v46
    %v142 = vunpack.c.h.bf16 %v46
    %v143 = vunpack.c.l.bf16 %v47
    %v144 = vunpack.c.h.bf16 %v47
    %v145 = vunpack.c.l.bf16 %v48
    %v146 = vunpack.c.h.bf16 %v48
    %v147 = vunpack.c.l.bf16 %v49
    %v148 = vunpack.c.h.bf16 %v49
    %v149 = vunpack.c.l.bf16 %v50
    %v150 = vunpack.c.h.bf16 %v50
    %v151 = vunpack.c.l.bf16 %v51
    %v152 = vunpack.c.h.bf16 %v51
    %v153 = vunpack.c.l.bf16 %v52
    %v154 = vunpack.c.h.bf16 %v52
    %v155 = vunpack.c.l.bf16 %v53
    %v156 = vunpack.c.h.bf16 %v53
    %v157 = vunpack.c.l.bf16 %v54
    %v158 = vunpack.c.h.bf16 %v54
    %v159 = vunpack.c.l.bf16 %v55
    %v160 = vunpack.c.h.bf16 %v55
    %v161 = vunpack.c.l.bf16 %v56
    %v162 = vunpack.c.h.bf16 %v56
    %v163 = vunpack.c.l.bf16 %v57
    %v164 = vunpack.c.h.bf16 %v57
    %v165 = vunpack.c.l.bf16 %v58
    %v166 = vunpack.c.h.bf16 %v58
    %v167 = vunpack.c.l.bf16 %v59
    %v168 = vunpack.c.h.bf16 %v59
    %v169 = vunpack.c.l.bf16 %v60
    %v170 = vunpack.c.h.bf16 %v60
    %v171 = vunpack.c.l.bf16 %v61
    %v172 = vunpack.c.h.bf16 %v61
    %v173 = vunpack.c.l.bf16 %v62
    %v174 = vunpack.c.h.bf16 %v62
    %v175 = vunpack.c.l.bf16 %v63
    %v176 = vunpack.c.h.bf16 %v63
    %v177 = vunpack.c.l.bf16 %v64
    %v178 = vunpack.c.h.bf16 %v64
    %v179 = vunpack.c.l.bf16 %v65
    %v180 = vunpack.c.h.bf16 %v65
    %v181 = vunpack.c.l.bf16 %v66
    %v182 = vunpack.c.h.bf16 %v66
    %v183 = vunpack.c.l.bf16 %v67
    %v184 = vunpack.c.h.bf16 %v67
    %v185 = vunpack.c.l.bf16 %v68
    %v186 = vunpack.c.h.bf16 %v68
    %v187 = vunpack.c.l.bf16 %v69
    %v188 = vunpack.c.h.bf16 %v69
    %v189 = vunpack.c.l.bf16 %v70
    %v190 = vunpack.c.h.bf16 %v70
    %v191 = vunpack.c.l.bf16 %v71
    %v192 = vunpack.c.h.bf16 %v71
    %v193 = vunpack.c.l.bf16 %v72
    %v194 = vunpack.c.h.bf16 %v72
    %v195 = vunpack.c.l.bf16 %v73
    %v196 = vunpack.c.h.bf16 %v73
    %v197 = vunpack.c.l.bf16 %v74
    %v198 = vunpack.c.h.bf16 %v74
    %v199 = vunpack.c.l.bf16 %v75
    %v200 = vunpack.c.h.bf16 %v75
    %v201 = vunpack.c.l.bf16 %v76
    %v202 = vunpack.c.h.bf16 %v76
    %v203 = vunpack.c.l.bf16 %v77
    %v204 = vunpack.c.h.bf16 %v77
    %v205 = vunpack.c.l.bf16 %v78
    %v206 = vunpack.c.h.bf16 %v78
    %v207 = vld [vmem:[%s1] sm:$0xff]
    %v208 = vld [vmem:[%s1 + $0x8] sm:$0xff]
    %v209 = vld [vmem:[%s1 + $0x10] sm:$0xff]
    %v210 = vld [vmem:[%s1 + $0x18] sm:$0xff]
    %v211 = vld [vmem:[%s1 + $0x20] sm:$0xff]
    %v212 = vld [vmem:[%s1 + $0x28] sm:$0xff]
    %v213 = vld [vmem:[%s1 + $0x30] sm:$0xff]
    %v214 = vld [vmem:[%s1 + $0x38] sm:$0xff]
    %v215 = vld [vmem:[%s1 + $0x40] sm:$0xff]
    %v216 = vld [vmem:[%s1 + $0x48] sm:$0xff]
    %v217 = vld [vmem:[%s1 + $0x50] sm:$0xff]
    %v218 = vld [vmem:[%s1 + $0x58] sm:$0xff]
    %v219 = vld [vmem:[%s1 + $0x60] sm:$0xff]
    %v220 = vld [vmem:[%s1 + $0x68] sm:$0xff]
    %v221 = vld [vmem:[%s1 + $0x70] sm:$0xff]
    %v222 = vld [vmem:[%s1 + $0x78] sm:$0xff]
    %v223 = vld [vmem:[%s1 + $0x80] sm:$0xff]
    %v224 = vld [vmem:[%s1 + $0x88] sm:$0xff]
    %v225 = vld [vmem:[%s1 + $0x90] sm:$0xff]
    %v226 = vld [vmem:[%s1 + $0x98] sm:$0xff]
    %v227 = vld [vmem:[%s1 + $0xa0] sm:$0xff]
    %v228 = vld [vmem:[%s1 + $0xa8] sm:$0xff]
    %v229 = vld [vmem:[%s1 + $0xb0] sm:$0xff]
    %v230 = vld [vmem:[%s1 + $0xb8] sm:$0xff]
    %v231 = vld [vmem:[%s1 + $0xc0] sm:$0xff]
    %v232 = vld [vmem:[%s1 + $0xc8] sm:$0xff]
    %v233 = vld [vmem:[%s1 + $0xd0] sm:$0xff]
    %v234 = vld [vmem:[%s1 + $0xd8] sm:$0xff]
    %v235 = vld [vmem:[%s1 + $0xe0] sm:$0xff]
    %v236 = vld [vmem:[%s1 + $0xe8] sm:$0xff]
    %v237 = vld [vmem:[%s1 + $0xf0] sm:$0xff]
    %v238 = vld [vmem:[%s1 + $0xf8] sm:$0xff]
    %v239 = vld [vmem:[%s1 + $0x100] sm:$0xff]
    %v240 = vld [vmem:[%s1 + $0x108] sm:$0xff]
    %v241 = vld [vmem:[%s1 + $0x110] sm:$0xff]
    %v242 = vld [vmem:[%s1 + $0x118] sm:$0xff]
    %v243 = vld [vmem:[%s1 + $0x120] sm:$0xff]
    %v244 = vld [vmem:[%s1 + $0x128] sm:$0xff]
    %v245 = vld [vmem:[%s1 + $0x130] sm:$0xff]
    %v246 = vld [vmem:[%s1 + $0x138] sm:$0xff]
    %v247 = vld [vmem:[%s1 + $0x140] sm:$0xff]
    %v248 = vld [vmem:[%s1 + $0x148] sm:$0xff]
    %v249 = vld [vmem:[%s1 + $0x150] sm:$0xff]
    %v250 = vld [vmem:[%s1 + $0x158] sm:$0xff]
    %v251 = vld [vmem:[%s1 + $0x160] sm:$0xff]
    %v252 = vld [vmem:[%s1 + $0x168] sm:$0xff]
    %v253 = vld [vmem:[%s1 + $0x170] sm:$0xff]
    %v254 = vld [vmem:[%s1 + $0x178] sm:$0xff]
    %v255 = vld [vmem:[%s1 + $0x180] sm:$0xff]
    %v256 = vld [vmem:[%s1 + $0x188] sm:$0xff]
    %v257 = vld [vmem:[%s1 + $0x190] sm:$0xff]
    %v258 = vld [vmem:[%s1 + $0x198] sm:$0xff]
    %v259 = vld [vmem:[%s1 + $0x1a0] sm:$0xff]
    %v260 = vld [vmem:[%s1 + $0x1a8] sm:$0xff]
    %v261 = vld [vmem:[%s1 + $0x1b0] sm:$0xff]
    %v262 = vld [vmem:[%s1 + $0x1b8] sm:$0xff]
    %v263 = vld [vmem:[%s1 + $0x1c0] sm:$0xff]
    %v264 = vld [vmem:[%s1 + $0x1c8] sm:$0xff]
    %v265 = vld [vmem:[%s1 + $0x1d0] sm:$0xff]
    %v266 = vld [vmem:[%s1 + $0x1d8] sm:$0xff]
    %v267 = vld [vmem:[%s1 + $0x1e0] sm:$0xff]
    %v268 = vld [vmem:[%s1 + $0x1e8] sm:$0xff]
    %v269 = vld [vmem:[%s1 + $0x1f0] sm:$0xff]
    %v270 = vld [vmem:[%s1 + $0x1f8] sm:$0xff]
    %v271 = vunpack.c.l.bf16 %v207
    %v272 = vunpack.c.h.bf16 %v207
    %v273 = vunpack.c.l.bf16 %v208
    %v274 = vunpack.c.h.bf16 %v208
    %v275 = vunpack.c.l.bf16 %v209
    %v276 = vunpack.c.h.bf16 %v209
    %v277 = vunpack.c.l.bf16 %v210
    %v278 = vunpack.c.h.bf16 %v210
    %v279 = vunpack.c.l.bf16 %v211
    %v280 = vunpack.c.h.bf16 %v211
    %v281 = vunpack.c.l.bf16 %v212
    %v282 = vunpack.c.h.bf16 %v212
    %v283 = vunpack.c.l.bf16 %v213
    %v284 = vunpack.c.h.bf16 %v213
    %v285 = vunpack.c.l.bf16 %v214
    %v286 = vunpack.c.h.bf16 %v214
    %v287 = vunpack.c.l.bf16 %v215
    %v288 = vunpack.c.h.bf16 %v215
    %v289 = vunpack.c.l.bf16 %v216
    %v290 = vunpack.c.h.bf16 %v216
    %v291 = vunpack.c.l.bf16 %v217
    %v292 = vunpack.c.h.bf16 %v217
    %v293 = vunpack.c.l.bf16 %v218
    %v294 = vunpack.c.h.bf16 %v218
    %v295 = vunpack.c.l.bf16 %v219
    %v296 = vunpack.c.h.bf16 %v219
    %v297 = vunpack.c.l.bf16 %v220
    %v298 = vunpack.c.h.bf16 %v220
    %v299 = vunpack.c.l.bf16 %v221
    %v300 = vunpack.c.h.bf16 %v221
    %v301 = vunpack.c.l.bf16 %v222
    %v302 = vunpack.c.h.bf16 %v222
    %v303 = vunpack.c.l.bf16 %v223
    %v304 = vunpack.c.h.bf16 %v223
    %v305 = vunpack.c.l.bf16 %v224
    %v306 = vunpack.c.h.bf16 %v224
    %v307 = vunpack.c.l.bf16 %v225
    %v308 = vunpack.c.h.bf16 %v225
    %v309 = vunpack.c.l.bf16 %v226
    %v310 = vunpack.c.h.bf16 %v226
    %v311 = vunpack.c.l.bf16 %v227
    %v312 = vunpack.c.h.bf16 %v227
    %v313 = vunpack.c.l.bf16 %v228
    %v314 = vunpack.c.h.bf16 %v228
    %v315 = vunpack.c.l.bf16 %v229
    %v316 = vunpack.c.h.bf16 %v229
    %v317 = vunpack.c.l.bf16 %v230
    %v318 = vunpack.c.h.bf16 %v230
    %v319 = vunpack.c.l.bf16 %v231
    %v320 = vunpack.c.h.bf16 %v231
    %v321 = vunpack.c.l.bf16 %v232
    %v322 = vunpack.c.h.bf16 %v232
    %v323 = vunpack.c.l.bf16 %v233
    %v324 = vunpack.c.h.bf16 %v233
    %v325 = vunpack.c.l.bf16 %v234
    %v326 = vunpack.c.h.bf16 %v234
    %v327 = vunpack.c.l.bf16 %v235
    %v328 = vunpack.c.h.bf16 %v235
    %v329 = vunpack.c.l.bf16 %v236
    %v330 = vunpack.c.h.bf16 %v236
    %v331 = vunpack.c.l.bf16 %v237
    %v332 = vunpack.c.h.bf16 %v237
    %v333 = vunpack.c.l.bf16 %v238
    %v334 = vunpack.c.h.bf16 %v238
    %v335 = vunpack.c.l.bf16 %v239
    %v336 = vunpack.c.h.bf16 %v239
    %v337 = vunpack.c.l.bf16 %v240
    %v338 = vunpack.c.h.bf16 %v240
    %v339 = vunpack.c.l.bf16 %v241
    %v340 = vunpack.c.h.bf16 %v241
    %v341 = vunpack.c.l.bf16 %v242
    %v342 = vunpack.c.h.bf16 %v242
    %v343 = vunpack.c.l.bf16 %v243
    %v344 = vunpack.c.h.bf16 %v243
    %v345 = vunpack.c.l.bf16 %v244
    %v346 = vunpack.c.h.bf16 %v244
    %v347 = vunpack.c.l.bf16 %v245
    %v348 = vunpack.c.h.bf16 %v245
    %v349 = vunpack.c.l.bf16 %v246
    %v350 = vunpack.c.h.bf16 %v246
    %v351 = vunpack.c.l.bf16 %v247
    %v352 = vunpack.c.h.bf16 %v247
    %v353 = vunpack.c.l.bf16 %v248
    %v354 = vunpack.c.h.bf16 %v248
    %v355 = vunpack.c.l.bf16 %v249
    %v356 = vunpack.c.h.bf16 %v249
    %v357 = vunpack.c.l.bf16 %v250
    %v358 = vunpack.c.h.bf16 %v250
    %v359 = vunpack.c.l.bf16 %v251
    %v360 = vunpack.c.h.bf16 %v251
    %v361 = vunpack.c.l.bf16 %v252
    %v362 = vunpack.c.h.bf16 %v252
    %v363 = vunpack.c.l.bf16 %v253
    %v364 = vunpack.c.h.bf16 %v253
    %v365 = vunpack.c.l.bf16 %v254
    %v366 = vunpack.c.h.bf16 %v254
    %v367 = vunpack.c.l.bf16 %v255
    %v368 = vunpack.c.h.bf16 %v255
    %v369 = vunpack.c.l.bf16 %v256
    %v370 = vunpack.c.h.bf16 %v256
    %v371 = vunpack.c.l.bf16 %v257
    %v372 = vunpack.c.h.bf16 %v257
    %v373 = vunpack.c.l.bf16 %v258
    %v374 = vunpack.c.h.bf16 %v258
    %v375 = vunpack.c.l.bf16 %v259
    %v376 = vunpack.c.h.bf16 %v259
    %v377 = vunpack.c.l.bf16 %v260
    %v378 = vunpack.c.h.bf16 %v260
    %v379 = vunpack.c.l.bf16 %v261
    %v380 = vunpack.c.h.bf16 %v261
    %v381 = vunpack.c.l.bf16 %v262
    %v382 = vunpack.c.h.bf16 %v262
    %v383 = vunpack.c.l.bf16 %v263
    %v384 = vunpack.c.h.bf16 %v263
    %v385 = vunpack.c.l.bf16 %v264
    %v386 = vunpack.c.h.bf16 %v264
    %v387 = vunpack.c.l.bf16 %v265
    %v388 = vunpack.c.h.bf16 %v265
    %v389 = vunpack.c.l.bf16 %v266
    %v390 = vunpack.c.h.bf16 %v266
    %v391 = vunpack.c.l.bf16 %v267
    %v392 = vunpack.c.h.bf16 %v267
    %v393 = vunpack.c.l.bf16 %v268
    %v394 = vunpack.c.h.bf16 %v268
    %v395 = vunpack.c.l.bf16 %v269
    %v396 = vunpack.c.h.bf16 %v269
    %v397 = vunpack.c.l.bf16 %v270
    %v398 = vunpack.c.h.bf16 %v270
    %v399 = vmul.f32 %v79, %v79
    %v400 = vmul.f32 %v80, %v80
    %v401 = vmul.f32 %v81, %v81
    %v402 = vmul.f32 %v82, %v82
    %v403 = vmul.f32 %v83, %v83
    %v404 = vmul.f32 %v84, %v84
    %v405 = vmul.f32 %v85, %v85
    %v406 = vmul.f32 %v86, %v86
    %v407 = vmul.f32 %v87, %v87
    %v408 = vmul.f32 %v88, %v88
    %v409 = vmul.f32 %v89, %v89
    %v410 = vmul.f32 %v90, %v90
    %v411 = vmul.f32 %v91, %v91
    %v412 = vmul.f32 %v92, %v92
    %v413 = vmul.f32 %v93, %v93
    %v414 = vmul.f32 %v94, %v94
    %v415 = vmul.f32 %v95, %v95
    %v416 = vmul.f32 %v96, %v96
    %v417 = vmul.f32 %v97, %v97
    %v418 = vmul.f32 %v98, %v98
    %v419 = vmul.f32 %v99, %v99
    %v420 = vmul.f32 %v100, %v100
    %v421 = vmul.f32 %v101, %v101
    %v422 = vmul.f32 %v102, %v102
    %v423 = vmul.f32 %v103, %v103
    %v424 = vmul.f32 %v104, %v104
    %v425 = vmul.f32 %v105, %v105
    %v426 = vmul.f32 %v106, %v106
    %v427 = vmul.f32 %v107, %v107
    %v428 = vmul.f32 %v108, %v108
    %v429 = vmul.f32 %v109, %v109
    %v430 = vmul.f32 %v110, %v110
    %v431 = vmul.f32 %v111, %v111
    %v432 = vmul.f32 %v112, %v112
    %v433 = vmul.f32 %v113, %v113
    %v434 = vmul.f32 %v114, %v114
    %v435 = vmul.f32 %v115, %v115
    %v436 = vmul.f32 %v116, %v116
    %v437 = vmul.f32 %v117, %v117
    %v438 = vmul.f32 %v118, %v118
    %v439 = vmul.f32 %v119, %v119
    %v440 = vmul.f32 %v120, %v120
    %v441 = vmul.f32 %v121, %v121
    %v442 = vmul.f32 %v122, %v122
    %v443 = vmul.f32 %v123, %v123
    %v444 = vmul.f32 %v124, %v124
    %v445 = vmul.f32 %v125, %v125
    %v446 = vmul.f32 %v126, %v126
    %v447 = vmul.f32 %v127, %v127
    %v448 = vmul.f32 %v128, %v128
    %v449 = vmul.f32 %v129, %v129
    %v450 = vmul.f32 %v130, %v130
    %v451 = vmul.f32 %v131, %v131
    %v452 = vmul.f32 %v132, %v132
    %v453 = vmul.f32 %v133, %v133
    %v454 = vmul.f32 %v134, %v134
    %v455 = vmul.f32 %v135, %v135
    %v456 = vmul.f32 %v136, %v136
    %v457 = vmul.f32 %v137, %v137
    %v458 = vmul.f32 %v138, %v138
    %v459 = vmul.f32 %v139, %v139
    %v460 = vmul.f32 %v140, %v140
    %v461 = vmul.f32 %v141, %v141
    %v462 = vmul.f32 %v142, %v142
    %v463 = vmul.f32 %v143, %v143
    %v464 = vmul.f32 %v144, %v144
    %v465 = vmul.f32 %v145, %v145
    %v466 = vmul.f32 %v146, %v146
    %v467 = vmul.f32 %v147, %v147
    %v468 = vmul.f32 %v148, %v148
    %v469 = vmul.f32 %v149, %v149
    %v470 = vmul.f32 %v150, %v150
    %v471 = vmul.f32 %v151, %v151
    %v472 = vmul.f32 %v152, %v152
    %v473 = vmul.f32 %v153, %v153
    %v474 = vmul.f32 %v154, %v154
    %v475 = vmul.f32 %v155, %v155
    %v476 = vmul.f32 %v156, %v156
    %v477 = vmul.f32 %v157, %v157
    %v478 = vmul.f32 %v158, %v158
    %v479 = vmul.f32 %v159, %v159
    %v480 = vmul.f32 %v160, %v160
    %v481 = vmul.f32 %v161, %v161
    %v482 = vmul.f32 %v162, %v162
    %v483 = vmul.f32 %v163, %v163
    %v484 = vmul.f32 %v164, %v164
    %v485 = vmul.f32 %v165, %v165
    %v486 = vmul.f32 %v166, %v166
    %v487 = vmul.f32 %v167, %v167
    %v488 = vmul.f32 %v168, %v168
    %v489 = vmul.f32 %v169, %v169
    %v490 = vmul.f32 %v170, %v170
    %v491 = vmul.f32 %v171, %v171
    %v492 = vmul.f32 %v172, %v172
    %v493 = vmul.f32 %v173, %v173
    %v494 = vmul.f32 %v174, %v174
    %v495 = vmul.f32 %v175, %v175
    %v496 = vmul.f32 %v176, %v176
    %v497 = vmul.f32 %v177, %v177
    %v498 = vmul.f32 %v178, %v178
    %v499 = vmul.f32 %v179, %v179
    %v500 = vmul.f32 %v180, %v180
    %v501 = vmul.f32 %v181, %v181
    %v502 = vmul.f32 %v182, %v182
    %v503 = vmul.f32 %v183, %v183
    %v504 = vmul.f32 %v184, %v184
    %v505 = vmul.f32 %v185, %v185
    %v506 = vmul.f32 %v186, %v186
    %v507 = vmul.f32 %v187, %v187
    %v508 = vmul.f32 %v188, %v188
    %v509 = vmul.f32 %v189, %v189
    %v510 = vmul.f32 %v190, %v190
    %v511 = vmul.f32 %v191, %v191
    %v512 = vmul.f32 %v192, %v192
    %v513 = vmul.f32 %v193, %v193
    %v514 = vmul.f32 %v194, %v194
    %v515 = vmul.f32 %v195, %v195
    %v516 = vmul.f32 %v196, %v196
    %v517 = vmul.f32 %v197, %v197
    %v518 = vmul.f32 %v198, %v198
    %v519 = vmul.f32 %v199, %v199
    %v520 = vmul.f32 %v200, %v200
    %v521 = vmul.f32 %v201, %v201
    %v522 = vmul.f32 %v202, %v202
    %v523 = vmul.f32 %v203, %v203
    %v524 = vmul.f32 %v204, %v204
    %v525 = vmul.f32 %v205, %v205
    %v526 = vmul.f32 %v206, %v206
    %v527 = vmul.f32 %v271, %v271
    %v528 = vmul.f32 %v272, %v272
    %v529 = vmul.f32 %v273, %v273
    %v530 = vmul.f32 %v274, %v274
    %v531 = vmul.f32 %v275, %v275
    %v532 = vmul.f32 %v276, %v276
    %v533 = vmul.f32 %v277, %v277
    %v534 = vmul.f32 %v278, %v278
    %v535 = vmul.f32 %v279, %v279
    %v536 = vmul.f32 %v280, %v280
    %v537 = vmul.f32 %v281, %v281
    %v538 = vmul.f32 %v282, %v282
    %v539 = vmul.f32 %v283, %v283
    %v540 = vmul.f32 %v284, %v284
    %v541 = vmul.f32 %v285, %v285
    %v542 = vmul.f32 %v286, %v286
    %v543 = vmul.f32 %v287, %v287
    %v544 = vmul.f32 %v288, %v288
    %v545 = vmul.f32 %v289, %v289
    %v546 = vmul.f32 %v290, %v290
    %v547 = vmul.f32 %v291, %v291
    %v548 = vmul.f32 %v292, %v292
    %v549 = vmul.f32 %v293, %v293
    %v550 = vmul.f32 %v294, %v294
    %v551 = vmul.f32 %v295, %v295
    %v552 = vmul.f32 %v296, %v296
    %v553 = vmul.f32 %v297, %v297
    %v554 = vmul.f32 %v298, %v298
    %v555 = vmul.f32 %v299, %v299
    %v556 = vmul.f32 %v300, %v300
    %v557 = vmul.f32 %v301, %v301
    %v558 = vmul.f32 %v302, %v302
    %v559 = vmul.f32 %v303, %v303
    %v560 = vmul.f32 %v304, %v304
    %v561 = vmul.f32 %v305, %v305
    %v562 = vmul.f32 %v306, %v306
    %v563 = vmul.f32 %v307, %v307
    %v564 = vmul.f32 %v308, %v308
    %v565 = vmul.f32 %v309, %v309
    %v566 = vmul.f32 %v310, %v310
    %v567 = vmul.f32 %v311, %v311
    %v568 = vmul.f32 %v312, %v312
    %v569 = vmul.f32 %v313, %v313
    %v570 = vmul.f32 %v314, %v314
    %v571 = vmul.f32 %v315, %v315
    %v572 = vmul.f32 %v316, %v316
    %v573 = vmul.f32 %v317, %v317
    %v574 = vmul.f32 %v318, %v318
    %v575 = vmul.f32 %v319, %v319
    %v576 = vmul.f32 %v320, %v320
    %v577 = vmul.f32 %v321, %v321
    %v578 = vmul.f32 %v322, %v322
    %v579 = vmul.f32 %v323, %v323
    %v580 = vmul.f32 %v324, %v324
    %v581 = vmul.f32 %v325, %v325
    %v582 = vmul.f32 %v326, %v326
    %v583 = vmul.f32 %v327, %v327
    %v584 = vmul.f32 %v328, %v328
    %v585 = vmul.f32 %v329, %v329
    %v586 = vmul.f32 %v330, %v330
    %v587 = vmul.f32 %v331, %v331
    %v588 = vmul.f32 %v332, %v332
    %v589 = vmul.f32 %v333, %v333
    %v590 = vmul.f32 %v334, %v334
    %v591 = vmul.f32 %v335, %v335
    %v592 = vmul.f32 %v336, %v336
    %v593 = vmul.f32 %v337, %v337
    %v594 = vmul.f32 %v338, %v338
    %v595 = vmul.f32 %v339, %v339
    %v596 = vmul.f32 %v340, %v340
    %v597 = vmul.f32 %v341, %v341
    %v598 = vmul.f32 %v342, %v342
    %v599 = vmul.f32 %v343, %v343
    %v600 = vmul.f32 %v344, %v344
    %v601 = vmul.f32 %v345, %v345
    %v602 = vmul.f32 %v346, %v346
    %v603 = vmul.f32 %v347, %v347
    %v604 = vmul.f32 %v348, %v348
    %v605 = vmul.f32 %v349, %v349
    %v606 = vmul.f32 %v350, %v350
    %v607 = vmul.f32 %v351, %v351
    %v608 = vmul.f32 %v352, %v352
    %v609 = vmul.f32 %v353, %v353
    %v610 = vmul.f32 %v354, %v354
    %v611 = vmul.f32 %v355, %v355
    %v612 = vmul.f32 %v356, %v356
    %v613 = vmul.f32 %v357, %v357
    %v614 = vmul.f32 %v358, %v358
    %v615 = vmul.f32 %v359, %v359
    %v616 = vmul.f32 %v360, %v360
    %v617 = vmul.f32 %v361, %v361
    %v618 = vmul.f32 %v362, %v362
    %v619 = vmul.f32 %v363, %v363
    %v620 = vmul.f32 %v364, %v364
    %v621 = vmul.f32 %v365, %v365
    %v622 = vmul.f32 %v366, %v366
    %v623 = vmul.f32 %v367, %v367
    %v624 = vmul.f32 %v368, %v368
    %v625 = vmul.f32 %v369, %v369
    %v626 = vmul.f32 %v370, %v370
    %v627 = vmul.f32 %v371, %v371
    %v628 = vmul.f32 %v372, %v372
    %v629 = vmul.f32 %v373, %v373
    %v630 = vmul.f32 %v374, %v374
    %v631 = vmul.f32 %v375, %v375
    %v632 = vmul.f32 %v376, %v376
    %v633 = vmul.f32 %v377, %v377
    %v634 = vmul.f32 %v378, %v378
    %v635 = vmul.f32 %v379, %v379
    %v636 = vmul.f32 %v380, %v380
    %v637 = vmul.f32 %v381, %v381
    %v638 = vmul.f32 %v382, %v382
    %v639 = vmul.f32 %v383, %v383
    %v640 = vmul.f32 %v384, %v384
    %v641 = vmul.f32 %v385, %v385
    %v642 = vmul.f32 %v386, %v386
    %v643 = vmul.f32 %v387, %v387
    %v644 = vmul.f32 %v388, %v388
    %v645 = vmul.f32 %v389, %v389
    %v646 = vmul.f32 %v390, %v390
    %v647 = vmul.f32 %v391, %v391
    %v648 = vmul.f32 %v392, %v392
    %v649 = vmul.f32 %v393, %v393
    %v650 = vmul.f32 %v394, %v394
    %v651 = vmul.f32 %v395, %v395
    %v652 = vmul.f32 %v396, %v396
    %v653 = vmul.f32 %v397, %v397
    %v654 = vmul.f32 %v398, %v398
    %v655 = vadd.f32 %v399, %v527
    %v656 = vadd.f32 %v400, %v528
    %v657 = vadd.f32 %v401, %v529
    %v658 = vadd.f32 %v402, %v530
    %v659 = vadd.f32 %v403, %v531
    %v660 = vadd.f32 %v404, %v532
    %v661 = vadd.f32 %v405, %v533
    %v662 = vadd.f32 %v406, %v534
    %v663 = vadd.f32 %v407, %v535
    %v664 = vadd.f32 %v408, %v536
    %v665 = vadd.f32 %v409, %v537
    %v666 = vadd.f32 %v410, %v538
    %v667 = vadd.f32 %v411, %v539
    %v668 = vadd.f32 %v412, %v540
    %v669 = vadd.f32 %v413, %v541
    %v670 = vadd.f32 %v414, %v542
    %v671 = vadd.f32 %v415, %v543
    %v672 = vadd.f32 %v416, %v544
    %v673 = vadd.f32 %v417, %v545
    %v674 = vadd.f32 %v418, %v546
    %v675 = vadd.f32 %v419, %v547
    %v676 = vadd.f32 %v420, %v548
    %v677 = vadd.f32 %v421, %v549
    %v678 = vadd.f32 %v422, %v550
    %v679 = vadd.f32 %v423, %v551
    %v680 = vadd.f32 %v424, %v552
    %v681 = vadd.f32 %v425, %v553
    %v682 = vadd.f32 %v426, %v554
    %v683 = vadd.f32 %v427, %v555
    %v684 = vadd.f32 %v428, %v556
    %v685 = vadd.f32 %v429, %v557
    %v686 = vadd.f32 %v430, %v558
    %v687 = vadd.f32 %v431, %v559
    %v688 = vadd.f32 %v432, %v560
    %v689 = vadd.f32 %v433, %v561
    %v690 = vadd.f32 %v434, %v562
    %v691 = vadd.f32 %v435, %v563
    %v692 = vadd.f32 %v436, %v564
    %v693 = vadd.f32 %v437, %v565
    %v694 = vadd.f32 %v438, %v566
    %v695 = vadd.f32 %v439, %v567
    %v696 = vadd.f32 %v440, %v568
    %v697 = vadd.f32 %v441, %v569
    %v698 = vadd.f32 %v442, %v570
    %v699 = vadd.f32 %v443, %v571
    %v700 = vadd.f32 %v444, %v572
    %v701 = vadd.f32 %v445, %v573
    %v702 = vadd.f32 %v446, %v574
    %v703 = vadd.f32 %v447, %v575
    %v704 = vadd.f32 %v448, %v576
    %v705 = vadd.f32 %v449, %v577
    %v706 = vadd.f32 %v450, %v578
    %v707 = vadd.f32 %v451, %v579
    %v708 = vadd.f32 %v452, %v580
    %v709 = vadd.f32 %v453, %v581
    %v710 = vadd.f32 %v454, %v582
    %v711 = vadd.f32 %v455, %v583
    %v712 = vadd.f32 %v456, %v584
    %v713 = vadd.f32 %v457, %v585
    %v714 = vadd.f32 %v458, %v586
    %v715 = vadd.f32 %v459, %v587
    %v716 = vadd.f32 %v460, %v588
    %v717 = vadd.f32 %v461, %v589
    %v718 = vadd.f32 %v462, %v590
    %v719 = vadd.f32 %v463, %v591
    %v720 = vadd.f32 %v464, %v592
    %v721 = vadd.f32 %v465, %v593
    %v722 = vadd.f32 %v466, %v594
    %v723 = vadd.f32 %v467, %v595
    %v724 = vadd.f32 %v468, %v596
    %v725 = vadd.f32 %v469, %v597
    %v726 = vadd.f32 %v470, %v598
    %v727 = vadd.f32 %v471, %v599
    %v728 = vadd.f32 %v472, %v600
    %v729 = vadd.f32 %v473, %v601
    %v730 = vadd.f32 %v474, %v602
    %v731 = vadd.f32 %v475, %v603
    %v732 = vadd.f32 %v476, %v604
    %v733 = vadd.f32 %v477, %v605
    %v734 = vadd.f32 %v478, %v606
    %v735 = vadd.f32 %v479, %v607
    %v736 = vadd.f32 %v480, %v608
    %v737 = vadd.f32 %v481, %v609
    %v738 = vadd.f32 %v482, %v610
    %v739 = vadd.f32 %v483, %v611
    %v740 = vadd.f32 %v484, %v612
    %v741 = vadd.f32 %v485, %v613
    %v742 = vadd.f32 %v486, %v614
    %v743 = vadd.f32 %v487, %v615
    %v744 = vadd.f32 %v488, %v616
    %v745 = vadd.f32 %v489, %v617
    %v746 = vadd.f32 %v490, %v618
    %v747 = vadd.f32 %v491, %v619
    %v748 = vadd.f32 %v492, %v620
    %v749 = vadd.f32 %v493, %v621
    %v750 = vadd.f32 %v494, %v622
    %v751 = vadd.f32 %v495, %v623
    %v752 = vadd.f32 %v496, %v624
    %v753 = vadd.f32 %v497, %v625
    %v754 = vadd.f32 %v498, %v626
    %v755 = vadd.f32 %v499, %v627
    %v756 = vadd.f32 %v500, %v628
    %v757 = vadd.f32 %v501, %v629
    %v758 = vadd.f32 %v502, %v630
    %v759 = vadd.f32 %v503, %v631
    %v760 = vadd.f32 %v504, %v632
    %v761 = vadd.f32 %v505, %v633
    %v762 = vadd.f32 %v506, %v634
    %v763 = vadd.f32 %v507, %v635
    %v764 = vadd.f32 %v508, %v636
    %v765 = vadd.f32 %v509, %v637
    %v766 = vadd.f32 %v510, %v638
    %v767 = vadd.f32 %v511, %v639
    %v768 = vadd.f32 %v512, %v640
    %v769 = vadd.f32 %v513, %v641
    %v770 = vadd.f32 %v514, %v642
    %v771 = vadd.f32 %v515, %v643
    %v772 = vadd.f32 %v516, %v644
    %v773 = vadd.f32 %v517, %v645
    %v774 = vadd.f32 %v518, %v646
    %v775 = vadd.f32 %v519, %v647
    %v776 = vadd.f32 %v520, %v648
    %v777 = vadd.f32 %v521, %v649
    %v778 = vadd.f32 %v522, %v650
    %v779 = vadd.f32 %v523, %v651
    %v780 = vadd.f32 %v524, %v652
    %v781 = vadd.f32 %v525, %v653
    %v782 = vadd.f32 %v526, %v654
    %v783 = vrsqrt.pop %v655
    %v784 = vmul.f32 %v783, %v655
    %v785 = vmul.f32 %v784, %v783
    %v786 = vmul.f32 0.5, %v785
    %v787 = vsub.f32 1.5, %v786
    %v788 = vmul.f32 %v783, %v787
    %v789 = vmul.f32 %v655, %v788
    %vm790 = vcmp.eq.f32.partialorder %v655, inf
    %v791 = vsel %vm790, %v655, %v789
    %vm792 = vcmp.eq.f32.partialorder %v655, 0.0
    %v793 = vand.u32 %v655, 2147483648
    %v794 = vsel %vm792, %v793, %v791
    %v795 = vrsqrt.pop %v656
    %v796 = vmul.f32 %v795, %v656
    %v797 = vmul.f32 %v796, %v795
    %v798 = vmul.f32 0.5, %v797
    %v799 = vsub.f32 1.5, %v798
    %v800 = vmul.f32 %v795, %v799
    %v801 = vmul.f32 %v656, %v800
    %vm802 = vcmp.eq.f32.partialorder %v656, inf
    %v803 = vsel %vm802, %v656, %v801
    %vm804 = vcmp.eq.f32.partialorder %v656, 0.0
    %v805 = vand.u32 %v656, 2147483648
    %v806 = vsel %vm804, %v805, %v803
    %v807 = vrsqrt.pop %v657
    %v808 = vmul.f32 %v807, %v657
    %v809 = vmul.f32 %v808, %v807
    %v810 = vmul.f32 0.5, %v809
    %v811 = vsub.f32 1.5, %v810
    %v812 = vmul.f32 %v807, %v811
    %v813 = vmul.f32 %v657, %v812
    %vm814 = vcmp.eq.f32.partialorder %v657, inf
    %v815 = vsel %vm814, %v657, %v813
    %vm816 = vcmp.eq.f32.partialorder %v657, 0.0
    %v817 = vand.u32 %v657, 2147483648
    %v818 = vsel %vm816, %v817, %v815
    %v819 = vrsqrt.pop %v658
    %v820 = vmul.f32 %v819, %v658
    %v821 = vmul.f32 %v820, %v819
    %v822 = vmul.f32 0.5, %v821
    %v823 = vsub.f32 1.5, %v822
    %v824 = vmul.f32 %v819, %v823
    %v825 = vmul.f32 %v658, %v824
    %vm826 = vcmp.eq.f32.partialorder %v658, inf
    %v827 = vsel %vm826, %v658, %v825
    %vm828 = vcmp.eq.f32.partialorder %v658, 0.0
    %v829 = vand.u32 %v658, 2147483648
    %v830 = vsel %vm828, %v829, %v827
    %v831 = vrsqrt.pop %v659
    %v832 = vmul.f32 %v831, %v659
    %v833 = vmul.f32 %v832, %v831
    %v834 = vmul.f32 0.5, %v833
    %v835 = vsub.f32 1.5, %v834
    %v836 = vmul.f32 %v831, %v835
    %v837 = vmul.f32 %v659, %v836
    %vm838 = vcmp.eq.f32.partialorder %v659, inf
    %v839 = vsel %vm838, %v659, %v837
    %vm840 = vcmp.eq.f32.partialorder %v659, 0.0
    %v841 = vand.u32 %v659, 2147483648
    %v842 = vsel %vm840, %v841, %v839
    %v843 = vrsqrt.pop %v660
    %v844 = vmul.f32 %v843, %v660
    %v845 = vmul.f32 %v844, %v843
    %v846 = vmul.f32 0.5, %v845
    %v847 = vsub.f32 1.5, %v846
    %v848 = vmul.f32 %v843, %v847
    %v849 = vmul.f32 %v660, %v848
    %vm850 = vcmp.eq.f32.partialorder %v660, inf
    %v851 = vsel %vm850, %v660, %v849
    %vm852 = vcmp.eq.f32.partialorder %v660, 0.0
    %v853 = vand.u32 %v660, 2147483648
    %v854 = vsel %vm852, %v853, %v851
    %v855 = vrsqrt.pop %v661
    %v856 = vmul.f32 %v855, %v661
    %v857 = vmul.f32 %v856, %v855
    %v858 = vmul.f32 0.5, %v857
    %v859 = vsub.f32 1.5, %v858
    %v860 = vmul.f32 %v855, %v859
    %v861 = vmul.f32 %v661, %v860
    %vm862 = vcmp.eq.f32.partialorder %v661, inf
    %v863 = vsel %vm862, %v661, %v861
    %vm864 = vcmp.eq.f32.partialorder %v661, 0.0
    %v865 = vand.u32 %v661, 2147483648
    %v866 = vsel %vm864, %v865, %v863
    %v867 = vrsqrt.pop %v662
    %v868 = vmul.f32 %v867, %v662
    %v869 = vmul.f32 %v868, %v867
    %v870 = vmul.f32 0.5, %v869
    %v871 = vsub.f32 1.5, %v870
    %v872 = vmul.f32 %v867, %v871
    %v873 = vmul.f32 %v662, %v872
    %vm874 = vcmp.eq.f32.partialorder %v662, inf
    %v875 = vsel %vm874, %v662, %v873
    %vm876 = vcmp.eq.f32.partialorder %v662, 0.0
    %v877 = vand.u32 %v662, 2147483648
    %v878 = vsel %vm876, %v877, %v875
    %v879 = vrsqrt.pop %v663
    %v880 = vmul.f32 %v879, %v663
    %v881 = vmul.f32 %v880, %v879
    %v882 = vmul.f32 0.5, %v881
    %v883 = vsub.f32 1.5, %v882
    %v884 = vmul.f32 %v879, %v883
    %v885 = vmul.f32 %v663, %v884
    %vm886 = vcmp.eq.f32.partialorder %v663, inf
    %v887 = vsel %vm886, %v663, %v885
    %vm888 = vcmp.eq.f32.partialorder %v663, 0.0
    %v889 = vand.u32 %v663, 2147483648
    %v890 = vsel %vm888, %v889, %v887
    %v891 = vrsqrt.pop %v664
    %v892 = vmul.f32 %v891, %v664
    %v893 = vmul.f32 %v892, %v891
    %v894 = vmul.f32 0.5, %v893
    %v895 = vsub.f32 1.5, %v894
    %v896 = vmul.f32 %v891, %v895
    %v897 = vmul.f32 %v664, %v896
    %vm898 = vcmp.eq.f32.partialorder %v664, inf
    %v899 = vsel %vm898, %v664, %v897
    %vm900 = vcmp.eq.f32.partialorder %v664, 0.0
    %v901 = vand.u32 %v664, 2147483648
    %v902 = vsel %vm900, %v901, %v899
    %v903 = vrsqrt.pop %v665
    %v904 = vmul.f32 %v903, %v665
    %v905 = vmul.f32 %v904, %v903
    %v906 = vmul.f32 0.5, %v905
    %v907 = vsub.f32 1.5, %v906
    %v908 = vmul.f32 %v903, %v907
    %v909 = vmul.f32 %v665, %v908
    %vm910 = vcmp.eq.f32.partialorder %v665, inf
    %v911 = vsel %vm910, %v665, %v909
    %vm912 = vcmp.eq.f32.partialorder %v665, 0.0
    %v913 = vand.u32 %v665, 2147483648
    %v914 = vsel %vm912, %v913, %v911
    %v915 = vrsqrt.pop %v666
    %v916 = vmul.f32 %v915, %v666
    %v917 = vmul.f32 %v916, %v915
    %v918 = vmul.f32 0.5, %v917
    %v919 = vsub.f32 1.5, %v918
    %v920 = vmul.f32 %v915, %v919
    %v921 = vmul.f32 %v666, %v920
    %vm922 = vcmp.eq.f32.partialorder %v666, inf
    %v923 = vsel %vm922, %v666, %v921
    %vm924 = vcmp.eq.f32.partialorder %v666, 0.0
    %v925 = vand.u32 %v666, 2147483648
    %v926 = vsel %vm924, %v925, %v923
    %v927 = vrsqrt.pop %v667
    %v928 = vmul.f32 %v927, %v667
    %v929 = vmul.f32 %v928, %v927
    %v930 = vmul.f32 0.5, %v929
    %v931 = vsub.f32 1.5, %v930
    %v932 = vmul.f32 %v927, %v931
    %v933 = vmul.f32 %v667, %v932
    %vm934 = vcmp.eq.f32.partialorder %v667, inf
    %v935 = vsel %vm934, %v667, %v933
    %vm936 = vcmp.eq.f32.partialorder %v667, 0.0
    %v937 = vand.u32 %v667, 2147483648
    %v938 = vsel %vm936, %v937, %v935
    %v939 = vrsqrt.pop %v668
    %v940 = vmul.f32 %v939, %v668
    %v941 = vmul.f32 %v940, %v939
    %v942 = vmul.f32 0.5, %v941
    %v943 = vsub.f32 1.5, %v942
    %v944 = vmul.f32 %v939, %v943
    %v945 = vmul.f32 %v668, %v944
    %vm946 = vcmp.eq.f32.partialorder %v668, inf
    %v947 = vsel %vm946, %v668, %v945
    %vm948 = vcmp.eq.f32.partialorder %v668, 0.0
    %v949 = vand.u32 %v668, 2147483648
    %v950 = vsel %vm948, %v949, %v947
    %v951 = vrsqrt.pop %v669
    %v952 = vmul.f32 %v951, %v669
    %v953 = vmul.f32 %v952, %v951
    %v954 = vmul.f32 0.5, %v953
    %v955 = vsub.f32 1.5, %v954
    %v956 = vmul.f32 %v951, %v955
    %v957 = vmul.f32 %v669, %v956
    %vm958 = vcmp.eq.f32.partialorder %v669, inf
    %v959 = vsel %vm958, %v669, %v957
    %vm960 = vcmp.eq.f32.partialorder %v669, 0.0
    %v961 = vand.u32 %v669, 2147483648
    %v962 = vsel %vm960, %v961, %v959
    %v963 = vrsqrt.pop %v670
    %v964 = vmul.f32 %v963, %v670
    %v965 = vmul.f32 %v964, %v963
    %v966 = vmul.f32 0.5, %v965
    %v967 = vsub.f32 1.5, %v966
    %v968 = vmul.f32 %v963, %v967
    %v969 = vmul.f32 %v670, %v968
    %vm970 = vcmp.eq.f32.partialorder %v670, inf
    %v971 = vsel %vm970, %v670, %v969
    %vm972 = vcmp.eq.f32.partialorder %v670, 0.0
    %v973 = vand.u32 %v670, 2147483648
    %v974 = vsel %vm972, %v973, %v971
    %v975 = vrsqrt.pop %v671
    %v976 = vmul.f32 %v975, %v671
    %v977 = vmul.f32 %v976, %v975
    %v978 = vmul.f32 0.5, %v977
    %v979 = vsub.f32 1.5, %v978
    %v980 = vmul.f32 %v975, %v979
    %v981 = vmul.f32 %v671, %v980
    %vm982 = vcmp.eq.f32.partialorder %v671, inf
    %v983 = vsel %vm982, %v671, %v981
    %vm984 = vcmp.eq.f32.partialorder %v671, 0.0
    %v985 = vand.u32 %v671, 2147483648
    %v986 = vsel %vm984, %v985, %v983
    %v987 = vrsqrt.pop %v672
    %v988 = vmul.f32 %v987, %v672
    %v989 = vmul.f32 %v988, %v987
    %v990 = vmul.f32 0.5, %v989
    %v991 = vsub.f32 1.5, %v990
    %v992 = vmul.f32 %v987, %v991
    %v993 = vmul.f32 %v672, %v992
    %vm994 = vcmp.eq.f32.partialorder %v672, inf
    %v995 = vsel %vm994, %v672, %v993
    %vm996 = vcmp.eq.f32.partialorder %v672, 0.0
    %v997 = vand.u32 %v672, 2147483648
    %v998 = vsel %vm996, %v997, %v995
    %v999 = vrsqrt.pop %v673
    %v1000 = vmul.f32 %v999, %v673
    %v1001 = vmul.f32 %v1000, %v999
    %v1002 = vmul.f32 0.5, %v1001
    %v1003 = vsub.f32 1.5, %v1002
    %v1004 = vmul.f32 %v999, %v1003
    %v1005 = vmul.f32 %v673, %v1004
    %vm1006 = vcmp.eq.f32.partialorder %v673, inf
    %v1007 = vsel %vm1006, %v673, %v1005
    %vm1008 = vcmp.eq.f32.partialorder %v673, 0.0
    %v1009 = vand.u32 %v673, 2147483648
    %v1010 = vsel %vm1008, %v1009, %v1007
    %v1011 = vrsqrt.pop %v674
    %v1012 = vmul.f32 %v1011, %v674
    %v1013 = vmul.f32 %v1012, %v1011
    %v1014 = vmul.f32 0.5, %v1013
    %v1015 = vsub.f32 1.5, %v1014
    %v1016 = vmul.f32 %v1011, %v1015
    %v1017 = vmul.f32 %v674, %v1016
    %vm1018 = vcmp.eq.f32.partialorder %v674, inf
    %v1019 = vsel %vm1018, %v674, %v1017
    %vm1020 = vcmp.eq.f32.partialorder %v674, 0.0
    %v1021 = vand.u32 %v674, 2147483648
    %v1022 = vsel %vm1020, %v1021, %v1019
    %v1023 = vrsqrt.pop %v675
    %v1024 = vmul.f32 %v1023, %v675
    %v1025 = vmul.f32 %v1024, %v1023
    %v1026 = vmul.f32 0.5, %v1025
    %v1027 = vsub.f32 1.5, %v1026
    %v1028 = vmul.f32 %v1023, %v1027
    %v1029 = vmul.f32 %v675, %v1028
    %vm1030 = vcmp.eq.f32.partialorder %v675, inf
    %v1031 = vsel %vm1030, %v675, %v1029
    %vm1032 = vcmp.eq.f32.partialorder %v675, 0.0
    %v1033 = vand.u32 %v675, 2147483648
    %v1034 = vsel %vm1032, %v1033, %v1031
    %v1035 = vrsqrt.pop %v676
    %v1036 = vmul.f32 %v1035, %v676
    %v1037 = vmul.f32 %v1036, %v1035
    %v1038 = vmul.f32 0.5, %v1037
    %v1039 = vsub.f32 1.5, %v1038
    %v1040 = vmul.f32 %v1035, %v1039
    %v1041 = vmul.f32 %v676, %v1040
    %vm1042 = vcmp.eq.f32.partialorder %v676, inf
    %v1043 = vsel %vm1042, %v676, %v1041
    %vm1044 = vcmp.eq.f32.partialorder %v676, 0.0
    %v1045 = vand.u32 %v676, 2147483648
    %v1046 = vsel %vm1044, %v1045, %v1043
    %v1047 = vrsqrt.pop %v677
    %v1048 = vmul.f32 %v1047, %v677
    %v1049 = vmul.f32 %v1048, %v1047
    %v1050 = vmul.f32 0.5, %v1049
    %v1051 = vsub.f32 1.5, %v1050
    %v1052 = vmul.f32 %v1047, %v1051
    %v1053 = vmul.f32 %v677, %v1052
    %vm1054 = vcmp.eq.f32.partialorder %v677, inf
    %v1055 = vsel %vm1054, %v677, %v1053
    %vm1056 = vcmp.eq.f32.partialorder %v677, 0.0
    %v1057 = vand.u32 %v677, 2147483648
    %v1058 = vsel %vm1056, %v1057, %v1055
    %v1059 = vrsqrt.pop %v678
    %v1060 = vmul.f32 %v1059, %v678
    %v1061 = vmul.f32 %v1060, %v1059
    %v1062 = vmul.f32 0.5, %v1061
    %v1063 = vsub.f32 1.5, %v1062
    %v1064 = vmul.f32 %v1059, %v1063
    %v1065 = vmul.f32 %v678, %v1064
    %vm1066 = vcmp.eq.f32.partialorder %v678, inf
    %v1067 = vsel %vm1066, %v678, %v1065
    %vm1068 = vcmp.eq.f32.partialorder %v678, 0.0
    %v1069 = vand.u32 %v678, 2147483648
    %v1070 = vsel %vm1068, %v1069, %v1067
    %v1071 = vrsqrt.pop %v679
    %v1072 = vmul.f32 %v1071, %v679
    %v1073 = vmul.f32 %v1072, %v1071
    %v1074 = vmul.f32 0.5, %v1073
    %v1075 = vsub.f32 1.5, %v1074
    %v1076 = vmul.f32 %v1071, %v1075
    %v1077 = vmul.f32 %v679, %v1076
    %vm1078 = vcmp.eq.f32.partialorder %v679, inf
    %v1079 = vsel %vm1078, %v679, %v1077
    %vm1080 = vcmp.eq.f32.partialorder %v679, 0.0
    %v1081 = vand.u32 %v679, 2147483648
    %v1082 = vsel %vm1080, %v1081, %v1079
    %v1083 = vrsqrt.pop %v680
    %v1084 = vmul.f32 %v1083, %v680
    %v1085 = vmul.f32 %v1084, %v1083
    %v1086 = vmul.f32 0.5, %v1085
    %v1087 = vsub.f32 1.5, %v1086
    %v1088 = vmul.f32 %v1083, %v1087
    %v1089 = vmul.f32 %v680, %v1088
    %vm1090 = vcmp.eq.f32.partialorder %v680, inf
    %v1091 = vsel %vm1090, %v680, %v1089
    %vm1092 = vcmp.eq.f32.partialorder %v680, 0.0
    %v1093 = vand.u32 %v680, 2147483648
    %v1094 = vsel %vm1092, %v1093, %v1091
    %v1095 = vrsqrt.pop %v681
    %v1096 = vmul.f32 %v1095, %v681
    %v1097 = vmul.f32 %v1096, %v1095
    %v1098 = vmul.f32 0.5, %v1097
    %v1099 = vsub.f32 1.5, %v1098
    %v1100 = vmul.f32 %v1095, %v1099
    %v1101 = vmul.f32 %v681, %v1100
    %vm1102 = vcmp.eq.f32.partialorder %v681, inf
    %v1103 = vsel %vm1102, %v681, %v1101
    %vm1104 = vcmp.eq.f32.partialorder %v681, 0.0
    %v1105 = vand.u32 %v681, 2147483648
    %v1106 = vsel %vm1104, %v1105, %v1103
    %v1107 = vrsqrt.pop %v682
    %v1108 = vmul.f32 %v1107, %v682
    %v1109 = vmul.f32 %v1108, %v1107
    %v1110 = vmul.f32 0.5, %v1109
    %v1111 = vsub.f32 1.5, %v1110
    %v1112 = vmul.f32 %v1107, %v1111
    %v1113 = vmul.f32 %v682, %v1112
    %vm1114 = vcmp.eq.f32.partialorder %v682, inf
    %v1115 = vsel %vm1114, %v682, %v1113
    %vm1116 = vcmp.eq.f32.partialorder %v682, 0.0
    %v1117 = vand.u32 %v682, 2147483648
    %v1118 = vsel %vm1116, %v1117, %v1115
    %v1119 = vrsqrt.pop %v683
    %v1120 = vmul.f32 %v1119, %v683
    %v1121 = vmul.f32 %v1120, %v1119
    %v1122 = vmul.f32 0.5, %v1121
    %v1123 = vsub.f32 1.5, %v1122
    %v1124 = vmul.f32 %v1119, %v1123
    %v1125 = vmul.f32 %v683, %v1124
    %vm1126 = vcmp.eq.f32.partialorder %v683, inf
    %v1127 = vsel %vm1126, %v683, %v1125
    %vm1128 = vcmp.eq.f32.partialorder %v683, 0.0
    %v1129 = vand.u32 %v683, 2147483648
    %v1130 = vsel %vm1128, %v1129, %v1127
    %v1131 = vrsqrt.pop %v684
    %v1132 = vmul.f32 %v1131, %v684
    %v1133 = vmul.f32 %v1132, %v1131
    %v1134 = vmul.f32 0.5, %v1133
    %v1135 = vsub.f32 1.5, %v1134
    %v1136 = vmul.f32 %v1131, %v1135
    %v1137 = vmul.f32 %v684, %v1136
    %vm1138 = vcmp.eq.f32.partialorder %v684, inf
    %v1139 = vsel %vm1138, %v684, %v1137
    %vm1140 = vcmp.eq.f32.partialorder %v684, 0.0
    %v1141 = vand.u32 %v684, 2147483648
    %v1142 = vsel %vm1140, %v1141, %v1139
    %v1143 = vrsqrt.pop %v685
    %v1144 = vmul.f32 %v1143, %v685
    %v1145 = vmul.f32 %v1144, %v1143
    %v1146 = vmul.f32 0.5, %v1145
    %v1147 = vsub.f32 1.5, %v1146
    %v1148 = vmul.f32 %v1143, %v1147
    %v1149 = vmul.f32 %v685, %v1148
    %vm1150 = vcmp.eq.f32.partialorder %v685, inf
    %v1151 = vsel %vm1150, %v685, %v1149
    %vm1152 = vcmp.eq.f32.partialorder %v685, 0.0
    %v1153 = vand.u32 %v685, 2147483648
    %v1154 = vsel %vm1152, %v1153, %v1151
    %v1155 = vrsqrt.pop %v686
    %v1156 = vmul.f32 %v1155, %v686
    %v1157 = vmul.f32 %v1156, %v1155
    %v1158 = vmul.f32 0.5, %v1157
    %v1159 = vsub.f32 1.5, %v1158
    %v1160 = vmul.f32 %v1155, %v1159
    %v1161 = vmul.f32 %v686, %v1160
    %vm1162 = vcmp.eq.f32.partialorder %v686, inf
    %v1163 = vsel %vm1162, %v686, %v1161
    %vm1164 = vcmp.eq.f32.partialorder %v686, 0.0
    %v1165 = vand.u32 %v686, 2147483648
    %v1166 = vsel %vm1164, %v1165, %v1163
    %v1167 = vrsqrt.pop %v687
    %v1168 = vmul.f32 %v1167, %v687
    %v1169 = vmul.f32 %v1168, %v1167
    %v1170 = vmul.f32 0.5, %v1169
    %v1171 = vsub.f32 1.5, %v1170
    %v1172 = vmul.f32 %v1167, %v1171
    %v1173 = vmul.f32 %v687, %v1172
    %vm1174 = vcmp.eq.f32.partialorder %v687, inf
    %v1175 = vsel %vm1174, %v687, %v1173
    %vm1176 = vcmp.eq.f32.partialorder %v687, 0.0
    %v1177 = vand.u32 %v687, 2147483648
    %v1178 = vsel %vm1176, %v1177, %v1175
    %v1179 = vrsqrt.pop %v688
    %v1180 = vmul.f32 %v1179, %v688
    %v1181 = vmul.f32 %v1180, %v1179
    %v1182 = vmul.f32 0.5, %v1181
    %v1183 = vsub.f32 1.5, %v1182
    %v1184 = vmul.f32 %v1179, %v1183
    %v1185 = vmul.f32 %v688, %v1184
    %vm1186 = vcmp.eq.f32.partialorder %v688, inf
    %v1187 = vsel %vm1186, %v688, %v1185
    %vm1188 = vcmp.eq.f32.partialorder %v688, 0.0
    %v1189 = vand.u32 %v688, 2147483648
    %v1190 = vsel %vm1188, %v1189, %v1187
    %v1191 = vrsqrt.pop %v689
    %v1192 = vmul.f32 %v1191, %v689
    %v1193 = vmul.f32 %v1192, %v1191
    %v1194 = vmul.f32 0.5, %v1193
    %v1195 = vsub.f32 1.5, %v1194
    %v1196 = vmul.f32 %v1191, %v1195
    %v1197 = vmul.f32 %v689, %v1196
    %vm1198 = vcmp.eq.f32.partialorder %v689, inf
    %v1199 = vsel %vm1198, %v689, %v1197
    %vm1200 = vcmp.eq.f32.partialorder %v689, 0.0
    %v1201 = vand.u32 %v689, 2147483648
    %v1202 = vsel %vm1200, %v1201, %v1199
    %v1203 = vrsqrt.pop %v690
    %v1204 = vmul.f32 %v1203, %v690
    %v1205 = vmul.f32 %v1204, %v1203
    %v1206 = vmul.f32 0.5, %v1205
    %v1207 = vsub.f32 1.5, %v1206
    %v1208 = vmul.f32 %v1203, %v1207
    %v1209 = vmul.f32 %v690, %v1208
    %vm1210 = vcmp.eq.f32.partialorder %v690, inf
    %v1211 = vsel %vm1210, %v690, %v1209
    %vm1212 = vcmp.eq.f32.partialorder %v690, 0.0
    %v1213 = vand.u32 %v690, 2147483648
    %v1214 = vsel %vm1212, %v1213, %v1211
    %v1215 = vrsqrt.pop %v691
    %v1216 = vmul.f32 %v1215, %v691
    %v1217 = vmul.f32 %v1216, %v1215
    %v1218 = vmul.f32 0.5, %v1217
    %v1219 = vsub.f32 1.5, %v1218
    %v1220 = vmul.f32 %v1215, %v1219
    %v1221 = vmul.f32 %v691, %v1220
    %vm1222 = vcmp.eq.f32.partialorder %v691, inf
    %v1223 = vsel %vm1222, %v691, %v1221
    %vm1224 = vcmp.eq.f32.partialorder %v691, 0.0
    %v1225 = vand.u32 %v691, 2147483648
    %v1226 = vsel %vm1224, %v1225, %v1223
    %v1227 = vrsqrt.pop %v692
    %v1228 = vmul.f32 %v1227, %v692
    %v1229 = vmul.f32 %v1228, %v1227
    %v1230 = vmul.f32 0.5, %v1229
    %v1231 = vsub.f32 1.5, %v1230
    %v1232 = vmul.f32 %v1227, %v1231
    %v1233 = vmul.f32 %v692, %v1232
    %vm1234 = vcmp.eq.f32.partialorder %v692, inf
    %v1235 = vsel %vm1234, %v692, %v1233
    %vm1236 = vcmp.eq.f32.partialorder %v692, 0.0
    %v1237 = vand.u32 %v692, 2147483648
    %v1238 = vsel %vm1236, %v1237, %v1235
    %v1239 = vrsqrt.pop %v693
    %v1240 = vmul.f32 %v1239, %v693
    %v1241 = vmul.f32 %v1240, %v1239
    %v1242 = vmul.f32 0.5, %v1241
    %v1243 = vsub.f32 1.5, %v1242
    %v1244 = vmul.f32 %v1239, %v1243
    %v1245 = vmul.f32 %v693, %v1244
    %vm1246 = vcmp.eq.f32.partialorder %v693, inf
    %v1247 = vsel %vm1246, %v693, %v1245
    %vm1248 = vcmp.eq.f32.partialorder %v693, 0.0
    %v1249 = vand.u32 %v693, 2147483648
    %v1250 = vsel %vm1248, %v1249, %v1247
    %v1251 = vrsqrt.pop %v694
    %v1252 = vmul.f32 %v1251, %v694
    %v1253 = vmul.f32 %v1252, %v1251
    %v1254 = vmul.f32 0.5, %v1253
    %v1255 = vsub.f32 1.5, %v1254
    %v1256 = vmul.f32 %v1251, %v1255
    %v1257 = vmul.f32 %v694, %v1256
    %vm1258 = vcmp.eq.f32.partialorder %v694, inf
    %v1259 = vsel %vm1258, %v694, %v1257
    %vm1260 = vcmp.eq.f32.partialorder %v694, 0.0
    %v1261 = vand.u32 %v694, 2147483648
    %v1262 = vsel %vm1260, %v1261, %v1259
    %v1263 = vrsqrt.pop %v695
    %v1264 = vmul.f32 %v1263, %v695
    %v1265 = vmul.f32 %v1264, %v1263
    %v1266 = vmul.f32 0.5, %v1265
    %v1267 = vsub.f32 1.5, %v1266
    %v1268 = vmul.f32 %v1263, %v1267
    %v1269 = vmul.f32 %v695, %v1268
    %vm1270 = vcmp.eq.f32.partialorder %v695, inf
    %v1271 = vsel %vm1270, %v695, %v1269
    %vm1272 = vcmp.eq.f32.partialorder %v695, 0.0
    %v1273 = vand.u32 %v695, 2147483648
    %v1274 = vsel %vm1272, %v1273, %v1271
    %v1275 = vrsqrt.pop %v696
    %v1276 = vmul.f32 %v1275, %v696
    %v1277 = vmul.f32 %v1276, %v1275
    %v1278 = vmul.f32 0.5, %v1277
    %v1279 = vsub.f32 1.5, %v1278
    %v1280 = vmul.f32 %v1275, %v1279
    %v1281 = vmul.f32 %v696, %v1280
    %vm1282 = vcmp.eq.f32.partialorder %v696, inf
    %v1283 = vsel %vm1282, %v696, %v1281
    %vm1284 = vcmp.eq.f32.partialorder %v696, 0.0
    %v1285 = vand.u32 %v696, 2147483648
    %v1286 = vsel %vm1284, %v1285, %v1283
    %v1287 = vrsqrt.pop %v697
    %v1288 = vmul.f32 %v1287, %v697
    %v1289 = vmul.f32 %v1288, %v1287
    %v1290 = vmul.f32 0.5, %v1289
    %v1291 = vsub.f32 1.5, %v1290
    %v1292 = vmul.f32 %v1287, %v1291
    %v1293 = vmul.f32 %v697, %v1292
    %vm1294 = vcmp.eq.f32.partialorder %v697, inf
    %v1295 = vsel %vm1294, %v697, %v1293
    %vm1296 = vcmp.eq.f32.partialorder %v697, 0.0
    %v1297 = vand.u32 %v697, 2147483648
    %v1298 = vsel %vm1296, %v1297, %v1295
    %v1299 = vrsqrt.pop %v698
    %v1300 = vmul.f32 %v1299, %v698
    %v1301 = vmul.f32 %v1300, %v1299
    %v1302 = vmul.f32 0.5, %v1301
    %v1303 = vsub.f32 1.5, %v1302
    %v1304 = vmul.f32 %v1299, %v1303
    %v1305 = vmul.f32 %v698, %v1304
    %vm1306 = vcmp.eq.f32.partialorder %v698, inf
    %v1307 = vsel %vm1306, %v698, %v1305
    %vm1308 = vcmp.eq.f32.partialorder %v698, 0.0
    %v1309 = vand.u32 %v698, 2147483648
    %v1310 = vsel %vm1308, %v1309, %v1307
    %v1311 = vrsqrt.pop %v699
    %v1312 = vmul.f32 %v1311, %v699
    %v1313 = vmul.f32 %v1312, %v1311
    %v1314 = vmul.f32 0.5, %v1313
    %v1315 = vsub.f32 1.5, %v1314
    %v1316 = vmul.f32 %v1311, %v1315
    %v1317 = vmul.f32 %v699, %v1316
    %vm1318 = vcmp.eq.f32.partialorder %v699, inf
    %v1319 = vsel %vm1318, %v699, %v1317
    %vm1320 = vcmp.eq.f32.partialorder %v699, 0.0
    %v1321 = vand.u32 %v699, 2147483648
    %v1322 = vsel %vm1320, %v1321, %v1319
    %v1323 = vrsqrt.pop %v700
    %v1324 = vmul.f32 %v1323, %v700
    %v1325 = vmul.f32 %v1324, %v1323
    %v1326 = vmul.f32 0.5, %v1325
    %v1327 = vsub.f32 1.5, %v1326
    %v1328 = vmul.f32 %v1323, %v1327
    %v1329 = vmul.f32 %v700, %v1328
    %vm1330 = vcmp.eq.f32.partialorder %v700, inf
    %v1331 = vsel %vm1330, %v700, %v1329
    %vm1332 = vcmp.eq.f32.partialorder %v700, 0.0
    %v1333 = vand.u32 %v700, 2147483648
    %v1334 = vsel %vm1332, %v1333, %v1331
    %v1335 = vrsqrt.pop %v701
    %v1336 = vmul.f32 %v1335, %v701
    %v1337 = vmul.f32 %v1336, %v1335
    %v1338 = vmul.f32 0.5, %v1337
    %v1339 = vsub.f32 1.5, %v1338
    %v1340 = vmul.f32 %v1335, %v1339
    %v1341 = vmul.f32 %v701, %v1340
    %vm1342 = vcmp.eq.f32.partialorder %v701, inf
    %v1343 = vsel %vm1342, %v701, %v1341
    %vm1344 = vcmp.eq.f32.partialorder %v701, 0.0
    %v1345 = vand.u32 %v701, 2147483648
    %v1346 = vsel %vm1344, %v1345, %v1343
    %v1347 = vrsqrt.pop %v702
    %v1348 = vmul.f32 %v1347, %v702
    %v1349 = vmul.f32 %v1348, %v1347
    %v1350 = vmul.f32 0.5, %v1349
    %v1351 = vsub.f32 1.5, %v1350
    %v1352 = vmul.f32 %v1347, %v1351
    %v1353 = vmul.f32 %v702, %v1352
    %vm1354 = vcmp.eq.f32.partialorder %v702, inf
    %v1355 = vsel %vm1354, %v702, %v1353
    %vm1356 = vcmp.eq.f32.partialorder %v702, 0.0
    %v1357 = vand.u32 %v702, 2147483648
    %v1358 = vsel %vm1356, %v1357, %v1355
    %v1359 = vrsqrt.pop %v703
    %v1360 = vmul.f32 %v1359, %v703
    %v1361 = vmul.f32 %v1360, %v1359
    %v1362 = vmul.f32 0.5, %v1361
    %v1363 = vsub.f32 1.5, %v1362
    %v1364 = vmul.f32 %v1359, %v1363
    %v1365 = vmul.f32 %v703, %v1364
    %vm1366 = vcmp.eq.f32.partialorder %v703, inf
    %v1367 = vsel %vm1366, %v703, %v1365
    %vm1368 = vcmp.eq.f32.partialorder %v703, 0.0
    %v1369 = vand.u32 %v703, 2147483648
    %v1370 = vsel %vm1368, %v1369, %v1367
    %v1371 = vrsqrt.pop %v704
    %v1372 = vmul.f32 %v1371, %v704
    %v1373 = vmul.f32 %v1372, %v1371
    %v1374 = vmul.f32 0.5, %v1373
    %v1375 = vsub.f32 1.5, %v1374
    %v1376 = vmul.f32 %v1371, %v1375
    %v1377 = vmul.f32 %v704, %v1376
    %vm1378 = vcmp.eq.f32.partialorder %v704, inf
    %v1379 = vsel %vm1378, %v704, %v1377
    %vm1380 = vcmp.eq.f32.partialorder %v704, 0.0
    %v1381 = vand.u32 %v704, 2147483648
    %v1382 = vsel %vm1380, %v1381, %v1379
    %v1383 = vrsqrt.pop %v705
    %v1384 = vmul.f32 %v1383, %v705
    %v1385 = vmul.f32 %v1384, %v1383
    %v1386 = vmul.f32 0.5, %v1385
    %v1387 = vsub.f32 1.5, %v1386
    %v1388 = vmul.f32 %v1383, %v1387
    %v1389 = vmul.f32 %v705, %v1388
    %vm1390 = vcmp.eq.f32.partialorder %v705, inf
    %v1391 = vsel %vm1390, %v705, %v1389
    %vm1392 = vcmp.eq.f32.partialorder %v705, 0.0
    %v1393 = vand.u32 %v705, 2147483648
    %v1394 = vsel %vm1392, %v1393, %v1391
    %v1395 = vrsqrt.pop %v706
    %v1396 = vmul.f32 %v1395, %v706
    %v1397 = vmul.f32 %v1396, %v1395
    %v1398 = vmul.f32 0.5, %v1397
    %v1399 = vsub.f32 1.5, %v1398
    %v1400 = vmul.f32 %v1395, %v1399
    %v1401 = vmul.f32 %v706, %v1400
    %vm1402 = vcmp.eq.f32.partialorder %v706, inf
    %v1403 = vsel %vm1402, %v706, %v1401
    %vm1404 = vcmp.eq.f32.partialorder %v706, 0.0
    %v1405 = vand.u32 %v706, 2147483648
    %v1406 = vsel %vm1404, %v1405, %v1403
    %v1407 = vrsqrt.pop %v707
    %v1408 = vmul.f32 %v1407, %v707
    %v1409 = vmul.f32 %v1408, %v1407
    %v1410 = vmul.f32 0.5, %v1409
    %v1411 = vsub.f32 1.5, %v1410
    %v1412 = vmul.f32 %v1407, %v1411
    %v1413 = vmul.f32 %v707, %v1412
    %vm1414 = vcmp.eq.f32.partialorder %v707, inf
    %v1415 = vsel %vm1414, %v707, %v1413
    %vm1416 = vcmp.eq.f32.partialorder %v707, 0.0
    %v1417 = vand.u32 %v707, 2147483648
    %v1418 = vsel %vm1416, %v1417, %v1415
    %v1419 = vrsqrt.pop %v708
    %v1420 = vmul.f32 %v1419, %v708
    %v1421 = vmul.f32 %v1420, %v1419
    %v1422 = vmul.f32 0.5, %v1421
    %v1423 = vsub.f32 1.5, %v1422
    %v1424 = vmul.f32 %v1419, %v1423
    %v1425 = vmul.f32 %v708, %v1424
    %vm1426 = vcmp.eq.f32.partialorder %v708, inf
    %v1427 = vsel %vm1426, %v708, %v1425
    %vm1428 = vcmp.eq.f32.partialorder %v708, 0.0
    %v1429 = vand.u32 %v708, 2147483648
    %v1430 = vsel %vm1428, %v1429, %v1427
    %v1431 = vrsqrt.pop %v709
    %v1432 = vmul.f32 %v1431, %v709
    %v1433 = vmul.f32 %v1432, %v1431
    %v1434 = vmul.f32 0.5, %v1433
    %v1435 = vsub.f32 1.5, %v1434
    %v1436 = vmul.f32 %v1431, %v1435
    %v1437 = vmul.f32 %v709, %v1436
    %vm1438 = vcmp.eq.f32.partialorder %v709, inf
    %v1439 = vsel %vm1438, %v709, %v1437
    %vm1440 = vcmp.eq.f32.partialorder %v709, 0.0
    %v1441 = vand.u32 %v709, 2147483648
    %v1442 = vsel %vm1440, %v1441, %v1439
    %v1443 = vrsqrt.pop %v710
    %v1444 = vmul.f32 %v1443, %v710
    %v1445 = vmul.f32 %v1444, %v1443
    %v1446 = vmul.f32 0.5, %v1445
    %v1447 = vsub.f32 1.5, %v1446
    %v1448 = vmul.f32 %v1443, %v1447
    %v1449 = vmul.f32 %v710, %v1448
    %vm1450 = vcmp.eq.f32.partialorder %v710, inf
    %v1451 = vsel %vm1450, %v710, %v1449
    %vm1452 = vcmp.eq.f32.partialorder %v710, 0.0
    %v1453 = vand.u32 %v710, 2147483648
    %v1454 = vsel %vm1452, %v1453, %v1451
    %v1455 = vrsqrt.pop %v711
    %v1456 = vmul.f32 %v1455, %v711
    %v1457 = vmul.f32 %v1456, %v1455
    %v1458 = vmul.f32 0.5, %v1457
    %v1459 = vsub.f32 1.5, %v1458
    %v1460 = vmul.f32 %v1455, %v1459
    %v1461 = vmul.f32 %v711, %v1460
    %vm1462 = vcmp.eq.f32.partialorder %v711, inf
    %v1463 = vsel %vm1462, %v711, %v1461
    %vm1464 = vcmp.eq.f32.partialorder %v711, 0.0
    %v1465 = vand.u32 %v711, 2147483648
    %v1466 = vsel %vm1464, %v1465, %v1463
    %v1467 = vrsqrt.pop %v712
    %v1468 = vmul.f32 %v1467, %v712
    %v1469 = vmul.f32 %v1468, %v1467
    %v1470 = vmul.f32 0.5, %v1469
    %v1471 = vsub.f32 1.5, %v1470
    %v1472 = vmul.f32 %v1467, %v1471
    %v1473 = vmul.f32 %v712, %v1472
    %vm1474 = vcmp.eq.f32.partialorder %v712, inf
    %v1475 = vsel %vm1474, %v712, %v1473
    %vm1476 = vcmp.eq.f32.partialorder %v712, 0.0
    %v1477 = vand.u32 %v712, 2147483648
    %v1478 = vsel %vm1476, %v1477, %v1475
    %v1479 = vrsqrt.pop %v713
    %v1480 = vmul.f32 %v1479, %v713
    %v1481 = vmul.f32 %v1480, %v1479
    %v1482 = vmul.f32 0.5, %v1481
    %v1483 = vsub.f32 1.5, %v1482
    %v1484 = vmul.f32 %v1479, %v1483
    %v1485 = vmul.f32 %v713, %v1484
    %vm1486 = vcmp.eq.f32.partialorder %v713, inf
    %v1487 = vsel %vm1486, %v713, %v1485
    %vm1488 = vcmp.eq.f32.partialorder %v713, 0.0
    %v1489 = vand.u32 %v713, 2147483648
    %v1490 = vsel %vm1488, %v1489, %v1487
    %v1491 = vrsqrt.pop %v714
    %v1492 = vmul.f32 %v1491, %v714
    %v1493 = vmul.f32 %v1492, %v1491
    %v1494 = vmul.f32 0.5, %v1493
    %v1495 = vsub.f32 1.5, %v1494
    %v1496 = vmul.f32 %v1491, %v1495
    %v1497 = vmul.f32 %v714, %v1496
    %vm1498 = vcmp.eq.f32.partialorder %v714, inf
    %v1499 = vsel %vm1498, %v714, %v1497
    %vm1500 = vcmp.eq.f32.partialorder %v714, 0.0
    %v1501 = vand.u32 %v714, 2147483648
    %v1502 = vsel %vm1500, %v1501, %v1499
    %v1503 = vrsqrt.pop %v715
    %v1504 = vmul.f32 %v1503, %v715
    %v1505 = vmul.f32 %v1504, %v1503
    %v1506 = vmul.f32 0.5, %v1505
    %v1507 = vsub.f32 1.5, %v1506
    %v1508 = vmul.f32 %v1503, %v1507
    %v1509 = vmul.f32 %v715, %v1508
    %vm1510 = vcmp.eq.f32.partialorder %v715, inf
    %v1511 = vsel %vm1510, %v715, %v1509
    %vm1512 = vcmp.eq.f32.partialorder %v715, 0.0
    %v1513 = vand.u32 %v715, 2147483648
    %v1514 = vsel %vm1512, %v1513, %v1511
    %v1515 = vrsqrt.pop %v716
    %v1516 = vmul.f32 %v1515, %v716
    %v1517 = vmul.f32 %v1516, %v1515
    %v1518 = vmul.f32 0.5, %v1517
    %v1519 = vsub.f32 1.5, %v1518
    %v1520 = vmul.f32 %v1515, %v1519
    %v1521 = vmul.f32 %v716, %v1520
    %vm1522 = vcmp.eq.f32.partialorder %v716, inf
    %v1523 = vsel %vm1522, %v716, %v1521
    %vm1524 = vcmp.eq.f32.partialorder %v716, 0.0
    %v1525 = vand.u32 %v716, 2147483648
    %v1526 = vsel %vm1524, %v1525, %v1523
    %v1527 = vrsqrt.pop %v717
    %v1528 = vmul.f32 %v1527, %v717
    %v1529 = vmul.f32 %v1528, %v1527
    %v1530 = vmul.f32 0.5, %v1529
    %v1531 = vsub.f32 1.5, %v1530
    %v1532 = vmul.f32 %v1527, %v1531
    %v1533 = vmul.f32 %v717, %v1532
    %vm1534 = vcmp.eq.f32.partialorder %v717, inf
    %v1535 = vsel %vm1534, %v717, %v1533
    %vm1536 = vcmp.eq.f32.partialorder %v717, 0.0
    %v1537 = vand.u32 %v717, 2147483648
    %v1538 = vsel %vm1536, %v1537, %v1535
    %v1539 = vrsqrt.pop %v718
    %v1540 = vmul.f32 %v1539, %v718
    %v1541 = vmul.f32 %v1540, %v1539
    %v1542 = vmul.f32 0.5, %v1541
    %v1543 = vsub.f32 1.5, %v1542
    %v1544 = vmul.f32 %v1539, %v1543
    %v1545 = vmul.f32 %v718, %v1544
    %vm1546 = vcmp.eq.f32.partialorder %v718, inf
    %v1547 = vsel %vm1546, %v718, %v1545
    %vm1548 = vcmp.eq.f32.partialorder %v718, 0.0
    %v1549 = vand.u32 %v718, 2147483648
    %v1550 = vsel %vm1548, %v1549, %v1547
    %v1551 = vrsqrt.pop %v719
    %v1552 = vmul.f32 %v1551, %v719
    %v1553 = vmul.f32 %v1552, %v1551
    %v1554 = vmul.f32 0.5, %v1553
    %v1555 = vsub.f32 1.5, %v1554
    %v1556 = vmul.f32 %v1551, %v1555
    %v1557 = vmul.f32 %v719, %v1556
    %vm1558 = vcmp.eq.f32.partialorder %v719, inf
    %v1559 = vsel %vm1558, %v719, %v1557
    %vm1560 = vcmp.eq.f32.partialorder %v719, 0.0
    %v1561 = vand.u32 %v719, 2147483648
    %v1562 = vsel %vm1560, %v1561, %v1559
    %v1563 = vrsqrt.pop %v720
    %v1564 = vmul.f32 %v1563, %v720
    %v1565 = vmul.f32 %v1564, %v1563
    %v1566 = vmul.f32 0.5, %v1565
    %v1567 = vsub.f32 1.5, %v1566
    %v1568 = vmul.f32 %v1563, %v1567
    %v1569 = vmul.f32 %v720, %v1568
    %vm1570 = vcmp.eq.f32.partialorder %v720, inf
    %v1571 = vsel %vm1570, %v720, %v1569
    %vm1572 = vcmp.eq.f32.partialorder %v720, 0.0
    %v1573 = vand.u32 %v720, 2147483648
    %v1574 = vsel %vm1572, %v1573, %v1571
    %v1575 = vrsqrt.pop %v721
    %v1576 = vmul.f32 %v1575, %v721
    %v1577 = vmul.f32 %v1576, %v1575
    %v1578 = vmul.f32 0.5, %v1577
    %v1579 = vsub.f32 1.5, %v1578
    %v1580 = vmul.f32 %v1575, %v1579
    %v1581 = vmul.f32 %v721, %v1580
    %vm1582 = vcmp.eq.f32.partialorder %v721, inf
    %v1583 = vsel %vm1582, %v721, %v1581
    %vm1584 = vcmp.eq.f32.partialorder %v721, 0.0
    %v1585 = vand.u32 %v721, 2147483648
    %v1586 = vsel %vm1584, %v1585, %v1583
    %v1587 = vrsqrt.pop %v722
    %v1588 = vmul.f32 %v1587, %v722
    %v1589 = vmul.f32 %v1588, %v1587
    %v1590 = vmul.f32 0.5, %v1589
    %v1591 = vsub.f32 1.5, %v1590
    %v1592 = vmul.f32 %v1587, %v1591
    %v1593 = vmul.f32 %v722, %v1592
    %vm1594 = vcmp.eq.f32.partialorder %v722, inf
    %v1595 = vsel %vm1594, %v722, %v1593
    %vm1596 = vcmp.eq.f32.partialorder %v722, 0.0
    %v1597 = vand.u32 %v722, 2147483648
    %v1598 = vsel %vm1596, %v1597, %v1595
    %v1599 = vrsqrt.pop %v723
    %v1600 = vmul.f32 %v1599, %v723
    %v1601 = vmul.f32 %v1600, %v1599
    %v1602 = vmul.f32 0.5, %v1601
    %v1603 = vsub.f32 1.5, %v1602
    %v1604 = vmul.f32 %v1599, %v1603
    %v1605 = vmul.f32 %v723, %v1604
    %vm1606 = vcmp.eq.f32.partialorder %v723, inf
    %v1607 = vsel %vm1606, %v723, %v1605
    %vm1608 = vcmp.eq.f32.partialorder %v723, 0.0
    %v1609 = vand.u32 %v723, 2147483648
    %v1610 = vsel %vm1608, %v1609, %v1607
    %v1611 = vrsqrt.pop %v724
    %v1612 = vmul.f32 %v1611, %v724
    %v1613 = vmul.f32 %v1612, %v1611
    %v1614 = vmul.f32 0.5, %v1613
    %v1615 = vsub.f32 1.5, %v1614
    %v1616 = vmul.f32 %v1611, %v1615
    %v1617 = vmul.f32 %v724, %v1616
    %vm1618 = vcmp.eq.f32.partialorder %v724, inf
    %v1619 = vsel %vm1618, %v724, %v1617
    %vm1620 = vcmp.eq.f32.partialorder %v724, 0.0
    %v1621 = vand.u32 %v724, 2147483648
    %v1622 = vsel %vm1620, %v1621, %v1619
    %v1623 = vrsqrt.pop %v725
    %v1624 = vmul.f32 %v1623, %v725
    %v1625 = vmul.f32 %v1624, %v1623
    %v1626 = vmul.f32 0.5, %v1625
    %v1627 = vsub.f32 1.5, %v1626
    %v1628 = vmul.f32 %v1623, %v1627
    %v1629 = vmul.f32 %v725, %v1628
    %vm1630 = vcmp.eq.f32.partialorder %v725, inf
    %v1631 = vsel %vm1630, %v725, %v1629
    %vm1632 = vcmp.eq.f32.partialorder %v725, 0.0
    %v1633 = vand.u32 %v725, 2147483648
    %v1634 = vsel %vm1632, %v1633, %v1631
    %v1635 = vrsqrt.pop %v726
    %v1636 = vmul.f32 %v1635, %v726
    %v1637 = vmul.f32 %v1636, %v1635
    %v1638 = vmul.f32 0.5, %v1637
    %v1639 = vsub.f32 1.5, %v1638
    %v1640 = vmul.f32 %v1635, %v1639
    %v1641 = vmul.f32 %v726, %v1640
    %vm1642 = vcmp.eq.f32.partialorder %v726, inf
    %v1643 = vsel %vm1642, %v726, %v1641
    %vm1644 = vcmp.eq.f32.partialorder %v726, 0.0
    %v1645 = vand.u32 %v726, 2147483648
    %v1646 = vsel %vm1644, %v1645, %v1643
    %v1647 = vrsqrt.pop %v727
    %v1648 = vmul.f32 %v1647, %v727
    %v1649 = vmul.f32 %v1648, %v1647
    %v1650 = vmul.f32 0.5, %v1649
    %v1651 = vsub.f32 1.5, %v1650
    %v1652 = vmul.f32 %v1647, %v1651
    %v1653 = vmul.f32 %v727, %v1652
    %vm1654 = vcmp.eq.f32.partialorder %v727, inf
    %v1655 = vsel %vm1654, %v727, %v1653
    %vm1656 = vcmp.eq.f32.partialorder %v727, 0.0
    %v1657 = vand.u32 %v727, 2147483648
    %v1658 = vsel %vm1656, %v1657, %v1655
    %v1659 = vrsqrt.pop %v728
    %v1660 = vmul.f32 %v1659, %v728
    %v1661 = vmul.f32 %v1660, %v1659
    %v1662 = vmul.f32 0.5, %v1661
    %v1663 = vsub.f32 1.5, %v1662
    %v1664 = vmul.f32 %v1659, %v1663
    %v1665 = vmul.f32 %v728, %v1664
    %vm1666 = vcmp.eq.f32.partialorder %v728, inf
    %v1667 = vsel %vm1666, %v728, %v1665
    %vm1668 = vcmp.eq.f32.partialorder %v728, 0.0
    %v1669 = vand.u32 %v728, 2147483648
    %v1670 = vsel %vm1668, %v1669, %v1667
    %v1671 = vrsqrt.pop %v729
    %v1672 = vmul.f32 %v1671, %v729
    %v1673 = vmul.f32 %v1672, %v1671
    %v1674 = vmul.f32 0.5, %v1673
    %v1675 = vsub.f32 1.5, %v1674
    %v1676 = vmul.f32 %v1671, %v1675
    %v1677 = vmul.f32 %v729, %v1676
    %vm1678 = vcmp.eq.f32.partialorder %v729, inf
    %v1679 = vsel %vm1678, %v729, %v1677
    %vm1680 = vcmp.eq.f32.partialorder %v729, 0.0
    %v1681 = vand.u32 %v729, 2147483648
    %v1682 = vsel %vm1680, %v1681, %v1679
    %v1683 = vrsqrt.pop %v730
    %v1684 = vmul.f32 %v1683, %v730
    %v1685 = vmul.f32 %v1684, %v1683
    %v1686 = vmul.f32 0.5, %v1685
    %v1687 = vsub.f32 1.5, %v1686
    %v1688 = vmul.f32 %v1683, %v1687
    %v1689 = vmul.f32 %v730, %v1688
    %vm1690 = vcmp.eq.f32.partialorder %v730, inf
    %v1691 = vsel %vm1690, %v730, %v1689
    %vm1692 = vcmp.eq.f32.partialorder %v730, 0.0
    %v1693 = vand.u32 %v730, 2147483648
    %v1694 = vsel %vm1692, %v1693, %v1691
    %v1695 = vrsqrt.pop %v731
    %v1696 = vmul.f32 %v1695, %v731
    %v1697 = vmul.f32 %v1696, %v1695
    %v1698 = vmul.f32 0.5, %v1697
    %v1699 = vsub.f32 1.5, %v1698
    %v1700 = vmul.f32 %v1695, %v1699
    %v1701 = vmul.f32 %v731, %v1700
    %vm1702 = vcmp.eq.f32.partialorder %v731, inf
    %v1703 = vsel %vm1702, %v731, %v1701
    %vm1704 = vcmp.eq.f32.partialorder %v731, 0.0
    %v1705 = vand.u32 %v731, 2147483648
    %v1706 = vsel %vm1704, %v1705, %v1703
    %v1707 = vrsqrt.pop %v732
    %v1708 = vmul.f32 %v1707, %v732
    %v1709 = vmul.f32 %v1708, %v1707
    %v1710 = vmul.f32 0.5, %v1709
    %v1711 = vsub.f32 1.5, %v1710
    %v1712 = vmul.f32 %v1707, %v1711
    %v1713 = vmul.f32 %v732, %v1712
    %vm1714 = vcmp.eq.f32.partialorder %v732, inf
    %v1715 = vsel %vm1714, %v732, %v1713
    %vm1716 = vcmp.eq.f32.partialorder %v732, 0.0
    %v1717 = vand.u32 %v732, 2147483648
    %v1718 = vsel %vm1716, %v1717, %v1715
    %v1719 = vrsqrt.pop %v733
    %v1720 = vmul.f32 %v1719, %v733
    %v1721 = vmul.f32 %v1720, %v1719
    %v1722 = vmul.f32 0.5, %v1721
    %v1723 = vsub.f32 1.5, %v1722
    %v1724 = vmul.f32 %v1719, %v1723
    %v1725 = vmul.f32 %v733, %v1724
    %vm1726 = vcmp.eq.f32.partialorder %v733, inf
    %v1727 = vsel %vm1726, %v733, %v1725
    %vm1728 = vcmp.eq.f32.partialorder %v733, 0.0
    %v1729 = vand.u32 %v733, 2147483648
    %v1730 = vsel %vm1728, %v1729, %v1727
    %v1731 = vrsqrt.pop %v734
    %v1732 = vmul.f32 %v1731, %v734
    %v1733 = vmul.f32 %v1732, %v1731
    %v1734 = vmul.f32 0.5, %v1733
    %v1735 = vsub.f32 1.5, %v1734
    %v1736 = vmul.f32 %v1731, %v1735
    %v1737 = vmul.f32 %v734, %v1736
    %vm1738 = vcmp.eq.f32.partialorder %v734, inf
    %v1739 = vsel %vm1738, %v734, %v1737
    %vm1740 = vcmp.eq.f32.partialorder %v734, 0.0
    %v1741 = vand.u32 %v734, 2147483648
    %v1742 = vsel %vm1740, %v1741, %v1739
    %v1743 = vrsqrt.pop %v735
    %v1744 = vmul.f32 %v1743, %v735
    %v1745 = vmul.f32 %v1744, %v1743
    %v1746 = vmul.f32 0.5, %v1745
    %v1747 = vsub.f32 1.5, %v1746
    %v1748 = vmul.f32 %v1743, %v1747
    %v1749 = vmul.f32 %v735, %v1748
    %vm1750 = vcmp.eq.f32.partialorder %v735, inf
    %v1751 = vsel %vm1750, %v735, %v1749
    %vm1752 = vcmp.eq.f32.partialorder %v735, 0.0
    %v1753 = vand.u32 %v735, 2147483648
    %v1754 = vsel %vm1752, %v1753, %v1751
    %v1755 = vrsqrt.pop %v736
    %v1756 = vmul.f32 %v1755, %v736
    %v1757 = vmul.f32 %v1756, %v1755
    %v1758 = vmul.f32 0.5, %v1757
    %v1759 = vsub.f32 1.5, %v1758
    %v1760 = vmul.f32 %v1755, %v1759
    %v1761 = vmul.f32 %v736, %v1760
    %vm1762 = vcmp.eq.f32.partialorder %v736, inf
    %v1763 = vsel %vm1762, %v736, %v1761
    %vm1764 = vcmp.eq.f32.partialorder %v736, 0.0
    %v1765 = vand.u32 %v736, 2147483648
    %v1766 = vsel %vm1764, %v1765, %v1763
    %v1767 = vrsqrt.pop %v737
    %v1768 = vmul.f32 %v1767, %v737
    %v1769 = vmul.f32 %v1768, %v1767
    %v1770 = vmul.f32 0.5, %v1769
    %v1771 = vsub.f32 1.5, %v1770
    %v1772 = vmul.f32 %v1767, %v1771
    %v1773 = vmul.f32 %v737, %v1772
    %vm1774 = vcmp.eq.f32.partialorder %v737, inf
    %v1775 = vsel %vm1774, %v737, %v1773
    %vm1776 = vcmp.eq.f32.partialorder %v737, 0.0
    %v1777 = vand.u32 %v737, 2147483648
    %v1778 = vsel %vm1776, %v1777, %v1775
    %v1779 = vrsqrt.pop %v738
    %v1780 = vmul.f32 %v1779, %v738
    %v1781 = vmul.f32 %v1780, %v1779
    %v1782 = vmul.f32 0.5, %v1781
    %v1783 = vsub.f32 1.5, %v1782
    %v1784 = vmul.f32 %v1779, %v1783
    %v1785 = vmul.f32 %v738, %v1784
    %vm1786 = vcmp.eq.f32.partialorder %v738, inf
    %v1787 = vsel %vm1786, %v738, %v1785
    %vm1788 = vcmp.eq.f32.partialorder %v738, 0.0
    %v1789 = vand.u32 %v738, 2147483648
    %v1790 = vsel %vm1788, %v1789, %v1787
    %v1791 = vrsqrt.pop %v739
    %v1792 = vmul.f32 %v1791, %v739
    %v1793 = vmul.f32 %v1792, %v1791
    %v1794 = vmul.f32 0.5, %v1793
    %v1795 = vsub.f32 1.5, %v1794
    %v1796 = vmul.f32 %v1791, %v1795
    %v1797 = vmul.f32 %v739, %v1796
    %vm1798 = vcmp.eq.f32.partialorder %v739, inf
    %v1799 = vsel %vm1798, %v739, %v1797
    %vm1800 = vcmp.eq.f32.partialorder %v739, 0.0
    %v1801 = vand.u32 %v739, 2147483648
    %v1802 = vsel %vm1800, %v1801, %v1799
    %v1803 = vrsqrt.pop %v740
    %v1804 = vmul.f32 %v1803, %v740
    %v1805 = vmul.f32 %v1804, %v1803
    %v1806 = vmul.f32 0.5, %v1805
    %v1807 = vsub.f32 1.5, %v1806
    %v1808 = vmul.f32 %v1803, %v1807
    %v1809 = vmul.f32 %v740, %v1808
    %vm1810 = vcmp.eq.f32.partialorder %v740, inf
    %v1811 = vsel %vm1810, %v740, %v1809
    %vm1812 = vcmp.eq.f32.partialorder %v740, 0.0
    %v1813 = vand.u32 %v740, 2147483648
    %v1814 = vsel %vm1812, %v1813, %v1811
    %v1815 = vrsqrt.pop %v741
    %v1816 = vmul.f32 %v1815, %v741
    %v1817 = vmul.f32 %v1816, %v1815
    %v1818 = vmul.f32 0.5, %v1817
    %v1819 = vsub.f32 1.5, %v1818
    %v1820 = vmul.f32 %v1815, %v1819
    %v1821 = vmul.f32 %v741, %v1820
    %vm1822 = vcmp.eq.f32.partialorder %v741, inf
    %v1823 = vsel %vm1822, %v741, %v1821
    %vm1824 = vcmp.eq.f32.partialorder %v741, 0.0
    %v1825 = vand.u32 %v741, 2147483648
    %v1826 = vsel %vm1824, %v1825, %v1823
    %v1827 = vrsqrt.pop %v742
    %v1828 = vmul.f32 %v1827, %v742
    %v1829 = vmul.f32 %v1828, %v1827
    %v1830 = vmul.f32 0.5, %v1829
    %v1831 = vsub.f32 1.5, %v1830
    %v1832 = vmul.f32 %v1827, %v1831
    %v1833 = vmul.f32 %v742, %v1832
    %vm1834 = vcmp.eq.f32.partialorder %v742, inf
    %v1835 = vsel %vm1834, %v742, %v1833
    %vm1836 = vcmp.eq.f32.partialorder %v742, 0.0
    %v1837 = vand.u32 %v742, 2147483648
    %v1838 = vsel %vm1836, %v1837, %v1835
    %v1839 = vrsqrt.pop %v743
    %v1840 = vmul.f32 %v1839, %v743
    %v1841 = vmul.f32 %v1840, %v1839
    %v1842 = vmul.f32 0.5, %v1841
    %v1843 = vsub.f32 1.5, %v1842
    %v1844 = vmul.f32 %v1839, %v1843
    %v1845 = vmul.f32 %v743, %v1844
    %vm1846 = vcmp.eq.f32.partialorder %v743, inf
    %v1847 = vsel %vm1846, %v743, %v1845
    %vm1848 = vcmp.eq.f32.partialorder %v743, 0.0
    %v1849 = vand.u32 %v743, 2147483648
    %v1850 = vsel %vm1848, %v1849, %v1847
    %v1851 = vrsqrt.pop %v744
    %v1852 = vmul.f32 %v1851, %v744
    %v1853 = vmul.f32 %v1852, %v1851
    %v1854 = vmul.f32 0.5, %v1853
    %v1855 = vsub.f32 1.5, %v1854
    %v1856 = vmul.f32 %v1851, %v1855
    %v1857 = vmul.f32 %v744, %v1856
    %vm1858 = vcmp.eq.f32.partialorder %v744, inf
    %v1859 = vsel %vm1858, %v744, %v1857
    %vm1860 = vcmp.eq.f32.partialorder %v744, 0.0
    %v1861 = vand.u32 %v744, 2147483648
    %v1862 = vsel %vm1860, %v1861, %v1859
    %v1863 = vrsqrt.pop %v745
    %v1864 = vmul.f32 %v1863, %v745
    %v1865 = vmul.f32 %v1864, %v1863
    %v1866 = vmul.f32 0.5, %v1865
    %v1867 = vsub.f32 1.5, %v1866
    %v1868 = vmul.f32 %v1863, %v1867
    %v1869 = vmul.f32 %v745, %v1868
    %vm1870 = vcmp.eq.f32.partialorder %v745, inf
    %v1871 = vsel %vm1870, %v745, %v1869
    %vm1872 = vcmp.eq.f32.partialorder %v745, 0.0
    %v1873 = vand.u32 %v745, 2147483648
    %v1874 = vsel %vm1872, %v1873, %v1871
    %v1875 = vrsqrt.pop %v746
    %v1876 = vmul.f32 %v1875, %v746
    %v1877 = vmul.f32 %v1876, %v1875
    %v1878 = vmul.f32 0.5, %v1877
    %v1879 = vsub.f32 1.5, %v1878
    %v1880 = vmul.f32 %v1875, %v1879
    %v1881 = vmul.f32 %v746, %v1880
    %vm1882 = vcmp.eq.f32.partialorder %v746, inf
    %v1883 = vsel %vm1882, %v746, %v1881
    %vm1884 = vcmp.eq.f32.partialorder %v746, 0.0
    %v1885 = vand.u32 %v746, 2147483648
    %v1886 = vsel %vm1884, %v1885, %v1883
    %v1887 = vrsqrt.pop %v747
    %v1888 = vmul.f32 %v1887, %v747
    %v1889 = vmul.f32 %v1888, %v1887
    %v1890 = vmul.f32 0.5, %v1889
    %v1891 = vsub.f32 1.5, %v1890
    %v1892 = vmul.f32 %v1887, %v1891
    %v1893 = vmul.f32 %v747, %v1892
    %vm1894 = vcmp.eq.f32.partialorder %v747, inf
    %v1895 = vsel %vm1894, %v747, %v1893
    %vm1896 = vcmp.eq.f32.partialorder %v747, 0.0
    %v1897 = vand.u32 %v747, 2147483648
    %v1898 = vsel %vm1896, %v1897, %v1895
    %v1899 = vrsqrt.pop %v748
    %v1900 = vmul.f32 %v1899, %v748
    %v1901 = vmul.f32 %v1900, %v1899
    %v1902 = vmul.f32 0.5, %v1901
    %v1903 = vsub.f32 1.5, %v1902
    %v1904 = vmul.f32 %v1899, %v1903
    %v1905 = vmul.f32 %v748, %v1904
    %vm1906 = vcmp.eq.f32.partialorder %v748, inf
    %v1907 = vsel %vm1906, %v748, %v1905
    %vm1908 = vcmp.eq.f32.partialorder %v748, 0.0
    %v1909 = vand.u32 %v748, 2147483648
    %v1910 = vsel %vm1908, %v1909, %v1907
    %v1911 = vrsqrt.pop %v749
    %v1912 = vmul.f32 %v1911, %v749
    %v1913 = vmul.f32 %v1912, %v1911
    %v1914 = vmul.f32 0.5, %v1913
    %v1915 = vsub.f32 1.5, %v1914
    %v1916 = vmul.f32 %v1911, %v1915
    %v1917 = vmul.f32 %v749, %v1916
    %vm1918 = vcmp.eq.f32.partialorder %v749, inf
    %v1919 = vsel %vm1918, %v749, %v1917
    %vm1920 = vcmp.eq.f32.partialorder %v749, 0.0
    %v1921 = vand.u32 %v749, 2147483648
    %v1922 = vsel %vm1920, %v1921, %v1919
    %v1923 = vrsqrt.pop %v750
    %v1924 = vmul.f32 %v1923, %v750
    %v1925 = vmul.f32 %v1924, %v1923
    %v1926 = vmul.f32 0.5, %v1925
    %v1927 = vsub.f32 1.5, %v1926
    %v1928 = vmul.f32 %v1923, %v1927
    %v1929 = vmul.f32 %v750, %v1928
    %vm1930 = vcmp.eq.f32.partialorder %v750, inf
    %v1931 = vsel %vm1930, %v750, %v1929
    %vm1932 = vcmp.eq.f32.partialorder %v750, 0.0
    %v1933 = vand.u32 %v750, 2147483648
    %v1934 = vsel %vm1932, %v1933, %v1931
    %v1935 = vrsqrt.pop %v751
    %v1936 = vmul.f32 %v1935, %v751
    %v1937 = vmul.f32 %v1936, %v1935
    %v1938 = vmul.f32 0.5, %v1937
    %v1939 = vsub.f32 1.5, %v1938
    %v1940 = vmul.f32 %v1935, %v1939
    %v1941 = vmul.f32 %v751, %v1940
    %vm1942 = vcmp.eq.f32.partialorder %v751, inf
    %v1943 = vsel %vm1942, %v751, %v1941
    %vm1944 = vcmp.eq.f32.partialorder %v751, 0.0
    %v1945 = vand.u32 %v751, 2147483648
    %v1946 = vsel %vm1944, %v1945, %v1943
    %v1947 = vrsqrt.pop %v752
    %v1948 = vmul.f32 %v1947, %v752
    %v1949 = vmul.f32 %v1948, %v1947
    %v1950 = vmul.f32 0.5, %v1949
    %v1951 = vsub.f32 1.5, %v1950
    %v1952 = vmul.f32 %v1947, %v1951
    %v1953 = vmul.f32 %v752, %v1952
    %vm1954 = vcmp.eq.f32.partialorder %v752, inf
    %v1955 = vsel %vm1954, %v752, %v1953
    %vm1956 = vcmp.eq.f32.partialorder %v752, 0.0
    %v1957 = vand.u32 %v752, 2147483648
    %v1958 = vsel %vm1956, %v1957, %v1955
    %v1959 = vrsqrt.pop %v753
    %v1960 = vmul.f32 %v1959, %v753
    %v1961 = vmul.f32 %v1960, %v1959
    %v1962 = vmul.f32 0.5, %v1961
    %v1963 = vsub.f32 1.5, %v1962
    %v1964 = vmul.f32 %v1959, %v1963
    %v1965 = vmul.f32 %v753, %v1964
    %vm1966 = vcmp.eq.f32.partialorder %v753, inf
    %v1967 = vsel %vm1966, %v753, %v1965
    %vm1968 = vcmp.eq.f32.partialorder %v753, 0.0
    %v1969 = vand.u32 %v753, 2147483648
    %v1970 = vsel %vm1968, %v1969, %v1967
    %v1971 = vrsqrt.pop %v754
    %v1972 = vmul.f32 %v1971, %v754
    %v1973 = vmul.f32 %v1972, %v1971
    %v1974 = vmul.f32 0.5, %v1973
    %v1975 = vsub.f32 1.5, %v1974
    %v1976 = vmul.f32 %v1971, %v1975
    %v1977 = vmul.f32 %v754, %v1976
    %vm1978 = vcmp.eq.f32.partialorder %v754, inf
    %v1979 = vsel %vm1978, %v754, %v1977
    %vm1980 = vcmp.eq.f32.partialorder %v754, 0.0
    %v1981 = vand.u32 %v754, 2147483648
    %v1982 = vsel %vm1980, %v1981, %v1979
    %v1983 = vrsqrt.pop %v755
    %v1984 = vmul.f32 %v1983, %v755
    %v1985 = vmul.f32 %v1984, %v1983
    %v1986 = vmul.f32 0.5, %v1985
    %v1987 = vsub.f32 1.5, %v1986
    %v1988 = vmul.f32 %v1983, %v1987
    %v1989 = vmul.f32 %v755, %v1988
    %vm1990 = vcmp.eq.f32.partialorder %v755, inf
    %v1991 = vsel %vm1990, %v755, %v1989
    %vm1992 = vcmp.eq.f32.partialorder %v755, 0.0
    %v1993 = vand.u32 %v755, 2147483648
    %v1994 = vsel %vm1992, %v1993, %v1991
    %v1995 = vrsqrt.pop %v756
    %v1996 = vmul.f32 %v1995, %v756
    %v1997 = vmul.f32 %v1996, %v1995
    %v1998 = vmul.f32 0.5, %v1997
    %v1999 = vsub.f32 1.5, %v1998
    %v2000 = vmul.f32 %v1995, %v1999
    %v2001 = vmul.f32 %v756, %v2000
    %vm2002 = vcmp.eq.f32.partialorder %v756, inf
    %v2003 = vsel %vm2002, %v756, %v2001
    %vm2004 = vcmp.eq.f32.partialorder %v756, 0.0
    %v2005 = vand.u32 %v756, 2147483648
    %v2006 = vsel %vm2004, %v2005, %v2003
    %v2007 = vrsqrt.pop %v757
    %v2008 = vmul.f32 %v2007, %v757
    %v2009 = vmul.f32 %v2008, %v2007
    %v2010 = vmul.f32 0.5, %v2009
    %v2011 = vsub.f32 1.5, %v2010
    %v2012 = vmul.f32 %v2007, %v2011
    %v2013 = vmul.f32 %v757, %v2012
    %vm2014 = vcmp.eq.f32.partialorder %v757, inf
    %v2015 = vsel %vm2014, %v757, %v2013
    %vm2016 = vcmp.eq.f32.partialorder %v757, 0.0
    %v2017 = vand.u32 %v757, 2147483648
    %v2018 = vsel %vm2016, %v2017, %v2015
    %v2019 = vrsqrt.pop %v758
    %v2020 = vmul.f32 %v2019, %v758
    %v2021 = vmul.f32 %v2020, %v2019
    %v2022 = vmul.f32 0.5, %v2021
    %v2023 = vsub.f32 1.5, %v2022
    %v2024 = vmul.f32 %v2019, %v2023
    %v2025 = vmul.f32 %v758, %v2024
    %vm2026 = vcmp.eq.f32.partialorder %v758, inf
    %v2027 = vsel %vm2026, %v758, %v2025
    %vm2028 = vcmp.eq.f32.partialorder %v758, 0.0
    %v2029 = vand.u32 %v758, 2147483648
    %v2030 = vsel %vm2028, %v2029, %v2027
    %v2031 = vrsqrt.pop %v759
    %v2032 = vmul.f32 %v2031, %v759
    %v2033 = vmul.f32 %v2032, %v2031
    %v2034 = vmul.f32 0.5, %v2033
    %v2035 = vsub.f32 1.5, %v2034
    %v2036 = vmul.f32 %v2031, %v2035
    %v2037 = vmul.f32 %v759, %v2036
    %vm2038 = vcmp.eq.f32.partialorder %v759, inf
    %v2039 = vsel %vm2038, %v759, %v2037
    %vm2040 = vcmp.eq.f32.partialorder %v759, 0.0
    %v2041 = vand.u32 %v759, 2147483648
    %v2042 = vsel %vm2040, %v2041, %v2039
    %v2043 = vrsqrt.pop %v760
    %v2044 = vmul.f32 %v2043, %v760
    %v2045 = vmul.f32 %v2044, %v2043
    %v2046 = vmul.f32 0.5, %v2045
    %v2047 = vsub.f32 1.5, %v2046
    %v2048 = vmul.f32 %v2043, %v2047
    %v2049 = vmul.f32 %v760, %v2048
    %vm2050 = vcmp.eq.f32.partialorder %v760, inf
    %v2051 = vsel %vm2050, %v760, %v2049
    %vm2052 = vcmp.eq.f32.partialorder %v760, 0.0
    %v2053 = vand.u32 %v760, 2147483648
    %v2054 = vsel %vm2052, %v2053, %v2051
    %v2055 = vrsqrt.pop %v761
    %v2056 = vmul.f32 %v2055, %v761
    %v2057 = vmul.f32 %v2056, %v2055
    %v2058 = vmul.f32 0.5, %v2057
    %v2059 = vsub.f32 1.5, %v2058
    %v2060 = vmul.f32 %v2055, %v2059
    %v2061 = vmul.f32 %v761, %v2060
    %vm2062 = vcmp.eq.f32.partialorder %v761, inf
    %v2063 = vsel %vm2062, %v761, %v2061
    %vm2064 = vcmp.eq.f32.partialorder %v761, 0.0
    %v2065 = vand.u32 %v761, 2147483648
    %v2066 = vsel %vm2064, %v2065, %v2063
    %v2067 = vrsqrt.pop %v762
    %v2068 = vmul.f32 %v2067, %v762
    %v2069 = vmul.f32 %v2068, %v2067
    %v2070 = vmul.f32 0.5, %v2069
    %v2071 = vsub.f32 1.5, %v2070
    %v2072 = vmul.f32 %v2067, %v2071
    %v2073 = vmul.f32 %v762, %v2072
    %vm2074 = vcmp.eq.f32.partialorder %v762, inf
    %v2075 = vsel %vm2074, %v762, %v2073
    %vm2076 = vcmp.eq.f32.partialorder %v762, 0.0
    %v2077 = vand.u32 %v762, 2147483648
    %v2078 = vsel %vm2076, %v2077, %v2075
    %v2079 = vrsqrt.pop %v763
    %v2080 = vmul.f32 %v2079, %v763
    %v2081 = vmul.f32 %v2080, %v2079
    %v2082 = vmul.f32 0.5, %v2081
    %v2083 = vsub.f32 1.5, %v2082
    %v2084 = vmul.f32 %v2079, %v2083
    %v2085 = vmul.f32 %v763, %v2084
    %vm2086 = vcmp.eq.f32.partialorder %v763, inf
    %v2087 = vsel %vm2086, %v763, %v2085
    %vm2088 = vcmp.eq.f32.partialorder %v763, 0.0
    %v2089 = vand.u32 %v763, 2147483648
    %v2090 = vsel %vm2088, %v2089, %v2087
    %v2091 = vrsqrt.pop %v764
    %v2092 = vmul.f32 %v2091, %v764
    %v2093 = vmul.f32 %v2092, %v2091
    %v2094 = vmul.f32 0.5, %v2093
    %v2095 = vsub.f32 1.5, %v2094
    %v2096 = vmul.f32 %v2091, %v2095
    %v2097 = vmul.f32 %v764, %v2096
    %vm2098 = vcmp.eq.f32.partialorder %v764, inf
    %v2099 = vsel %vm2098, %v764, %v2097
    %vm2100 = vcmp.eq.f32.partialorder %v764, 0.0
    %v2101 = vand.u32 %v764, 2147483648
    %v2102 = vsel %vm2100, %v2101, %v2099
    %v2103 = vrsqrt.pop %v765
    %v2104 = vmul.f32 %v2103, %v765
    %v2105 = vmul.f32 %v2104, %v2103
    %v2106 = vmul.f32 0.5, %v2105
    %v2107 = vsub.f32 1.5, %v2106
    %v2108 = vmul.f32 %v2103, %v2107
    %v2109 = vmul.f32 %v765, %v2108
    %vm2110 = vcmp.eq.f32.partialorder %v765, inf
    %v2111 = vsel %vm2110, %v765, %v2109
    %vm2112 = vcmp.eq.f32.partialorder %v765, 0.0
    %v2113 = vand.u32 %v765, 2147483648
    %v2114 = vsel %vm2112, %v2113, %v2111
    %v2115 = vrsqrt.pop %v766
    %v2116 = vmul.f32 %v2115, %v766
    %v2117 = vmul.f32 %v2116, %v2115
    %v2118 = vmul.f32 0.5, %v2117
    %v2119 = vsub.f32 1.5, %v2118
    %v2120 = vmul.f32 %v2115, %v2119
    %v2121 = vmul.f32 %v766, %v2120
    %vm2122 = vcmp.eq.f32.partialorder %v766, inf
    %v2123 = vsel %vm2122, %v766, %v2121
    %vm2124 = vcmp.eq.f32.partialorder %v766, 0.0
    %v2125 = vand.u32 %v766, 2147483648
    %v2126 = vsel %vm2124, %v2125, %v2123
    %v2127 = vrsqrt.pop %v767
    %v2128 = vmul.f32 %v2127, %v767
    %v2129 = vmul.f32 %v2128, %v2127
    %v2130 = vmul.f32 0.5, %v2129
    %v2131 = vsub.f32 1.5, %v2130
    %v2132 = vmul.f32 %v2127, %v2131
    %v2133 = vmul.f32 %v767, %v2132
    %vm2134 = vcmp.eq.f32.partialorder %v767, inf
    %v2135 = vsel %vm2134, %v767, %v2133
    %vm2136 = vcmp.eq.f32.partialorder %v767, 0.0
    %v2137 = vand.u32 %v767, 2147483648
    %v2138 = vsel %vm2136, %v2137, %v2135
    %v2139 = vrsqrt.pop %v768
    %v2140 = vmul.f32 %v2139, %v768
    %v2141 = vmul.f32 %v2140, %v2139
    %v2142 = vmul.f32 0.5, %v2141
    %v2143 = vsub.f32 1.5, %v2142
    %v2144 = vmul.f32 %v2139, %v2143
    %v2145 = vmul.f32 %v768, %v2144
    %vm2146 = vcmp.eq.f32.partialorder %v768, inf
    %v2147 = vsel %vm2146, %v768, %v2145
    %vm2148 = vcmp.eq.f32.partialorder %v768, 0.0
    %v2149 = vand.u32 %v768, 2147483648
    %v2150 = vsel %vm2148, %v2149, %v2147
    %v2151 = vrsqrt.pop %v769
    %v2152 = vmul.f32 %v2151, %v769
    %v2153 = vmul.f32 %v2152, %v2151
    %v2154 = vmul.f32 0.5, %v2153
    %v2155 = vsub.f32 1.5, %v2154
    %v2156 = vmul.f32 %v2151, %v2155
    %v2157 = vmul.f32 %v769, %v2156
    %vm2158 = vcmp.eq.f32.partialorder %v769, inf
    %v2159 = vsel %vm2158, %v769, %v2157
    %vm2160 = vcmp.eq.f32.partialorder %v769, 0.0
    %v2161 = vand.u32 %v769, 2147483648
    %v2162 = vsel %vm2160, %v2161, %v2159
    %v2163 = vrsqrt.pop %v770
    %v2164 = vmul.f32 %v2163, %v770
    %v2165 = vmul.f32 %v2164, %v2163
    %v2166 = vmul.f32 0.5, %v2165
    %v2167 = vsub.f32 1.5, %v2166
    %v2168 = vmul.f32 %v2163, %v2167
    %v2169 = vmul.f32 %v770, %v2168
    %vm2170 = vcmp.eq.f32.partialorder %v770, inf
    %v2171 = vsel %vm2170, %v770, %v2169
    %vm2172 = vcmp.eq.f32.partialorder %v770, 0.0
    %v2173 = vand.u32 %v770, 2147483648
    %v2174 = vsel %vm2172, %v2173, %v2171
    %v2175 = vrsqrt.pop %v771
    %v2176 = vmul.f32 %v2175, %v771
    %v2177 = vmul.f32 %v2176, %v2175
    %v2178 = vmul.f32 0.5, %v2177
    %v2179 = vsub.f32 1.5, %v2178
    %v2180 = vmul.f32 %v2175, %v2179
    %v2181 = vmul.f32 %v771, %v2180
    %vm2182 = vcmp.eq.f32.partialorder %v771, inf
    %v2183 = vsel %vm2182, %v771, %v2181
    %vm2184 = vcmp.eq.f32.partialorder %v771, 0.0
    %v2185 = vand.u32 %v771, 2147483648
    %v2186 = vsel %vm2184, %v2185, %v2183
    %v2187 = vrsqrt.pop %v772
    %v2188 = vmul.f32 %v2187, %v772
    %v2189 = vmul.f32 %v2188, %v2187
    %v2190 = vmul.f32 0.5, %v2189
    %v2191 = vsub.f32 1.5, %v2190
    %v2192 = vmul.f32 %v2187, %v2191
    %v2193 = vmul.f32 %v772, %v2192
    %vm2194 = vcmp.eq.f32.partialorder %v772, inf
    %v2195 = vsel %vm2194, %v772, %v2193
    %vm2196 = vcmp.eq.f32.partialorder %v772, 0.0
    %v2197 = vand.u32 %v772, 2147483648
    %v2198 = vsel %vm2196, %v2197, %v2195
    %v2199 = vrsqrt.pop %v773
    %v2200 = vmul.f32 %v2199, %v773
    %v2201 = vmul.f32 %v2200, %v2199
    %v2202 = vmul.f32 0.5, %v2201
    %v2203 = vsub.f32 1.5, %v2202
    %v2204 = vmul.f32 %v2199, %v2203
    %v2205 = vmul.f32 %v773, %v2204
    %vm2206 = vcmp.eq.f32.partialorder %v773, inf
    %v2207 = vsel %vm2206, %v773, %v2205
    %vm2208 = vcmp.eq.f32.partialorder %v773, 0.0
    %v2209 = vand.u32 %v773, 2147483648
    %v2210 = vsel %vm2208, %v2209, %v2207
    %v2211 = vrsqrt.pop %v774
    %v2212 = vmul.f32 %v2211, %v774
    %v2213 = vmul.f32 %v2212, %v2211
    %v2214 = vmul.f32 0.5, %v2213
    %v2215 = vsub.f32 1.5, %v2214
    %v2216 = vmul.f32 %v2211, %v2215
    %v2217 = vmul.f32 %v774, %v2216
    %vm2218 = vcmp.eq.f32.partialorder %v774, inf
    %v2219 = vsel %vm2218, %v774, %v2217
    %vm2220 = vcmp.eq.f32.partialorder %v774, 0.0
    %v2221 = vand.u32 %v774, 2147483648
    %v2222 = vsel %vm2220, %v2221, %v2219
    %v2223 = vrsqrt.pop %v775
    %v2224 = vmul.f32 %v2223, %v775
    %v2225 = vmul.f32 %v2224, %v2223
    %v2226 = vmul.f32 0.5, %v2225
    %v2227 = vsub.f32 1.5, %v2226
    %v2228 = vmul.f32 %v2223, %v2227
    %v2229 = vmul.f32 %v775, %v2228
    %vm2230 = vcmp.eq.f32.partialorder %v775, inf
    %v2231 = vsel %vm2230, %v775, %v2229
    %vm2232 = vcmp.eq.f32.partialorder %v775, 0.0
    %v2233 = vand.u32 %v775, 2147483648
    %v2234 = vsel %vm2232, %v2233, %v2231
    %v2235 = vrsqrt.pop %v776
    %v2236 = vmul.f32 %v2235, %v776
    %v2237 = vmul.f32 %v2236, %v2235
    %v2238 = vmul.f32 0.5, %v2237
    %v2239 = vsub.f32 1.5, %v2238
    %v2240 = vmul.f32 %v2235, %v2239
    %v2241 = vmul.f32 %v776, %v2240
    %vm2242 = vcmp.eq.f32.partialorder %v776, inf
    %v2243 = vsel %vm2242, %v776, %v2241
    %vm2244 = vcmp.eq.f32.partialorder %v776, 0.0
    %v2245 = vand.u32 %v776, 2147483648
    %v2246 = vsel %vm2244, %v2245, %v2243
    %v2247 = vrsqrt.pop %v777
    %v2248 = vmul.f32 %v2247, %v777
    %v2249 = vmul.f32 %v2248, %v2247
    %v2250 = vmul.f32 0.5, %v2249
    %v2251 = vsub.f32 1.5, %v2250
    %v2252 = vmul.f32 %v2247, %v2251
    %v2253 = vmul.f32 %v777, %v2252
    %vm2254 = vcmp.eq.f32.partialorder %v777, inf
    %v2255 = vsel %vm2254, %v777, %v2253
    %vm2256 = vcmp.eq.f32.partialorder %v777, 0.0
    %v2257 = vand.u32 %v777, 2147483648
    %v2258 = vsel %vm2256, %v2257, %v2255
    %v2259 = vrsqrt.pop %v778
    %v2260 = vmul.f32 %v2259, %v778
    %v2261 = vmul.f32 %v2260, %v2259
    %v2262 = vmul.f32 0.5, %v2261
    %v2263 = vsub.f32 1.5, %v2262
    %v2264 = vmul.f32 %v2259, %v2263
    %v2265 = vmul.f32 %v778, %v2264
    %vm2266 = vcmp.eq.f32.partialorder %v778, inf
    %v2267 = vsel %vm2266, %v778, %v2265
    %vm2268 = vcmp.eq.f32.partialorder %v778, 0.0
    %v2269 = vand.u32 %v778, 2147483648
    %v2270 = vsel %vm2268, %v2269, %v2267
    %v2271 = vrsqrt.pop %v779
    %v2272 = vmul.f32 %v2271, %v779
    %v2273 = vmul.f32 %v2272, %v2271
    %v2274 = vmul.f32 0.5, %v2273
    %v2275 = vsub.f32 1.5, %v2274
    %v2276 = vmul.f32 %v2271, %v2275
    %v2277 = vmul.f32 %v779, %v2276
    %vm2278 = vcmp.eq.f32.partialorder %v779, inf
    %v2279 = vsel %vm2278, %v779, %v2277
    %vm2280 = vcmp.eq.f32.partialorder %v779, 0.0
    %v2281 = vand.u32 %v779, 2147483648
    %v2282 = vsel %vm2280, %v2281, %v2279
    %v2283 = vrsqrt.pop %v780
    %v2284 = vmul.f32 %v2283, %v780
    %v2285 = vmul.f32 %v2284, %v2283
    %v2286 = vmul.f32 0.5, %v2285
    %v2287 = vsub.f32 1.5, %v2286
    %v2288 = vmul.f32 %v2283, %v2287
    %v2289 = vmul.f32 %v780, %v2288
    %vm2290 = vcmp.eq.f32.partialorder %v780, inf
    %v2291 = vsel %vm2290, %v780, %v2289
    %vm2292 = vcmp.eq.f32.partialorder %v780, 0.0
    %v2293 = vand.u32 %v780, 2147483648
    %v2294 = vsel %vm2292, %v2293, %v2291
    %v2295 = vrsqrt.pop %v781
    %v2296 = vmul.f32 %v2295, %v781
    %v2297 = vmul.f32 %v2296, %v2295
    %v2298 = vmul.f32 0.5, %v2297
    %v2299 = vsub.f32 1.5, %v2298
    %v2300 = vmul.f32 %v2295, %v2299
    %v2301 = vmul.f32 %v781, %v2300
    %vm2302 = vcmp.eq.f32.partialorder %v781, inf
    %v2303 = vsel %vm2302, %v781, %v2301
    %vm2304 = vcmp.eq.f32.partialorder %v781, 0.0
    %v2305 = vand.u32 %v781, 2147483648
    %v2306 = vsel %vm2304, %v2305, %v2303
    %v2307 = vrsqrt.pop %v782
    %v2308 = vmul.f32 %v2307, %v782
    %v2309 = vmul.f32 %v2308, %v2307
    %v2310 = vmul.f32 0.5, %v2309
    %v2311 = vsub.f32 1.5, %v2310
    %v2312 = vmul.f32 %v2307, %v2311
    %v2313 = vmul.f32 %v782, %v2312
    %vm2314 = vcmp.eq.f32.partialorder %v782, inf
    %v2315 = vsel %vm2314, %v782, %v2313
    %vm2316 = vcmp.eq.f32.partialorder %v782, 0.0
    %v2317 = vand.u32 %v782, 2147483648
    %v2318 = vsel %vm2316, %v2317, %v2315
    %v2319 = vpack.c.bf16 %v986, %v794
    %v2320 = vpack.c.bf16 %v998, %v806
    %v2321 = vpack.c.bf16 %v1010, %v818
    %v2322 = vpack.c.bf16 %v1022, %v830
    %v2323 = vpack.c.bf16 %v1034, %v842
    %v2324 = vpack.c.bf16 %v1046, %v854
    %v2325 = vpack.c.bf16 %v1058, %v866
    %v2326 = vpack.c.bf16 %v1070, %v878
    %v2327 = vpack.c.bf16 %v1082, %v890
    %v2328 = vpack.c.bf16 %v1094, %v902
    %v2329 = vpack.c.bf16 %v1106, %v914
    %v2330 = vpack.c.bf16 %v1118, %v926
    %v2331 = vpack.c.bf16 %v1130, %v938
    %v2332 = vpack.c.bf16 %v1142, %v950
    %v2333 = vpack.c.bf16 %v1154, %v962
    %v2334 = vpack.c.bf16 %v1166, %v974
    %v2335 = vpack.c.bf16 %v1370, %v1178
    %v2336 = vpack.c.bf16 %v1382, %v1190
    %v2337 = vpack.c.bf16 %v1394, %v1202
    %v2338 = vpack.c.bf16 %v1406, %v1214
    %v2339 = vpack.c.bf16 %v1418, %v1226
    %v2340 = vpack.c.bf16 %v1430, %v1238
    %v2341 = vpack.c.bf16 %v1442, %v1250
    %v2342 = vpack.c.bf16 %v1454, %v1262
    %v2343 = vpack.c.bf16 %v1466, %v1274
    %v2344 = vpack.c.bf16 %v1478, %v1286
    %v2345 = vpack.c.bf16 %v1490, %v1298
    %v2346 = vpack.c.bf16 %v1502, %v1310
    %v2347 = vpack.c.bf16 %v1514, %v1322
    %v2348 = vpack.c.bf16 %v1526, %v1334
    %v2349 = vpack.c.bf16 %v1538, %v1346
    %v2350 = vpack.c.bf16 %v1550, %v1358
    %v2351 = vpack.c.bf16 %v1754, %v1562
    %v2352 = vpack.c.bf16 %v1766, %v1574
    %v2353 = vpack.c.bf16 %v1778, %v1586
    %v2354 = vpack.c.bf16 %v1790, %v1598
    %v2355 = vpack.c.bf16 %v1802, %v1610
    %v2356 = vpack.c.bf16 %v1814, %v1622
    %v2357 = vpack.c.bf16 %v1826, %v1634
    %v2358 = vpack.c.bf16 %v1838, %v1646
    %v2359 = vpack.c.bf16 %v1850, %v1658
    %v2360 = vpack.c.bf16 %v1862, %v1670
    %v2361 = vpack.c.bf16 %v1874, %v1682
    %v2362 = vpack.c.bf16 %v1886, %v1694
    %v2363 = vpack.c.bf16 %v1898, %v1706
    %v2364 = vpack.c.bf16 %v1910, %v1718
    %v2365 = vpack.c.bf16 %v1922, %v1730
    %v2366 = vpack.c.bf16 %v1934, %v1742
    %v2367 = vpack.c.bf16 %v2138, %v1946
    %v2368 = vpack.c.bf16 %v2150, %v1958
    %v2369 = vpack.c.bf16 %v2162, %v1970
    %v2370 = vpack.c.bf16 %v2174, %v1982
    %v2371 = vpack.c.bf16 %v2186, %v1994
    %v2372 = vpack.c.bf16 %v2198, %v2006
    %v2373 = vpack.c.bf16 %v2210, %v2018
    %v2374 = vpack.c.bf16 %v2222, %v2030
    %v2375 = vpack.c.bf16 %v2234, %v2042
    %v2376 = vpack.c.bf16 %v2246, %v2054
    %v2377 = vpack.c.bf16 %v2258, %v2066
    %v2378 = vpack.c.bf16 %v2270, %v2078
    %v2379 = vpack.c.bf16 %v2282, %v2090
    %v2380 = vpack.c.bf16 %v2294, %v2102
    %v2381 = vpack.c.bf16 %v2306, %v2114
    %v2382 = vpack.c.bf16 %v2318, %v2126
    %v2383 = vld [vmem:[%s2] sm:$0xf]
    %v2384 = vld [vmem:[%s2 + $0x4] sm:$0xf]
    %v2385 = vld [vmem:[%s2 + $0x8] sm:$0xf]
    %v2386 = vld [vmem:[%s2 + $0xc] sm:$0xf]
    %v2387 = vld [vmem:[%s2 + $0x10] sm:$0xf]
    %v2388 = vld [vmem:[%s2 + $0x14] sm:$0xf]
    %v2389 = vld [vmem:[%s2 + $0x18] sm:$0xf]
    %v2390 = vld [vmem:[%s2 + $0x1c] sm:$0xf]
    %v2391 = vld [vmem:[%s2 + $0x20] sm:$0xf]
    %v2392 = vld [vmem:[%s2 + $0x24] sm:$0xf]
    %v2393 = vld [vmem:[%s2 + $0x28] sm:$0xf]
    %v2394 = vld [vmem:[%s2 + $0x2c] sm:$0xf]
    %v2395 = vld [vmem:[%s2 + $0x30] sm:$0xf]
    %v2396 = vld [vmem:[%s2 + $0x34] sm:$0xf]
    %v2397 = vld [vmem:[%s2 + $0x38] sm:$0xf]
    %v2398 = vld [vmem:[%s2 + $0x3c] sm:$0xf]
    %v2399 = vld [vmem:[%s2 + $0x40] sm:$0xf]
    %v2400 = vld [vmem:[%s2 + $0x44] sm:$0xf]
    %v2401 = vld [vmem:[%s2 + $0x48] sm:$0xf]
    %v2402 = vld [vmem:[%s2 + $0x4c] sm:$0xf]
    %v2403 = vld [vmem:[%s2 + $0x50] sm:$0xf]
    %v2404 = vld [vmem:[%s2 + $0x54] sm:$0xf]
    %v2405 = vld [vmem:[%s2 + $0x58] sm:$0xf]
    %v2406 = vld [vmem:[%s2 + $0x5c] sm:$0xf]
    %v2407 = vld [vmem:[%s2 + $0x60] sm:$0xf]
    %v2408 = vld [vmem:[%s2 + $0x64] sm:$0xf]
    %v2409 = vld [vmem:[%s2 + $0x68] sm:$0xf]
    %v2410 = vld [vmem:[%s2 + $0x6c] sm:$0xf]
    %v2411 = vld [vmem:[%s2 + $0x70] sm:$0xf]
    %v2412 = vld [vmem:[%s2 + $0x74] sm:$0xf]
    %v2413 = vld [vmem:[%s2 + $0x78] sm:$0xf]
    %v2414 = vld [vmem:[%s2 + $0x7c] sm:$0xf]
    %v2415 = vld [vmem:[%s2 + $0x80] sm:$0xf]
    %v2416 = vld [vmem:[%s2 + $0x84] sm:$0xf]
    %v2417 = vld [vmem:[%s2 + $0x88] sm:$0xf]
    %v2418 = vld [vmem:[%s2 + $0x8c] sm:$0xf]
    %v2419 = vld [vmem:[%s2 + $0x90] sm:$0xf]
    %v2420 = vld [vmem:[%s2 + $0x94] sm:$0xf]
    %v2421 = vld [vmem:[%s2 + $0x98] sm:$0xf]
    %v2422 = vld [vmem:[%s2 + $0x9c] sm:$0xf]
    %v2423 = vld [vmem:[%s2 + $0xa0] sm:$0xf]
    %v2424 = vld [vmem:[%s2 + $0xa4] sm:$0xf]
    %v2425 = vld [vmem:[%s2 + $0xa8] sm:$0xf]
    %v2426 = vld [vmem:[%s2 + $0xac] sm:$0xf]
    %v2427 = vld [vmem:[%s2 + $0xb0] sm:$0xf]
    %v2428 = vld [vmem:[%s2 + $0xb4] sm:$0xf]
    %v2429 = vld [vmem:[%s2 + $0xb8] sm:$0xf]
    %v2430 = vld [vmem:[%s2 + $0xbc] sm:$0xf]
    %v2431 = vld [vmem:[%s2 + $0xc0] sm:$0xf]
    %v2432 = vld [vmem:[%s2 + $0xc4] sm:$0xf]
    %v2433 = vld [vmem:[%s2 + $0xc8] sm:$0xf]
    %v2434 = vld [vmem:[%s2 + $0xcc] sm:$0xf]
    %v2435 = vld [vmem:[%s2 + $0xd0] sm:$0xf]
    %v2436 = vld [vmem:[%s2 + $0xd4] sm:$0xf]
    %v2437 = vld [vmem:[%s2 + $0xd8] sm:$0xf]
    %v2438 = vld [vmem:[%s2 + $0xdc] sm:$0xf]
    %v2439 = vld [vmem:[%s2 + $0xe0] sm:$0xf]
    %v2440 = vld [vmem:[%s2 + $0xe4] sm:$0xf]
    %v2441 = vld [vmem:[%s2 + $0xe8] sm:$0xf]
    %v2442 = vld [vmem:[%s2 + $0xec] sm:$0xf]
    %v2443 = vld [vmem:[%s2 + $0xf0] sm:$0xf]
    %v2444 = vld [vmem:[%s2 + $0xf4] sm:$0xf]
    %v2445 = vld [vmem:[%s2 + $0xf8] sm:$0xf]
    %v2446 = vld [vmem:[%s2 + $0xfc] sm:$0xf]
    %v2447 = vld [vmem:[%s2 + $0x100] sm:$0xf]
    %v2448 = vld [vmem:[%s2 + $0x104] sm:$0xf]
    %v2449 = vld [vmem:[%s2 + $0x108] sm:$0xf]
    %v2450 = vld [vmem:[%s2 + $0x10c] sm:$0xf]
    %v2451 = vld [vmem:[%s2 + $0x110] sm:$0xf]
    %v2452 = vld [vmem:[%s2 + $0x114] sm:$0xf]
    %v2453 = vld [vmem:[%s2 + $0x118] sm:$0xf]
    %v2454 = vld [vmem:[%s2 + $0x11c] sm:$0xf]
    %v2455 = vld [vmem:[%s2 + $0x120] sm:$0xf]
    %v2456 = vld [vmem:[%s2 + $0x124] sm:$0xf]
    %v2457 = vld [vmem:[%s2 + $0x128] sm:$0xf]
    %v2458 = vld [vmem:[%s2 + $0x12c] sm:$0xf]
    %v2459 = vld [vmem:[%s2 + $0x130] sm:$0xf]
    %v2460 = vld [vmem:[%s2 + $0x134] sm:$0xf]
    %v2461 = vld [vmem:[%s2 + $0x138] sm:$0xf]
    %v2462 = vld [vmem:[%s2 + $0x13c] sm:$0xf]
    %v2463 = vld [vmem:[%s2 + $0x140] sm:$0xf]
    %v2464 = vld [vmem:[%s2 + $0x144] sm:$0xf]
    %v2465 = vld [vmem:[%s2 + $0x148] sm:$0xf]
    %v2466 = vld [vmem:[%s2 + $0x14c] sm:$0xf]
    %v2467 = vld [vmem:[%s2 + $0x150] sm:$0xf]
    %v2468 = vld [vmem:[%s2 + $0x154] sm:$0xf]
    %v2469 = vld [vmem:[%s2 + $0x158] sm:$0xf]
    %v2470 = vld [vmem:[%s2 + $0x15c] sm:$0xf]
    %v2471 = vld [vmem:[%s2 + $0x160] sm:$0xf]
    %v2472 = vld [vmem:[%s2 + $0x164] sm:$0xf]
    %v2473 = vld [vmem:[%s2 + $0x168] sm:$0xf]
    %v2474 = vld [vmem:[%s2 + $0x16c] sm:$0xf]
    %v2475 = vld [vmem:[%s2 + $0x170] sm:$0xf]
    %v2476 = vld [vmem:[%s2 + $0x174] sm:$0xf]
    %v2477 = vld [vmem:[%s2 + $0x178] sm:$0xf]
    %v2478 = vld [vmem:[%s2 + $0x17c] sm:$0xf]
    %v2479 = vld [vmem:[%s2 + $0x180] sm:$0xf]
    %v2480 = vld [vmem:[%s2 + $0x184] sm:$0xf]
    %v2481 = vld [vmem:[%s2 + $0x188] sm:$0xf]
    %v2482 = vld [vmem:[%s2 + $0x18c] sm:$0xf]
    %v2483 = vld [vmem:[%s2 + $0x190] sm:$0xf]
    %v2484 = vld [vmem:[%s2 + $0x194] sm:$0xf]
    %v2485 = vld [vmem:[%s2 + $0x198] sm:$0xf]
    %v2486 = vld [vmem:[%s2 + $0x19c] sm:$0xf]
    %v2487 = vld [vmem:[%s2 + $0x1a0] sm:$0xf]
    %v2488 = vld [vmem:[%s2 + $0x1a4] sm:$0xf]
    %v2489 = vld [vmem:[%s2 + $0x1a8] sm:$0xf]
    %v2490 = vld [vmem:[%s2 + $0x1ac] sm:$0xf]
    %v2491 = vld [vmem:[%s2 + $0x1b0] sm:$0xf]
    %v2492 = vld [vmem:[%s2 + $0x1b4] sm:$0xf]
    %v2493 = vld [vmem:[%s2 + $0x1b8] sm:$0xf]
    %v2494 = vld [vmem:[%s2 + $0x1bc] sm:$0xf]
    %v2495 = vld [vmem:[%s2 + $0x1c0] sm:$0xf]
    %v2496 = vld [vmem:[%s2 + $0x1c4] sm:$0xf]
    %v2497 = vld [vmem:[%s2 + $0x1c8] sm:$0xf]
    %v2498 = vld [vmem:[%s2 + $0x1cc] sm:$0xf]
    %v2499 = vld [vmem:[%s2 + $0x1d0] sm:$0xf]
    %v2500 = vld [vmem:[%s2 + $0x1d4] sm:$0xf]
    %v2501 = vld [vmem:[%s2 + $0x1d8] sm:$0xf]
    %v2502 = vld [vmem:[%s2 + $0x1dc] sm:$0xf]
    %v2503 = vld [vmem:[%s2 + $0x1e0] sm:$0xf]
    %v2504 = vld [vmem:[%s2 + $0x1e4] sm:$0xf]
    %v2505 = vld [vmem:[%s2 + $0x1e8] sm:$0xf]
    %v2506 = vld [vmem:[%s2 + $0x1ec] sm:$0xf]
    %v2507 = vld [vmem:[%s2 + $0x1f0] sm:$0xf]
    %v2508 = vld [vmem:[%s2 + $0x1f4] sm:$0xf]
    %v2509 = vld [vmem:[%s2 + $0x1f8] sm:$0xf]
    %v2510 = vld [vmem:[%s2 + $0x1fc] sm:$0xf]
    %v2511 = vld [vmem:[%s2 + $0x200] sm:$0xf]
    %v2512 = vld [vmem:[%s2 + $0x204] sm:$0xf]
    %v2513 = vld [vmem:[%s2 + $0x208] sm:$0xf]
    %v2514 = vld [vmem:[%s2 + $0x20c] sm:$0xf]
    %v2515 = vld [vmem:[%s2 + $0x210] sm:$0xf]
    %v2516 = vld [vmem:[%s2 + $0x214] sm:$0xf]
    %v2517 = vld [vmem:[%s2 + $0x218] sm:$0xf]
    %v2518 = vld [vmem:[%s2 + $0x21c] sm:$0xf]
    %v2519 = vld [vmem:[%s2 + $0x220] sm:$0xf]
    %v2520 = vld [vmem:[%s2 + $0x224] sm:$0xf]
    %v2521 = vld [vmem:[%s2 + $0x228] sm:$0xf]
    %v2522 = vld [vmem:[%s2 + $0x22c] sm:$0xf]
    %v2523 = vld [vmem:[%s2 + $0x230] sm:$0xf]
    %v2524 = vld [vmem:[%s2 + $0x234] sm:$0xf]
    %v2525 = vld [vmem:[%s2 + $0x238] sm:$0xf]
    %v2526 = vld [vmem:[%s2 + $0x23c] sm:$0xf]
    %v2527 = vld [vmem:[%s2 + $0x240] sm:$0xf]
    %v2528 = vld [vmem:[%s2 + $0x244] sm:$0xf]
    %v2529 = vld [vmem:[%s2 + $0x248] sm:$0xf]
    %v2530 = vld [vmem:[%s2 + $0x24c] sm:$0xf]
    %v2531 = vld [vmem:[%s2 + $0x250] sm:$0xf]
    %v2532 = vld [vmem:[%s2 + $0x254] sm:$0xf]
    %v2533 = vld [vmem:[%s2 + $0x258] sm:$0xf]
    %v2534 = vld [vmem:[%s2 + $0x25c] sm:$0xf]
    %v2535 = vld [vmem:[%s2 + $0x260] sm:$0xf]
    %v2536 = vld [vmem:[%s2 + $0x264] sm:$0xf]
    %v2537 = vld [vmem:[%s2 + $0x268] sm:$0xf]
    %v2538 = vld [vmem:[%s2 + $0x26c] sm:$0xf]
    %v2539 = vld [vmem:[%s2 + $0x270] sm:$0xf]
    %v2540 = vld [vmem:[%s2 + $0x274] sm:$0xf]
    %v2541 = vld [vmem:[%s2 + $0x278] sm:$0xf]
    %v2542 = vld [vmem:[%s2 + $0x27c] sm:$0xf]
    %v2543 = vld [vmem:[%s2 + $0x280] sm:$0xf]
    %v2544 = vld [vmem:[%s2 + $0x284] sm:$0xf]
    %v2545 = vld [vmem:[%s2 + $0x288] sm:$0xf]
    %v2546 = vld [vmem:[%s2 + $0x28c] sm:$0xf]
    %v2547 = vld [vmem:[%s2 + $0x290] sm:$0xf]
    %v2548 = vld [vmem:[%s2 + $0x294] sm:$0xf]
    %v2549 = vld [vmem:[%s2 + $0x298] sm:$0xf]
    %v2550 = vld [vmem:[%s2 + $0x29c] sm:$0xf]
    %v2551 = vld [vmem:[%s2 + $0x2a0] sm:$0xf]
    %v2552 = vld [vmem:[%s2 + $0x2a4] sm:$0xf]
    %v2553 = vld [vmem:[%s2 + $0x2a8] sm:$0xf]
    %v2554 = vld [vmem:[%s2 + $0x2ac] sm:$0xf]
    %v2555 = vld [vmem:[%s2 + $0x2b0] sm:$0xf]
    %v2556 = vld [vmem:[%s2 + $0x2b4] sm:$0xf]
    %v2557 = vld [vmem:[%s2 + $0x2b8] sm:$0xf]
    %v2558 = vld [vmem:[%s2 + $0x2bc] sm:$0xf]
    %v2559 = vld [vmem:[%s2 + $0x2c0] sm:$0xf]
    %v2560 = vld [vmem:[%s2 + $0x2c4] sm:$0xf]
    %v2561 = vld [vmem:[%s2 + $0x2c8] sm:$0xf]
    %v2562 = vld [vmem:[%s2 + $0x2cc] sm:$0xf]
    %v2563 = vld [vmem:[%s2 + $0x2d0] sm:$0xf]
    %v2564 = vld [vmem:[%s2 + $0x2d4] sm:$0xf]
    %v2565 = vld [vmem:[%s2 + $0x2d8] sm:$0xf]
    %v2566 = vld [vmem:[%s2 + $0x2dc] sm:$0xf]
    %v2567 = vld [vmem:[%s2 + $0x2e0] sm:$0xf]
    %v2568 = vld [vmem:[%s2 + $0x2e4] sm:$0xf]
    %v2569 = vld [vmem:[%s2 + $0x2e8] sm:$0xf]
    %v2570 = vld [vmem:[%s2 + $0x2ec] sm:$0xf]
    %v2571 = vld [vmem:[%s2 + $0x2f0] sm:$0xf]
    %v2572 = vld [vmem:[%s2 + $0x2f4] sm:$0xf]
    %v2573 = vld [vmem:[%s2 + $0x2f8] sm:$0xf]
    %v2574 = vld [vmem:[%s2 + $0x2fc] sm:$0xf]
    %v2575 = vld [vmem:[%s2 + $0x300] sm:$0xf]
    %v2576 = vld [vmem:[%s2 + $0x304] sm:$0xf]
    %v2577 = vld [vmem:[%s2 + $0x308] sm:$0xf]
    %v2578 = vld [vmem:[%s2 + $0x30c] sm:$0xf]
    %v2579 = vld [vmem:[%s2 + $0x310] sm:$0xf]
    %v2580 = vld [vmem:[%s2 + $0x314] sm:$0xf]
    %v2581 = vld [vmem:[%s2 + $0x318] sm:$0xf]
    %v2582 = vld [vmem:[%s2 + $0x31c] sm:$0xf]
    %v2583 = vld [vmem:[%s2 + $0x320] sm:$0xf]
    %v2584 = vld [vmem:[%s2 + $0x324] sm:$0xf]
    %v2585 = vld [vmem:[%s2 + $0x328] sm:$0xf]
    %v2586 = vld [vmem:[%s2 + $0x32c] sm:$0xf]
    %v2587 = vld [vmem:[%s2 + $0x330] sm:$0xf]
    %v2588 = vld [vmem:[%s2 + $0x334] sm:$0xf]
    %v2589 = vld [vmem:[%s2 + $0x338] sm:$0xf]
    %v2590 = vld [vmem:[%s2 + $0x33c] sm:$0xf]
    %v2591 = vld [vmem:[%s2 + $0x340] sm:$0xf]
    %v2592 = vld [vmem:[%s2 + $0x344] sm:$0xf]
    %v2593 = vld [vmem:[%s2 + $0x348] sm:$0xf]
    %v2594 = vld [vmem:[%s2 + $0x34c] sm:$0xf]
    %v2595 = vld [vmem:[%s2 + $0x350] sm:$0xf]
    %v2596 = vld [vmem:[%s2 + $0x354] sm:$0xf]
    %v2597 = vld [vmem:[%s2 + $0x358] sm:$0xf]
    %v2598 = vld [vmem:[%s2 + $0x35c] sm:$0xf]
    %v2599 = vld [vmem:[%s2 + $0x360] sm:$0xf]
    %v2600 = vld [vmem:[%s2 + $0x364] sm:$0xf]
    %v2601 = vld [vmem:[%s2 + $0x368] sm:$0xf]
    %v2602 = vld [vmem:[%s2 + $0x36c] sm:$0xf]
    %v2603 = vld [vmem:[%s2 + $0x370] sm:$0xf]
    %v2604 = vld [vmem:[%s2 + $0x374] sm:$0xf]
    %v2605 = vld [vmem:[%s2 + $0x378] sm:$0xf]
    %v2606 = vld [vmem:[%s2 + $0x37c] sm:$0xf]
    %v2607 = vld [vmem:[%s2 + $0x380] sm:$0xf]
    %v2608 = vld [vmem:[%s2 + $0x384] sm:$0xf]
    %v2609 = vld [vmem:[%s2 + $0x388] sm:$0xf]
    %v2610 = vld [vmem:[%s2 + $0x38c] sm:$0xf]
    %v2611 = vld [vmem:[%s2 + $0x390] sm:$0xf]
    %v2612 = vld [vmem:[%s2 + $0x394] sm:$0xf]
    %v2613 = vld [vmem:[%s2 + $0x398] sm:$0xf]
    %v2614 = vld [vmem:[%s2 + $0x39c] sm:$0xf]
    %v2615 = vld [vmem:[%s2 + $0x3a0] sm:$0xf]
    %v2616 = vld [vmem:[%s2 + $0x3a4] sm:$0xf]
    %v2617 = vld [vmem:[%s2 + $0x3a8] sm:$0xf]
    %v2618 = vld [vmem:[%s2 + $0x3ac] sm:$0xf]
    %v2619 = vld [vmem:[%s2 + $0x3b0] sm:$0xf]
    %v2620 = vld [vmem:[%s2 + $0x3b4] sm:$0xf]
    %v2621 = vld [vmem:[%s2 + $0x3b8] sm:$0xf]
    %v2622 = vld [vmem:[%s2 + $0x3bc] sm:$0xf]
    %v2623 = vld [vmem:[%s2 + $0x3c0] sm:$0xf]
    %v2624 = vld [vmem:[%s2 + $0x3c4] sm:$0xf]
    %v2625 = vld [vmem:[%s2 + $0x3c8] sm:$0xf]
    %v2626 = vld [vmem:[%s2 + $0x3cc] sm:$0xf]
    %v2627 = vld [vmem:[%s2 + $0x3d0] sm:$0xf]
    %v2628 = vld [vmem:[%s2 + $0x3d4] sm:$0xf]
    %v2629 = vld [vmem:[%s2 + $0x3d8] sm:$0xf]
    %v2630 = vld [vmem:[%s2 + $0x3dc] sm:$0xf]
    %v2631 = vld [vmem:[%s2 + $0x3e0] sm:$0xf]
    %v2632 = vld [vmem:[%s2 + $0x3e4] sm:$0xf]
    %v2633 = vld [vmem:[%s2 + $0x3e8] sm:$0xf]
    %v2634 = vld [vmem:[%s2 + $0x3ec] sm:$0xf]
    %v2635 = vld [vmem:[%s2 + $0x3f0] sm:$0xf]
    %v2636 = vld [vmem:[%s2 + $0x3f4] sm:$0xf]
    %v2637 = vld [vmem:[%s2 + $0x3f8] sm:$0xf]
    %v2638 = vld [vmem:[%s2 + $0x3fc] sm:$0xf]
    %v2895 = vunpack.c.l.b16 %v2383
    %v2896 = vunpack.c.l.b16 %v2384
    %v2897 = vunpack.c.l.b16 %v2385
    %v2898 = vunpack.c.l.b16 %v2386
    %v2899 = vunpack.c.l.b16 %v2387
    %v2900 = vunpack.c.l.b16 %v2388
    %v2901 = vunpack.c.l.b16 %v2389
    %v2902 = vunpack.c.l.b16 %v2390
    %v2903 = vunpack.c.l.b16 %v2391
    %v2904 = vunpack.c.l.b16 %v2392
    %v2905 = vunpack.c.l.b16 %v2393
    %v2906 = vunpack.c.l.b16 %v2394
    %v2907 = vunpack.c.l.b16 %v2395
    %v2908 = vunpack.c.l.b16 %v2396
    %v2909 = vunpack.c.l.b16 %v2397
    %v2910 = vunpack.c.l.b16 %v2398
    %v2911 = vunpack.c.l.b16 %v2399
    %v2912 = vunpack.c.l.b16 %v2400
    %v2913 = vunpack.c.l.b16 %v2401
    %v2914 = vunpack.c.l.b16 %v2402
    %v2915 = vunpack.c.l.b16 %v2403
    %v2916 = vunpack.c.l.b16 %v2404
    %v2917 = vunpack.c.l.b16 %v2405
    %v2918 = vunpack.c.l.b16 %v2406
    %v2919 = vunpack.c.l.b16 %v2407
    %v2920 = vunpack.c.l.b16 %v2408
    %v2921 = vunpack.c.l.b16 %v2409
    %v2922 = vunpack.c.l.b16 %v2410
    %v2923 = vunpack.c.l.b16 %v2411
    %v2924 = vunpack.c.l.b16 %v2412
    %v2925 = vunpack.c.l.b16 %v2413
    %v2926 = vunpack.c.l.b16 %v2414
    %v2927 = vunpack.c.l.b16 %v2415
    %v2928 = vunpack.c.l.b16 %v2416
    %v2929 = vunpack.c.l.b16 %v2417
    %v2930 = vunpack.c.l.b16 %v2418
    %v2931 = vunpack.c.l.b16 %v2419
    %v2932 = vunpack.c.l.b16 %v2420
    %v2933 = vunpack.c.l.b16 %v2421
    %v2934 = vunpack.c.l.b16 %v2422
    %v2935 = vunpack.c.l.b16 %v2423
    %v2936 = vunpack.c.l.b16 %v2424
    %v2937 = vunpack.c.l.b16 %v2425
    %v2938 = vunpack.c.l.b16 %v2426
    %v2939 = vunpack.c.l.b16 %v2427
    %v2940 = vunpack.c.l.b16 %v2428
    %v2941 = vunpack.c.l.b16 %v2429
    %v2942 = vunpack.c.l.b16 %v2430
    %v2943 = vunpack.c.l.b16 %v2431
    %v2944 = vunpack.c.l.b16 %v2432
    %v2945 = vunpack.c.l.b16 %v2433
    %v2946 = vunpack.c.l.b16 %v2434
    %v2947 = vunpack.c.l.b16 %v2435
    %v2948 = vunpack.c.l.b16 %v2436
    %v2949 = vunpack.c.l.b16 %v2437
    %v2950 = vunpack.c.l.b16 %v2438
    %v2951 = vunpack.c.l.b16 %v2439
    %v2952 = vunpack.c.l.b16 %v2440
    %v2953 = vunpack.c.l.b16 %v2441
    %v2954 = vunpack.c.l.b16 %v2442
    %v2955 = vunpack.c.l.b16 %v2443
    %v2956 = vunpack.c.l.b16 %v2444
    %v2957 = vunpack.c.l.b16 %v2445
    %v2958 = vunpack.c.l.b16 %v2446
    %v2959 = vunpack.c.l.b16 %v2447
    %v2960 = vunpack.c.l.b16 %v2448
    %v2961 = vunpack.c.l.b16 %v2449
    %v2962 = vunpack.c.l.b16 %v2450
    %v2963 = vunpack.c.l.b16 %v2451
    %v2964 = vunpack.c.l.b16 %v2452
    %v2965 = vunpack.c.l.b16 %v2453
    %v2966 = vunpack.c.l.b16 %v2454
    %v2967 = vunpack.c.l.b16 %v2455
    %v2968 = vunpack.c.l.b16 %v2456
    %v2969 = vunpack.c.l.b16 %v2457
    %v2970 = vunpack.c.l.b16 %v2458
    %v2971 = vunpack.c.l.b16 %v2459
    %v2972 = vunpack.c.l.b16 %v2460
    %v2973 = vunpack.c.l.b16 %v2461
    %v2974 = vunpack.c.l.b16 %v2462
    %v2975 = vunpack.c.l.b16 %v2463
    %v2976 = vunpack.c.l.b16 %v2464
    %v2977 = vunpack.c.l.b16 %v2465
    %v2978 = vunpack.c.l.b16 %v2466
    %v2979 = vunpack.c.l.b16 %v2467
    %v2980 = vunpack.c.l.b16 %v2468
    %v2981 = vunpack.c.l.b16 %v2469
    %v2982 = vunpack.c.l.b16 %v2470
    %v2983 = vunpack.c.l.b16 %v2471
    %v2984 = vunpack.c.l.b16 %v2472
    %v2985 = vunpack.c.l.b16 %v2473
    %v2986 = vunpack.c.l.b16 %v2474
    %v2987 = vunpack.c.l.b16 %v2475
    %v2988 = vunpack.c.l.b16 %v2476
    %v2989 = vunpack.c.l.b16 %v2477
    %v2990 = vunpack.c.l.b16 %v2478
    %v2991 = vunpack.c.l.b16 %v2479
    %v2992 = vunpack.c.l.b16 %v2480
    %v2993 = vunpack.c.l.b16 %v2481
    %v2994 = vunpack.c.l.b16 %v2482
    %v2995 = vunpack.c.l.b16 %v2483
    %v2996 = vunpack.c.l.b16 %v2484
    %v2997 = vunpack.c.l.b16 %v2485
    %v2998 = vunpack.c.l.b16 %v2486
    %v2999 = vunpack.c.l.b16 %v2487
    %v3000 = vunpack.c.l.b16 %v2488
    %v3001 = vunpack.c.l.b16 %v2489
    %v3002 = vunpack.c.l.b16 %v2490
    %v3003 = vunpack.c.l.b16 %v2491
    %v3004 = vunpack.c.l.b16 %v2492
    %v3005 = vunpack.c.l.b16 %v2493
    %v3006 = vunpack.c.l.b16 %v2494
    %v3007 = vunpack.c.l.b16 %v2495
    %v3008 = vunpack.c.l.b16 %v2496
    %v3009 = vunpack.c.l.b16 %v2497
    %v3010 = vunpack.c.l.b16 %v2498
    %v3011 = vunpack.c.l.b16 %v2499
    %v3012 = vunpack.c.l.b16 %v2500
    %v3013 = vunpack.c.l.b16 %v2501
    %v3014 = vunpack.c.l.b16 %v2502
    %v3015 = vunpack.c.l.b16 %v2503
    %v3016 = vunpack.c.l.b16 %v2504
    %v3017 = vunpack.c.l.b16 %v2505
    %v3018 = vunpack.c.l.b16 %v2506
    %v3019 = vunpack.c.l.b16 %v2507
    %v3020 = vunpack.c.l.b16 %v2508
    %v3021 = vunpack.c.l.b16 %v2509
    %v3022 = vunpack.c.l.b16 %v2510
    %v3023 = vunpack.c.l.b16 %v2511
    %v3024 = vunpack.c.l.b16 %v2512
    %v3025 = vunpack.c.l.b16 %v2513
    %v3026 = vunpack.c.l.b16 %v2514
    %v3027 = vunpack.c.l.b16 %v2515
    %v3028 = vunpack.c.l.b16 %v2516
    %v3029 = vunpack.c.l.b16 %v2517
    %v3030 = vunpack.c.l.b16 %v2518
    %v3031 = vunpack.c.l.b16 %v2519
    %v3032 = vunpack.c.l.b16 %v2520
    %v3033 = vunpack.c.l.b16 %v2521
    %v3034 = vunpack.c.l.b16 %v2522
    %v3035 = vunpack.c.l.b16 %v2523
    %v3036 = vunpack.c.l.b16 %v2524
    %v3037 = vunpack.c.l.b16 %v2525
    %v3038 = vunpack.c.l.b16 %v2526
    %v3039 = vunpack.c.l.b16 %v2527
    %v3040 = vunpack.c.l.b16 %v2528
    %v3041 = vunpack.c.l.b16 %v2529
    %v3042 = vunpack.c.l.b16 %v2530
    %v3043 = vunpack.c.l.b16 %v2531
    %v3044 = vunpack.c.l.b16 %v2532
    %v3045 = vunpack.c.l.b16 %v2533
    %v3046 = vunpack.c.l.b16 %v2534
    %v3047 = vunpack.c.l.b16 %v2535
    %v3048 = vunpack.c.l.b16 %v2536
    %v3049 = vunpack.c.l.b16 %v2537
    %v3050 = vunpack.c.l.b16 %v2538
    %v3051 = vunpack.c.l.b16 %v2539
    %v3052 = vunpack.c.l.b16 %v2540
    %v3053 = vunpack.c.l.b16 %v2541
    %v3054 = vunpack.c.l.b16 %v2542
    %v3055 = vunpack.c.l.b16 %v2543
    %v3056 = vunpack.c.l.b16 %v2544
    %v3057 = vunpack.c.l.b16 %v2545
    %v3058 = vunpack.c.l.b16 %v2546
    %v3059 = vunpack.c.l.b16 %v2547
    %v3060 = vunpack.c.l.b16 %v2548
    %v3061 = vunpack.c.l.b16 %v2549
    %v3062 = vunpack.c.l.b16 %v2550
    %v3063 = vunpack.c.l.b16 %v2551
    %v3064 = vunpack.c.l.b16 %v2552
    %v3065 = vunpack.c.l.b16 %v2553
    %v3066 = vunpack.c.l.b16 %v2554
    %v3067 = vunpack.c.l.b16 %v2555
    %v3068 = vunpack.c.l.b16 %v2556
    %v3069 = vunpack.c.l.b16 %v2557
    %v3070 = vunpack.c.l.b16 %v2558
    %v3071 = vunpack.c.l.b16 %v2559
    %v3072 = vunpack.c.l.b16 %v2560
    %v3073 = vunpack.c.l.b16 %v2561
    %v3074 = vunpack.c.l.b16 %v2562
    %v3075 = vunpack.c.l.b16 %v2563
    %v3076 = vunpack.c.l.b16 %v2564
    %v3077 = vunpack.c.l.b16 %v2565
    %v3078 = vunpack.c.l.b16 %v2566
    %v3079 = vunpack.c.l.b16 %v2567
    %v3080 = vunpack.c.l.b16 %v2568
    %v3081 = vunpack.c.l.b16 %v2569
    %v3082 = vunpack.c.l.b16 %v2570
    %v3083 = vunpack.c.l.b16 %v2571
    %v3084 = vunpack.c.l.b16 %v2572
    %v3085 = vunpack.c.l.b16 %v2573
    %v3086 = vunpack.c.l.b16 %v2574
    %v3087 = vunpack.c.l.b16 %v2575
    %v3088 = vunpack.c.l.b16 %v2576
    %v3089 = vunpack.c.l.b16 %v2577
    %v3090 = vunpack.c.l.b16 %v2578
    %v3091 = vunpack.c.l.b16 %v2579
    %v3092 = vunpack.c.l.b16 %v2580
    %v3093 = vunpack.c.l.b16 %v2581
    %v3094 = vunpack.c.l.b16 %v2582
    %v3095 = vunpack.c.l.b16 %v2583
    %v3096 = vunpack.c.l.b16 %v2584
    %v3097 = vunpack.c.l.b16 %v2585
    %v3098 = vunpack.c.l.b16 %v2586
    %v3099 = vunpack.c.l.b16 %v2587
    %v3100 = vunpack.c.l.b16 %v2588
    %v3101 = vunpack.c.l.b16 %v2589
    %v3102 = vunpack.c.l.b16 %v2590
    %v3103 = vunpack.c.l.b16 %v2591
    %v3104 = vunpack.c.l.b16 %v2592
    %v3105 = vunpack.c.l.b16 %v2593
    %v3106 = vunpack.c.l.b16 %v2594
    %v3107 = vunpack.c.l.b16 %v2595
    %v3108 = vunpack.c.l.b16 %v2596
    %v3109 = vunpack.c.l.b16 %v2597
    %v3110 = vunpack.c.l.b16 %v2598
    %v3111 = vunpack.c.l.b16 %v2599
    %v3112 = vunpack.c.l.b16 %v2600
    %v3113 = vunpack.c.l.b16 %v2601
    %v3114 = vunpack.c.l.b16 %v2602
    %v3115 = vunpack.c.l.b16 %v2603
    %v3116 = vunpack.c.l.b16 %v2604
    %v3117 = vunpack.c.l.b16 %v2605
    %v3118 = vunpack.c.l.b16 %v2606
    %v3119 = vunpack.c.l.b16 %v2607
    %v3120 = vunpack.c.l.b16 %v2608
    %v3121 = vunpack.c.l.b16 %v2609
    %v3122 = vunpack.c.l.b16 %v2610
    %v3123 = vunpack.c.l.b16 %v2611
    %v3124 = vunpack.c.l.b16 %v2612
    %v3125 = vunpack.c.l.b16 %v2613
    %v3126 = vunpack.c.l.b16 %v2614
    %v3127 = vunpack.c.l.b16 %v2615
    %v3128 = vunpack.c.l.b16 %v2616
    %v3129 = vunpack.c.l.b16 %v2617
    %v3130 = vunpack.c.l.b16 %v2618
    %v3131 = vunpack.c.l.b16 %v2619
    %v3132 = vunpack.c.l.b16 %v2620
    %v3133 = vunpack.c.l.b16 %v2621
    %v3134 = vunpack.c.l.b16 %v2622
    %v3135 = vunpack.c.l.b16 %v2623
    %v3136 = vunpack.c.l.b16 %v2624
    %v3137 = vunpack.c.l.b16 %v2625
    %v3138 = vunpack.c.l.b16 %v2626
    %v3139 = vunpack.c.l.b16 %v2627
    %v3140 = vunpack.c.l.b16 %v2628
    %v3141 = vunpack.c.l.b16 %v2629
    %v3142 = vunpack.c.l.b16 %v2630
    %v3143 = vunpack.c.l.b16 %v2631
    %v3144 = vunpack.c.l.b16 %v2632
    %v3145 = vunpack.c.l.b16 %v2633
    %v3146 = vunpack.c.l.b16 %v2634
    %v3147 = vunpack.c.l.b16 %v2635
    %v3148 = vunpack.c.l.b16 %v2636
    %v3149 = vunpack.c.l.b16 %v2637
    %v3150 = vunpack.c.l.b16 %v2638
    %v3151 = vpack.c.b16 %v2896, %v2895
    %v3152 = vpack.c.b16 %v2898, %v2897
    %v3153 = vpack.c.b16 %v2900, %v2899
    %v3154 = vpack.c.b16 %v2902, %v2901
    %v3155 = vpack.c.b16 %v2904, %v2903
    %v3156 = vpack.c.b16 %v2906, %v2905
    %v3157 = vpack.c.b16 %v2908, %v2907
    %v3158 = vpack.c.b16 %v2910, %v2909
    %v3159 = vpack.c.b16 %v2912, %v2911
    %v3160 = vpack.c.b16 %v2914, %v2913
    %v3161 = vpack.c.b16 %v2916, %v2915
    %v3162 = vpack.c.b16 %v2918, %v2917
    %v3163 = vpack.c.b16 %v2920, %v2919
    %v3164 = vpack.c.b16 %v2922, %v2921
    %v3165 = vpack.c.b16 %v2924, %v2923
    %v3166 = vpack.c.b16 %v2926, %v2925
    %v3167 = vpack.c.b16 %v2928, %v2927
    %v3168 = vpack.c.b16 %v2930, %v2929
    %v3169 = vpack.c.b16 %v2932, %v2931
    %v3170 = vpack.c.b16 %v2934, %v2933
    %v3171 = vpack.c.b16 %v2936, %v2935
    %v3172 = vpack.c.b16 %v2938, %v2937
    %v3173 = vpack.c.b16 %v2940, %v2939
    %v3174 = vpack.c.b16 %v2942, %v2941
    %v3175 = vpack.c.b16 %v2944, %v2943
    %v3176 = vpack.c.b16 %v2946, %v2945
    %v3177 = vpack.c.b16 %v2948, %v2947
    %v3178 = vpack.c.b16 %v2950, %v2949
    %v3179 = vpack.c.b16 %v2952, %v2951
    %v3180 = vpack.c.b16 %v2954, %v2953
    %v3181 = vpack.c.b16 %v2956, %v2955
    %v3182 = vpack.c.b16 %v2958, %v2957
    %v3183 = vpack.c.b16 %v2960, %v2959
    %v3184 = vpack.c.b16 %v2962, %v2961
    %v3185 = vpack.c.b16 %v2964, %v2963
    %v3186 = vpack.c.b16 %v2966, %v2965
    %v3187 = vpack.c.b16 %v2968, %v2967
    %v3188 = vpack.c.b16 %v2970, %v2969
    %v3189 = vpack.c.b16 %v2972, %v2971
    %v3190 = vpack.c.b16 %v2974, %v2973
    %v3191 = vpack.c.b16 %v2976, %v2975
    %v3192 = vpack.c.b16 %v2978, %v2977
    %v3193 = vpack.c.b16 %v2980, %v2979
    %v3194 = vpack.c.b16 %v2982, %v2981
    %v3195 = vpack.c.b16 %v2984, %v2983
    %v3196 = vpack.c.b16 %v2986, %v2985
    %v3197 = vpack.c.b16 %v2988, %v2987
    %v3198 = vpack.c.b16 %v2990, %v2989
    %v3199 = vpack.c.b16 %v2992, %v2991
    %v3200 = vpack.c.b16 %v2994, %v2993
    %v3201 = vpack.c.b16 %v2996, %v2995
    %v3202 = vpack.c.b16 %v2998, %v2997
    %v3203 = vpack.c.b16 %v3000, %v2999
    %v3204 = vpack.c.b16 %v3002, %v3001
    %v3205 = vpack.c.b16 %v3004, %v3003
    %v3206 = vpack.c.b16 %v3006, %v3005
    %v3207 = vpack.c.b16 %v3008, %v3007
    %v3208 = vpack.c.b16 %v3010, %v3009
    %v3209 = vpack.c.b16 %v3012, %v3011
    %v3210 = vpack.c.b16 %v3014, %v3013
    %v3211 = vpack.c.b16 %v3016, %v3015
    %v3212 = vpack.c.b16 %v3018, %v3017
    %v3213 = vpack.c.b16 %v3020, %v3019
    %v3214 = vpack.c.b16 %v3022, %v3021
    %v3215 = vpack.c.b16 %v3024, %v3023
    %v3216 = vpack.c.b16 %v3026, %v3025
    %v3217 = vpack.c.b16 %v3028, %v3027
    %v3218 = vpack.c.b16 %v3030, %v3029
    %v3219 = vpack.c.b16 %v3032, %v3031
    %v3220 = vpack.c.b16 %v3034, %v3033
    %v3221 = vpack.c.b16 %v3036, %v3035
    %v3222 = vpack.c.b16 %v3038, %v3037
    %v3223 = vpack.c.b16 %v3040, %v3039
    %v3224 = vpack.c.b16 %v3042, %v3041
    %v3225 = vpack.c.b16 %v3044, %v3043
    %v3226 = vpack.c.b16 %v3046, %v3045
    %v3227 = vpack.c.b16 %v3048, %v3047
    %v3228 = vpack.c.b16 %v3050, %v3049
    %v3229 = vpack.c.b16 %v3052, %v3051
    %v3230 = vpack.c.b16 %v3054, %v3053
    %v3231 = vpack.c.b16 %v3056, %v3055
    %v3232 = vpack.c.b16 %v3058, %v3057
    %v3233 = vpack.c.b16 %v3060, %v3059
    %v3234 = vpack.c.b16 %v3062, %v3061
    %v3235 = vpack.c.b16 %v3064, %v3063
    %v3236 = vpack.c.b16 %v3066, %v3065
    %v3237 = vpack.c.b16 %v3068, %v3067
    %v3238 = vpack.c.b16 %v3070, %v3069
    %v3239 = vpack.c.b16 %v3072, %v3071
    %v3240 = vpack.c.b16 %v3074, %v3073
    %v3241 = vpack.c.b16 %v3076, %v3075
    %v3242 = vpack.c.b16 %v3078, %v3077
    %v3243 = vpack.c.b16 %v3080, %v3079
    %v3244 = vpack.c.b16 %v3082, %v3081
    %v3245 = vpack.c.b16 %v3084, %v3083
    %v3246 = vpack.c.b16 %v3086, %v3085
    %v3247 = vpack.c.b16 %v3088, %v3087
    %v3248 = vpack.c.b16 %v3090, %v3089
    %v3249 = vpack.c.b16 %v3092, %v3091
    %v3250 = vpack.c.b16 %v3094, %v3093
    %v3251 = vpack.c.b16 %v3096, %v3095
    %v3252 = vpack.c.b16 %v3098, %v3097
    %v3253 = vpack.c.b16 %v3100, %v3099
    %v3254 = vpack.c.b16 %v3102, %v3101
    %v3255 = vpack.c.b16 %v3104, %v3103
    %v3256 = vpack.c.b16 %v3106, %v3105
    %v3257 = vpack.c.b16 %v3108, %v3107
    %v3258 = vpack.c.b16 %v3110, %v3109
    %v3259 = vpack.c.b16 %v3112, %v3111
    %v3260 = vpack.c.b16 %v3114, %v3113
    %v3261 = vpack.c.b16 %v3116, %v3115
    %v3262 = vpack.c.b16 %v3118, %v3117
    %v3263 = vpack.c.b16 %v3120, %v3119
    %v3264 = vpack.c.b16 %v3122, %v3121
    %v3265 = vpack.c.b16 %v3124, %v3123
    %v3266 = vpack.c.b16 %v3126, %v3125
    %v3267 = vpack.c.b16 %v3128, %v3127
    %v3268 = vpack.c.b16 %v3130, %v3129
    %v3269 = vpack.c.b16 %v3132, %v3131
    %v3270 = vpack.c.b16 %v3134, %v3133
    %v3271 = vpack.c.b16 %v3136, %v3135
    %v3272 = vpack.c.b16 %v3138, %v3137
    %v3273 = vpack.c.b16 %v3140, %v3139
    %v3274 = vpack.c.b16 %v3142, %v3141
    %v3275 = vpack.c.b16 %v3144, %v3143
    %v3276 = vpack.c.b16 %v3146, %v3145
    %v3277 = vpack.c.b16 %v3148, %v3147
    %v3278 = vpack.c.b16 %v3150, %v3149
    %3407 = vmatpush.bf16.msra.mxu0 %v3158
    %3408 = vmatpush.bf16.msra.mxu0 %v3157
    %3409 = vmatpush.bf16.msra.mxu0 %v3156
    %3410 = vmatpush.bf16.msra.mxu0 %v3155
    %3411 = vmatpush.bf16.msra.mxu0 %v3154
    %3412 = vmatpush.bf16.msra.mxu0 %v3153
    %3413 = vmatpush.bf16.msra.mxu0 %v3152
    %3414 = vmatpush.bf16.msra.mxu0 %v3151
    %3415 = vmatmul.bf16.gmra.mxu0 %v2319
    %v3416 = vpop.f32.mrf.mxu0
    %v3417 = vadd.f32 0.0, %v3416
    %v3418 = vpop.f32.mrf.mxu0
    %v3419 = vadd.f32 0.0, %v3418
    %3420 = vmatmul.bf16.gmra.mxu0 %v2335
    %v3421 = vpop.f32.mrf.mxu0
    %v3422 = vadd.f32 0.0, %v3421
    %v3423 = vpop.f32.mrf.mxu0
    %v3424 = vadd.f32 0.0, %v3423
    %3425 = vmatmul.bf16.gmra.mxu0 %v2351
    %v3426 = vpop.f32.mrf.mxu0
    %v3427 = vadd.f32 0.0, %v3426
    %v3428 = vpop.f32.mrf.mxu0
    %v3429 = vadd.f32 0.0, %v3428
    %3430 = vmatmul.bf16.gmra.mxu0 %v2367
    %v3431 = vpop.f32.mrf.mxu0
    %v3432 = vadd.f32 0.0, %v3431
    %v3433 = vpop.f32.mrf.mxu0
    %v3434 = vadd.f32 0.0, %v3433
    %3435 = vdwg.mxu0
    %3436 = vmatpush.bf16.msra.mxu0 %v3166
    %3437 = vmatpush.bf16.msra.mxu0 %v3165
    %3438 = vmatpush.bf16.msra.mxu0 %v3164
    %3439 = vmatpush.bf16.msra.mxu0 %v3163
    %3440 = vmatpush.bf16.msra.mxu0 %v3162
    %3441 = vmatpush.bf16.msra.mxu0 %v3161
    %3442 = vmatpush.bf16.msra.mxu0 %v3160
    %3443 = vmatpush.bf16.msra.mxu0 %v3159
    %3444 = vmatmul.bf16.gmra.mxu0 %v2320
    %v3445 = vpop.f32.mrf.mxu0
    %v3446 = vadd.f32 %v3417, %v3445
    %v3447 = vpop.f32.mrf.mxu0
    %v3448 = vadd.f32 %v3419, %v3447
    %3449 = vmatmul.bf16.gmra.mxu0 %v2336
    %v3450 = vpop.f32.mrf.mxu0
    %v3451 = vadd.f32 %v3422, %v3450
    %v3452 = vpop.f32.mrf.mxu0
    %v3453 = vadd.f32 %v3424, %v3452
    %3454 = vmatmul.bf16.gmra.mxu0 %v2352
    %v3455 = vpop.f32.mrf.mxu0
    %v3456 = vadd.f32 %v3427, %v3455
    %v3457 = vpop.f32.mrf.mxu0
    %v3458 = vadd.f32 %v3429, %v3457
    %3459 = vmatmul.bf16.gmra.mxu0 %v2368
    %v3460 = vpop.f32.mrf.mxu0
    %v3461 = vadd.f32 %v3432, %v3460
    %v3462 = vpop.f32.mrf.mxu0
    %v3463 = vadd.f32 %v3434, %v3462
    %3464 = vdwg.mxu0
    %3465 = vmatpush.bf16.msra.mxu0 %v3174
    %3466 = vmatpush.bf16.msra.mxu0 %v3173
    %3467 = vmatpush.bf16.msra.mxu0 %v3172
    %3468 = vmatpush.bf16.msra.mxu0 %v3171
    %3469 = vmatpush.bf16.msra.mxu0 %v3170
    %3470 = vmatpush.bf16.msra.mxu0 %v3169
    %3471 = vmatpush.bf16.msra.mxu0 %v3168
    %3472 = vmatpush.bf16.msra.mxu0 %v3167
    %3473 = vmatmul.bf16.gmra.mxu0 %v2321
    %v3474 = vpop.f32.mrf.mxu0
    %v3475 = vadd.f32 %v3446, %v3474
    %v3476 = vpop.f32.mrf.mxu0
    %v3477 = vadd.f32 %v3448, %v3476
    %3478 = vmatmul.bf16.gmra.mxu0 %v2337
    %v3479 = vpop.f32.mrf.mxu0
    %v3480 = vadd.f32 %v3451, %v3479
    %v3481 = vpop.f32.mrf.mxu0
    %v3482 = vadd.f32 %v3453, %v3481
    %3483 = vmatmul.bf16.gmra.mxu0 %v2353
    %v3484 = vpop.f32.mrf.mxu0
    %v3485 = vadd.f32 %v3456, %v3484
    %v3486 = vpop.f32.mrf.mxu0
    %v3487 = vadd.f32 %v3458, %v3486
    %3488 = vmatmul.bf16.gmra.mxu0 %v2369
    %v3489 = vpop.f32.mrf.mxu0
    %v3490 = vadd.f32 %v3461, %v3489
    %v3491 = vpop.f32.mrf.mxu0
    %v3492 = vadd.f32 %v3463, %v3491
    %3493 = vdwg.mxu0
    %3494 = vmatpush.bf16.msra.mxu0 %v3182
    %3495 = vmatpush.bf16.msra.mxu0 %v3181
    %3496 = vmatpush.bf16.msra.mxu0 %v3180
    %3497 = vmatpush.bf16.msra.mxu0 %v3179
    %3498 = vmatpush.bf16.msra.mxu0 %v3178
    %3499 = vmatpush.bf16.msra.mxu0 %v3177
    %3500 = vmatpush.bf16.msra.mxu0 %v3176
    %3501 = vmatpush.bf16.msra.mxu0 %v3175
    %3502 = vmatmul.bf16.gmra.mxu0 %v2322
    %v3503 = vpop.f32.mrf.mxu0
    %v3504 = vadd.f32 %v3475, %v3503
    %v3505 = vpop.f32.mrf.mxu0
    %v3506 = vadd.f32 %v3477, %v3505
    %3507 = vmatmul.bf16.gmra.mxu0 %v2338
    %v3508 = vpop.f32.mrf.mxu0
    %v3509 = vadd.f32 %v3480, %v3508
    %v3510 = vpop.f32.mrf.mxu0
    %v3511 = vadd.f32 %v3482, %v3510
    %3512 = vmatmul.bf16.gmra.mxu0 %v2354
    %v3513 = vpop.f32.mrf.mxu0
    %v3514 = vadd.f32 %v3485, %v3513
    %v3515 = vpop.f32.mrf.mxu0
    %v3516 = vadd.f32 %v3487, %v3515
    %3517 = vmatmul.bf16.gmra.mxu0 %v2370
    %v3518 = vpop.f32.mrf.mxu0
    %v3519 = vadd.f32 %v3490, %v3518
    %v3520 = vpop.f32.mrf.mxu0
    %v3521 = vadd.f32 %v3492, %v3520
    %3522 = vdwg.mxu0
    %3523 = vmatpush.bf16.msra.mxu0 %v3190
    %3524 = vmatpush.bf16.msra.mxu0 %v3189
    %3525 = vmatpush.bf16.msra.mxu0 %v3188
    %3526 = vmatpush.bf16.msra.mxu0 %v3187
    %3527 = vmatpush.bf16.msra.mxu0 %v3186
    %3528 = vmatpush.bf16.msra.mxu0 %v3185
    %3529 = vmatpush.bf16.msra.mxu0 %v3184
    %3530 = vmatpush.bf16.msra.mxu0 %v3183
    %3531 = vmatmul.bf16.gmra.mxu0 %v2323
    %v3532 = vpop.f32.mrf.mxu0
    %v3533 = vadd.f32 %v3504, %v3532
    %v3534 = vpop.f32.mrf.mxu0
    %v3535 = vadd.f32 %v3506, %v3534
    %3536 = vmatmul.bf16.gmra.mxu0 %v2339
    %v3537 = vpop.f32.mrf.mxu0
    %v3538 = vadd.f32 %v3509, %v3537
    %v3539 = vpop.f32.mrf.mxu0
    %v3540 = vadd.f32 %v3511, %v3539
    %3541 = vmatmul.bf16.gmra.mxu0 %v2355
    %v3542 = vpop.f32.mrf.mxu0
    %v3543 = vadd.f32 %v3514, %v3542
    %v3544 = vpop.f32.mrf.mxu0
    %v3545 = vadd.f32 %v3516, %v3544
    %3546 = vmatmul.bf16.gmra.mxu0 %v2371
    %v3547 = vpop.f32.mrf.mxu0
    %v3548 = vadd.f32 %v3519, %v3547
    %v3549 = vpop.f32.mrf.mxu0
    %v3550 = vadd.f32 %v3521, %v3549
    %3551 = vdwg.mxu0
    %3552 = vmatpush.bf16.msra.mxu0 %v3198
    %3553 = vmatpush.bf16.msra.mxu0 %v3197
    %3554 = vmatpush.bf16.msra.mxu0 %v3196
    %3555 = vmatpush.bf16.msra.mxu0 %v3195
    %3556 = vmatpush.bf16.msra.mxu0 %v3194
    %3557 = vmatpush.bf16.msra.mxu0 %v3193
    %3558 = vmatpush.bf16.msra.mxu0 %v3192
    %3559 = vmatpush.bf16.msra.mxu0 %v3191
    %3560 = vmatmul.bf16.gmra.mxu0 %v2324
    %v3561 = vpop.f32.mrf.mxu0
    %v3562 = vadd.f32 %v3533, %v3561
    %v3563 = vpop.f32.mrf.mxu0
    %v3564 = vadd.f32 %v3535, %v3563
    %3565 = vmatmul.bf16.gmra.mxu0 %v2340
    %v3566 = vpop.f32.mrf.mxu0
    %v3567 = vadd.f32 %v3538, %v3566
    %v3568 = vpop.f32.mrf.mxu0
    %v3569 = vadd.f32 %v3540, %v3568
    %3570 = vmatmul.bf16.gmra.mxu0 %v2356
    %v3571 = vpop.f32.mrf.mxu0
    %v3572 = vadd.f32 %v3543, %v3571
    %v3573 = vpop.f32.mrf.mxu0
    %v3574 = vadd.f32 %v3545, %v3573
    %3575 = vmatmul.bf16.gmra.mxu0 %v2372
    %v3576 = vpop.f32.mrf.mxu0
    %v3577 = vadd.f32 %v3548, %v3576
    %v3578 = vpop.f32.mrf.mxu0
    %v3579 = vadd.f32 %v3550, %v3578
    %3580 = vdwg.mxu0
    %3581 = vmatpush.bf16.msra.mxu0 %v3206
    %3582 = vmatpush.bf16.msra.mxu0 %v3205
    %3583 = vmatpush.bf16.msra.mxu0 %v3204
    %3584 = vmatpush.bf16.msra.mxu0 %v3203
    %3585 = vmatpush.bf16.msra.mxu0 %v3202
    %3586 = vmatpush.bf16.msra.mxu0 %v3201
    %3587 = vmatpush.bf16.msra.mxu0 %v3200
    %3588 = vmatpush.bf16.msra.mxu0 %v3199
    %3589 = vmatmul.bf16.gmra.mxu0 %v2325
    %v3590 = vpop.f32.mrf.mxu0
    %v3591 = vadd.f32 %v3562, %v3590
    %v3592 = vpop.f32.mrf.mxu0
    %v3593 = vadd.f32 %v3564, %v3592
    %3594 = vmatmul.bf16.gmra.mxu0 %v2341
    %v3595 = vpop.f32.mrf.mxu0
    %v3596 = vadd.f32 %v3567, %v3595
    %v3597 = vpop.f32.mrf.mxu0
    %v3598 = vadd.f32 %v3569, %v3597
    %3599 = vmatmul.bf16.gmra.mxu0 %v2357
    %v3600 = vpop.f32.mrf.mxu0
    %v3601 = vadd.f32 %v3572, %v3600
    %v3602 = vpop.f32.mrf.mxu0
    %v3603 = vadd.f32 %v3574, %v3602
    %3604 = vmatmul.bf16.gmra.mxu0 %v2373
    %v3605 = vpop.f32.mrf.mxu0
    %v3606 = vadd.f32 %v3577, %v3605
    %v3607 = vpop.f32.mrf.mxu0
    %v3608 = vadd.f32 %v3579, %v3607
    %3609 = vdwg.mxu0
    %3610 = vmatpush.bf16.msra.mxu0 %v3214
    %3611 = vmatpush.bf16.msra.mxu0 %v3213
    %3612 = vmatpush.bf16.msra.mxu0 %v3212
    %3613 = vmatpush.bf16.msra.mxu0 %v3211
    %3614 = vmatpush.bf16.msra.mxu0 %v3210
    %3615 = vmatpush.bf16.msra.mxu0 %v3209
    %3616 = vmatpush.bf16.msra.mxu0 %v3208
    %3617 = vmatpush.bf16.msra.mxu0 %v3207
    %3618 = vmatmul.bf16.gmra.mxu0 %v2326
    %v3619 = vpop.f32.mrf.mxu0
    %v3620 = vadd.f32 %v3591, %v3619
    %v3621 = vpop.f32.mrf.mxu0
    %v3622 = vadd.f32 %v3593, %v3621
    %3623 = vmatmul.bf16.gmra.mxu0 %v2342
    %v3624 = vpop.f32.mrf.mxu0
    %v3625 = vadd.f32 %v3596, %v3624
    %v3626 = vpop.f32.mrf.mxu0
    %v3627 = vadd.f32 %v3598, %v3626
    %3628 = vmatmul.bf16.gmra.mxu0 %v2358
    %v3629 = vpop.f32.mrf.mxu0
    %v3630 = vadd.f32 %v3601, %v3629
    %v3631 = vpop.f32.mrf.mxu0
    %v3632 = vadd.f32 %v3603, %v3631
    %3633 = vmatmul.bf16.gmra.mxu0 %v2374
    %v3634 = vpop.f32.mrf.mxu0
    %v3635 = vadd.f32 %v3606, %v3634
    %v3636 = vpop.f32.mrf.mxu0
    %v3637 = vadd.f32 %v3608, %v3636
    %3638 = vdwg.mxu0
    %3639 = vmatpush.bf16.msra.mxu0 %v3222
    %3640 = vmatpush.bf16.msra.mxu0 %v3221
    %3641 = vmatpush.bf16.msra.mxu0 %v3220
    %3642 = vmatpush.bf16.msra.mxu0 %v3219
    %3643 = vmatpush.bf16.msra.mxu0 %v3218
    %3644 = vmatpush.bf16.msra.mxu0 %v3217
    %3645 = vmatpush.bf16.msra.mxu0 %v3216
    %3646 = vmatpush.bf16.msra.mxu0 %v3215
    %3647 = vmatmul.bf16.gmra.mxu0 %v2327
    %v3648 = vpop.f32.mrf.mxu0
    %v3649 = vadd.f32 %v3620, %v3648
    %v3650 = vpop.f32.mrf.mxu0
    %v3651 = vadd.f32 %v3622, %v3650
    %3652 = vmatmul.bf16.gmra.mxu0 %v2343
    %v3653 = vpop.f32.mrf.mxu0
    %v3654 = vadd.f32 %v3625, %v3653
    %v3655 = vpop.f32.mrf.mxu0
    %v3656 = vadd.f32 %v3627, %v3655
    %3657 = vmatmul.bf16.gmra.mxu0 %v2359
    %v3658 = vpop.f32.mrf.mxu0
    %v3659 = vadd.f32 %v3630, %v3658
    %v3660 = vpop.f32.mrf.mxu0
    %v3661 = vadd.f32 %v3632, %v3660
    %3662 = vmatmul.bf16.gmra.mxu0 %v2375
    %v3663 = vpop.f32.mrf.mxu0
    %v3664 = vadd.f32 %v3635, %v3663
    %v3665 = vpop.f32.mrf.mxu0
    %v3666 = vadd.f32 %v3637, %v3665
    %3667 = vdwg.mxu0
    %3668 = vmatpush.bf16.msra.mxu0 %v3230
    %3669 = vmatpush.bf16.msra.mxu0 %v3229
    %3670 = vmatpush.bf16.msra.mxu0 %v3228
    %3671 = vmatpush.bf16.msra.mxu0 %v3227
    %3672 = vmatpush.bf16.msra.mxu0 %v3226
    %3673 = vmatpush.bf16.msra.mxu0 %v3225
    %3674 = vmatpush.bf16.msra.mxu0 %v3224
    %3675 = vmatpush.bf16.msra.mxu0 %v3223
    %3676 = vmatmul.bf16.gmra.mxu0 %v2328
    %v3677 = vpop.f32.mrf.mxu0
    %v3678 = vadd.f32 %v3649, %v3677
    %v3679 = vpop.f32.mrf.mxu0
    %v3680 = vadd.f32 %v3651, %v3679
    %3681 = vmatmul.bf16.gmra.mxu0 %v2344
    %v3682 = vpop.f32.mrf.mxu0
    %v3683 = vadd.f32 %v3654, %v3682
    %v3684 = vpop.f32.mrf.mxu0
    %v3685 = vadd.f32 %v3656, %v3684
    %3686 = vmatmul.bf16.gmra.mxu0 %v2360
    %v3687 = vpop.f32.mrf.mxu0
    %v3688 = vadd.f32 %v3659, %v3687
    %v3689 = vpop.f32.mrf.mxu0
    %v3690 = vadd.f32 %v3661, %v3689
    %3691 = vmatmul.bf16.gmra.mxu0 %v2376
    %v3692 = vpop.f32.mrf.mxu0
    %v3693 = vadd.f32 %v3664, %v3692
    %v3694 = vpop.f32.mrf.mxu0
    %v3695 = vadd.f32 %v3666, %v3694
    %3696 = vdwg.mxu0
    %3697 = vmatpush.bf16.msra.mxu0 %v3238
    %3698 = vmatpush.bf16.msra.mxu0 %v3237
    %3699 = vmatpush.bf16.msra.mxu0 %v3236
    %3700 = vmatpush.bf16.msra.mxu0 %v3235
    %3701 = vmatpush.bf16.msra.mxu0 %v3234
    %3702 = vmatpush.bf16.msra.mxu0 %v3233
    %3703 = vmatpush.bf16.msra.mxu0 %v3232
    %3704 = vmatpush.bf16.msra.mxu0 %v3231
    %3705 = vmatmul.bf16.gmra.mxu0 %v2329
    %v3706 = vpop.f32.mrf.mxu0
    %v3707 = vadd.f32 %v3678, %v3706
    %v3708 = vpop.f32.mrf.mxu0
    %v3709 = vadd.f32 %v3680, %v3708
    %3710 = vmatmul.bf16.gmra.mxu0 %v2345
    %v3711 = vpop.f32.mrf.mxu0
    %v3712 = vadd.f32 %v3683, %v3711
    %v3713 = vpop.f32.mrf.mxu0
    %v3714 = vadd.f32 %v3685, %v3713
    %3715 = vmatmul.bf16.gmra.mxu0 %v2361
    %v3716 = vpop.f32.mrf.mxu0
    %v3717 = vadd.f32 %v3688, %v3716
    %v3718 = vpop.f32.mrf.mxu0
    %v3719 = vadd.f32 %v3690, %v3718
    %3720 = vmatmul.bf16.gmra.mxu0 %v2377
    %v3721 = vpop.f32.mrf.mxu0
    %v3722 = vadd.f32 %v3693, %v3721
    %v3723 = vpop.f32.mrf.mxu0
    %v3724 = vadd.f32 %v3695, %v3723
    %3725 = vdwg.mxu0
    %3726 = vmatpush.bf16.msra.mxu0 %v3246
    %3727 = vmatpush.bf16.msra.mxu0 %v3245
    %3728 = vmatpush.bf16.msra.mxu0 %v3244
    %3729 = vmatpush.bf16.msra.mxu0 %v3243
    %3730 = vmatpush.bf16.msra.mxu0 %v3242
    %3731 = vmatpush.bf16.msra.mxu0 %v3241
    %3732 = vmatpush.bf16.msra.mxu0 %v3240
    %3733 = vmatpush.bf16.msra.mxu0 %v3239
    %3734 = vmatmul.bf16.gmra.mxu0 %v2330
    %v3735 = vpop.f32.mrf.mxu0
    %v3736 = vadd.f32 %v3707, %v3735
    %v3737 = vpop.f32.mrf.mxu0
    %v3738 = vadd.f32 %v3709, %v3737
    %3739 = vmatmul.bf16.gmra.mxu0 %v2346
    %v3740 = vpop.f32.mrf.mxu0
    %v3741 = vadd.f32 %v3712, %v3740
    %v3742 = vpop.f32.mrf.mxu0
    %v3743 = vadd.f32 %v3714, %v3742
    %3744 = vmatmul.bf16.gmra.mxu0 %v2362
    %v3745 = vpop.f32.mrf.mxu0
    %v3746 = vadd.f32 %v3717, %v3745
    %v3747 = vpop.f32.mrf.mxu0
    %v3748 = vadd.f32 %v3719, %v3747
    %3749 = vmatmul.bf16.gmra.mxu0 %v2378
    %v3750 = vpop.f32.mrf.mxu0
    %v3751 = vadd.f32 %v3722, %v3750
    %v3752 = vpop.f32.mrf.mxu0
    %v3753 = vadd.f32 %v3724, %v3752
    %3754 = vdwg.mxu0
    %3755 = vmatpush.bf16.msra.mxu0 %v3254
    %3756 = vmatpush.bf16.msra.mxu0 %v3253
    %3757 = vmatpush.bf16.msra.mxu0 %v3252
    %3758 = vmatpush.bf16.msra.mxu0 %v3251
    %3759 = vmatpush.bf16.msra.mxu0 %v3250
    %3760 = vmatpush.bf16.msra.mxu0 %v3249
    %3761 = vmatpush.bf16.msra.mxu0 %v3248
    %3762 = vmatpush.bf16.msra.mxu0 %v3247
    %3763 = vmatmul.bf16.gmra.mxu0 %v2331
    %v3764 = vpop.f32.mrf.mxu0
    %v3765 = vadd.f32 %v3736, %v3764
    %v3766 = vpop.f32.mrf.mxu0
    %v3767 = vadd.f32 %v3738, %v3766
    %3768 = vmatmul.bf16.gmra.mxu0 %v2347
    %v3769 = vpop.f32.mrf.mxu0
    %v3770 = vadd.f32 %v3741, %v3769
    %v3771 = vpop.f32.mrf.mxu0
    %v3772 = vadd.f32 %v3743, %v3771
    %3773 = vmatmul.bf16.gmra.mxu0 %v2363
    %v3774 = vpop.f32.mrf.mxu0
    %v3775 = vadd.f32 %v3746, %v3774
    %v3776 = vpop.f32.mrf.mxu0
    %v3777 = vadd.f32 %v3748, %v3776
    %3778 = vmatmul.bf16.gmra.mxu0 %v2379
    %v3779 = vpop.f32.mrf.mxu0
    %v3780 = vadd.f32 %v3751, %v3779
    %v3781 = vpop.f32.mrf.mxu0
    %v3782 = vadd.f32 %v3753, %v3781
    %3783 = vdwg.mxu0
    %3784 = vmatpush.bf16.msra.mxu0 %v3262
    %3785 = vmatpush.bf16.msra.mxu0 %v3261
    %3786 = vmatpush.bf16.msra.mxu0 %v3260
    %3787 = vmatpush.bf16.msra.mxu0 %v3259
    %3788 = vmatpush.bf16.msra.mxu0 %v3258
    %3789 = vmatpush.bf16.msra.mxu0 %v3257
    %3790 = vmatpush.bf16.msra.mxu0 %v3256
    %3791 = vmatpush.bf16.msra.mxu0 %v3255
    %3792 = vmatmul.bf16.gmra.mxu0 %v2332
    %v3793 = vpop.f32.mrf.mxu0
    %v3794 = vadd.f32 %v3765, %v3793
    %v3795 = vpop.f32.mrf.mxu0
    %v3796 = vadd.f32 %v3767, %v3795
    %3797 = vmatmul.bf16.gmra.mxu0 %v2348
    %v3798 = vpop.f32.mrf.mxu0
    %v3799 = vadd.f32 %v3770, %v3798
    %v3800 = vpop.f32.mrf.mxu0
    %v3801 = vadd.f32 %v3772, %v3800
    %3802 = vmatmul.bf16.gmra.mxu0 %v2364
    %v3803 = vpop.f32.mrf.mxu0
    %v3804 = vadd.f32 %v3775, %v3803
    %v3805 = vpop.f32.mrf.mxu0
    %v3806 = vadd.f32 %v3777, %v3805
    %3807 = vmatmul.bf16.gmra.mxu0 %v2380
    %v3808 = vpop.f32.mrf.mxu0
    %v3809 = vadd.f32 %v3780, %v3808
    %v3810 = vpop.f32.mrf.mxu0
    %v3811 = vadd.f32 %v3782, %v3810
    %3812 = vdwg.mxu0
    %3813 = vmatpush.bf16.msra.mxu0 %v3270
    %3814 = vmatpush.bf16.msra.mxu0 %v3269
    %3815 = vmatpush.bf16.msra.mxu0 %v3268
    %3816 = vmatpush.bf16.msra.mxu0 %v3267
    %3817 = vmatpush.bf16.msra.mxu0 %v3266
    %3818 = vmatpush.bf16.msra.mxu0 %v3265
    %3819 = vmatpush.bf16.msra.mxu0 %v3264
    %3820 = vmatpush.bf16.msra.mxu0 %v3263
    %3821 = vmatmul.bf16.gmra.mxu0 %v2333
    %v3822 = vpop.f32.mrf.mxu0
    %v3823 = vadd.f32 %v3794, %v3822
    %v3824 = vpop.f32.mrf.mxu0
    %v3825 = vadd.f32 %v3796, %v3824
    %3826 = vmatmul.bf16.gmra.mxu0 %v2349
    %v3827 = vpop.f32.mrf.mxu0
    %v3828 = vadd.f32 %v3799, %v3827
    %v3829 = vpop.f32.mrf.mxu0
    %v3830 = vadd.f32 %v3801, %v3829
    %3831 = vmatmul.bf16.gmra.mxu0 %v2365
    %v3832 = vpop.f32.mrf.mxu0
    %v3833 = vadd.f32 %v3804, %v3832
    %v3834 = vpop.f32.mrf.mxu0
    %v3835 = vadd.f32 %v3806, %v3834
    %3836 = vmatmul.bf16.gmra.mxu0 %v2381
    %v3837 = vpop.f32.mrf.mxu0
    %v3838 = vadd.f32 %v3809, %v3837
    %v3839 = vpop.f32.mrf.mxu0
    %v3840 = vadd.f32 %v3811, %v3839
    %3841 = vdwg.mxu0
    %3842 = vmatpush.bf16.msra.mxu0 %v3278
    %3843 = vmatpush.bf16.msra.mxu0 %v3277
    %3844 = vmatpush.bf16.msra.mxu0 %v3276
    %3845 = vmatpush.bf16.msra.mxu0 %v3275
    %3846 = vmatpush.bf16.msra.mxu0 %v3274
    %3847 = vmatpush.bf16.msra.mxu0 %v3273
    %3848 = vmatpush.bf16.msra.mxu0 %v3272
    %3849 = vmatpush.bf16.msra.mxu0 %v3271
    %3850 = vmatmul.bf16.gmra.mxu0 %v2334
    %v3851 = vpop.f32.mrf.mxu0
    %v3852 = vadd.f32 %v3823, %v3851
    %v3853 = vpop.f32.mrf.mxu0
    %v3854 = vadd.f32 %v3825, %v3853
    %3855 = vmatmul.bf16.gmra.mxu0 %v2350
    %v3856 = vpop.f32.mrf.mxu0
    %v3857 = vadd.f32 %v3828, %v3856
    %v3858 = vpop.f32.mrf.mxu0
    %v3859 = vadd.f32 %v3830, %v3858
    %3860 = vmatmul.bf16.gmra.mxu0 %v2366
    %v3861 = vpop.f32.mrf.mxu0
    %v3862 = vadd.f32 %v3833, %v3861
    %v3863 = vpop.f32.mrf.mxu0
    %v3864 = vadd.f32 %v3835, %v3863
    %3865 = vmatmul.bf16.gmra.mxu0 %v2382
    %v3866 = vpop.f32.mrf.mxu0
    %v3867 = vadd.f32 %v3838, %v3866
    %v3868 = vpop.f32.mrf.mxu0
    %v3869 = vadd.f32 %v3840, %v3868
    %3870 = vdwg.mxu0
    %v3871 = vmax.f32 %v3852, 0.0
    %v3872 = vmax.f32 %v3854, 0.0
    %v3873 = vmax.f32 %v3857, 0.0
    %v3874 = vmax.f32 %v3859, 0.0
    %v3875 = vmax.f32 %v3862, 0.0
    %v3876 = vmax.f32 %v3864, 0.0
    %v3877 = vmax.f32 %v3867, 0.0
    %v3878 = vmax.f32 %v3869, 0.0
    %v3879 = vadd.f32 %v3871, 1e-08
    %v3880 = vadd.f32 %v3872, 1e-08
    %v3881 = vadd.f32 %v3873, 1e-08
    %v3882 = vadd.f32 %v3874, 1e-08
    %v3883 = vadd.f32 %v3875, 1e-08
    %v3884 = vadd.f32 %v3876, 1e-08
    %v3885 = vadd.f32 %v3877, 1e-08
    %v3886 = vadd.f32 %v3878, 1e-08
    %v3887 = vpow.f32 %v3879, 0.3
    %v3888 = vpow.f32 %v3880, 0.3
    %v3889 = vpow.f32 %v3881, 0.3
    %v3890 = vpow.f32 %v3882, 0.3
    %v3891 = vpow.f32 %v3883, 0.3
    %v3892 = vpow.f32 %v3884, 0.3
    %v3893 = vpow.f32 %v3885, 0.3
    %v3894 = vpow.f32 %v3886, 0.3
    %3895 = vst [vmem:[#allocation2] sm:$0xff] %v3887
    %3896 = vst [vmem:[#allocation2 + $0x8] sm:$0xff] %v3888
    %3897 = vst [vmem:[#allocation2 + $0x10] sm:$0xff] %v3889
    %3898 = vst [vmem:[#allocation2 + $0x18] sm:$0xff] %v3890
    %3899 = vst [vmem:[#allocation2 + $0x20] sm:$0xff] %v3891
    %3900 = vst [vmem:[#allocation2 + $0x28] sm:$0xff] %v3892
    %3901 = vst [vmem:[#allocation2 + $0x30] sm:$0xff] %v3893
    %3902 = vst [vmem:[#allocation2 + $0x38] sm:$0xff] %v3894
    // Predicated region
    $region14: #{cochleagram_forward.3} parent=1 // pred_check
      _
    $region15: #{cochleagram_forward.3} parent=1 // pred_check_branch
      %3904 = sbr.rel (0) target = $region17
    $region16: #{cochleagram_forward.3} parent=1 // pred_region
      %3906 = vsyncadd [#allocation3], 0
      %s3907 = sshll.u32 [#allocation2], 4
      %s3908 = int_to_ptr.vmem [resolvable:$true] %s3907
      %s3909 = sshll.u32 %s3, 4
      %s3910 = int_to_ptr.hbm [resolvable:$true] %s3909
      %3915 = dma.vmem_to_hbm [thread:$0]  %s3908, 1024, %s3910, [#allocation3], 128, 128, 8
    $region17: #{cochleagram_forward.3} parent=1 // pred_fallthru
      _
    // Predicated region
    $region18: #{cochleagram_forward.3} parent=1 // pred_check
      _
    $region19: #{cochleagram_forward.3} parent=1 // pred_check_branch
      %3917 = sbr.rel (0) target = $region21
    $region20: #{cochleagram_forward.3} parent=1 // pred_region
      %3919 = dma.done [#allocation3], 1024
    $region21: #{cochleagram_forward.3} parent=1 // pred_fallthru
      _
    %3920 = vsyncpa [#allocation3], 1

</llo_original>
